<compile_context>
chip_gen: v7x
topology: tpu7x:2x2x1
jax: 0.10.0
libtpu: 0.0.40
codegen_flags: <defaults>
</compile_context>

<pallas_src>
import functools

import numpy as np
import jax
import jax.numpy as jnp
from jax import lax
from jax.experimental import pallas as pl
from jax.experimental.pallas import tpu as pltpu

B, C, Himg, Wimg = 2, 4, 16, 16
D = C * Himg * Wimg          # 1024 flattened state features
HID = 256                    # hidden width of the dynamics MLP
T_SPAN = (0.0, 1.0)
N_STEPS = 8                  # fixed-step RK4 steps


def _round_up(x, m):
    return -(-x // m) * m


def _adjode_kernel(var_ref, w1_ref, w21_ref, b1_ref, b2w1_ref, wdiag_ref,
                   b2_ref, w2_hbm_ref,
                   var_out_ref, logj_out_ref,
                   w2_vmem, w2_sem,
                   *, t0, t1, n_steps):
    """Integrates (y, logj) from t0 to t1 with RK4, entirely in VMEM.

    Runs the recurrence in pre-activation (z = y@W1 + b1) space; only the
    initial projection and the final reconstruction touch the D-wide state.
    """
    tile_b = var_ref.shape[0]
    d = var_ref.shape[1]
    hid = w21_ref.shape[0]

    # Kick off the W2 fetch now; it is only needed for the final combine, so
    # its HBM->VMEM DMA overlaps the whole serial RK4 chain.
    w2_copy = pltpu.make_async_copy(w2_hbm_ref, w2_vmem, w2_sem)
    w2_copy.start()

    y0 = var_ref[...].astype(jnp.float32)          # (tile_b, D)
    w1 = w1_ref[...]                               # (D, HID)
    w21 = w21_ref[...]                             # (HID, HID) = W2 @ W1

    # Hoist loop-invariant broadcasts out of the time loop
    # (JAX does not CSE broadcast_in_dim; g() is evaluated 4*n_steps times).
    b1_b = jnp.broadcast_to(b1_ref[...], (tile_b, hid))       # (tile_b, HID)
    b2w1_b = jnp.broadcast_to(b2w1_ref[...], (tile_b, hid))   # b2 @ W1
    wdiag_b = jnp.broadcast_to(wdiag_ref[...], (tile_b, hid))  # diag(W2@W1)

    dt = (t1 - t0) / n_steps

    # Initial pre-activation state: z0 = y0 @ W1 + b1  (single K=D matmul).
    z0 = jnp.dot(y0, w1, preferred_element_type=jnp.float32) + b1_b

    def g(z):
        # dz/dt = tanh(z) @ W21 + b2@W1 ; exact log-Jacobian rate
        #   Tr(df/dy) = sum_k (1 - h_k^2) * diag(W2@W1)_k
        h = jnp.tanh(z)
        dz = jnp.dot(h, w21, preferred_element_type=jnp.float32) + b2w1_b
        tr = jnp.sum((1.0 - h * h) * wdiag_b, axis=-1, keepdims=True)
        return h, dz, tr

    def step(_, carry):
        z, hsum, lj = carry
        h1, g1, s1 = g(z)
        h2, g2, s2 = g(z + (0.5 * dt) * g1)
        h3, g3, s3 = g(z + (0.5 * dt) * g2)
        h4, g4, s4 = g(z + dt * g3)
        z = z + (dt / 6.0) * (g1 + 2.0 * g2 + 2.0 * g3 + g4)
        hsum = hsum + (h1 + 2.0 * h2 + 2.0 * h3 + h4)
        lj = lj + (dt / 6.0) * (s1 + 2.0 * s2 + 2.0 * s3 + s4)
        return z, hsum, lj

    # n_steps is a static Python int: unroll the short fixed-trip-count loop
    # so the whole serial chain of tiny matmuls is visible to the scheduler.
    _, hsum, ljT = lax.fori_loop(
        0, n_steps, step,
        (z0,
         jnp.zeros((tile_b, hid), jnp.float32),
         jnp.zeros((tile_b, 1), jnp.float32)),
        unroll=True)

    # Reconstruct y(T) with a single D-wide matmul:
    #   y_T = y0 + dt/6 * Hsum @ W2 + n_steps*dt * b2
    w2_copy.wait()
    b2_b = jnp.broadcast_to(b2_ref[...], (tile_b, d))
    yT = (y0
          + (dt / 6.0) * jnp.dot(hsum, w2_vmem[...],
                                 preferred_element_type=jnp.float32)
          + (float(n_steps) * dt) * b2_b)

    var_out_ref[...] = yT
    logj_out_ref[...] = ljT


def adj_odeflow_forward(x_nchw, params, t_span=T_SPAN, n_steps=N_STEPS,
                        log0=0.0):
    """Pallas equivalent of AdjODEflow_.forward: returns (var_T, logj + log0)."""
    w1, b1, w2, b2 = params
    b = x_nchw.shape[0]
    var = x_nchw.reshape(b, -1).astype(jnp.float32)
    d = var.shape[1]
    hid = w1.shape[1]

    w1f = w1.astype(jnp.float32)
    w2f = w2.astype(jnp.float32)
    b1_2d = b1.reshape(1, hid).astype(jnp.float32)
    b2_2d = b2.reshape(1, d).astype(jnp.float32)

    # Parameter-only precomputes (independent of the input batch).  HIGHEST
    # precision so the z-space restructure injects no bf16 error.
    hp = jax.lax.Precision.HIGHEST
    w21 = jnp.dot(w2f, w1f, precision=hp)                       # (HID, HID)
    b2w1 = jnp.dot(b2_2d, w1f, precision=hp)                    # (1, HID)
    wdiag = jnp.diagonal(w21).reshape(1, hid).astype(jnp.float32)

    # Pad the batch (sublane) dim to >= 8 rows (f32 sublane packing).  For
    # moderate/large batches split into >= 2 tiles so the "parallel" grid axis
    # can shard across the two v7x TensorCores; at B=2 this is a single
    # (8, D) tile and grid=(1,).
    b_pad8 = _round_up(max(b, 8), 8)
    if b_pad8 >= 16:
        tile_b = min(128, _round_up(-(-b_pad8 // 2), 8))
    else:
        tile_b = b_pad8
    b_pad = _round_up(b_pad8, tile_b)
    n_tiles = b_pad // tile_b
    if b_pad != b:
        var = jnp.pad(var, ((0, b_pad - b), (0, 0)))

    kernel = functools.partial(
        _adjode_kernel,
        t0=float(t_span[0]), t1=float(t_span[1]), n_steps=int(n_steps))

    def const_spec(shape):
        # Constant index_map: operand is DMA'd once and stays VMEM-resident
        # across all batch-tile grid steps (no per-step re-fetch).
        nd = len(shape)
        return pl.BlockSpec(shape, lambda i, _nd=nd: (0,) * _nd)

    var_out, logj = pl.pallas_call(
        kernel,
        grid_spec=pltpu.PrefetchScalarGridSpec(
            num_scalar_prefetch=0,
            grid=(n_tiles,),
            in_specs=[
                pl.BlockSpec((tile_b, d), lambda i: (i, 0)),   # y0 tile
                const_spec((d, hid)),                          # W1
                const_spec((hid, hid)),                        # W21 = W2@W1
                const_spec((1, hid)),                          # b1
                const_spec((1, hid)),                          # b2@W1
                const_spec((1, hid)),                          # diag(W2@W1)
                const_spec((1, d)),                            # b2
                pl.BlockSpec(memory_space=pl.ANY),             # W2 (manual DMA)
            ],
            out_specs=[
                pl.BlockSpec((tile_b, d), lambda i: (i, 0)),
                pl.BlockSpec((tile_b, 1), lambda i: (i, 0)),
            ],
            scratch_shapes=[
                pltpu.VMEM((hid, d), jnp.float32),             # W2 landing buf
                pltpu.SemaphoreType.DMA(()),
            ]),
        out_shape=(jax.ShapeDtypeStruct((b_pad, d), jnp.float32),
                   jax.ShapeDtypeStruct((b_pad, 1), jnp.float32)),
        compiler_params=pltpu.CompilerParams(
            dimension_semantics=("parallel",)),
    )(var, w1f, w21, b1_2d, b2w1, wdiag, b2_2d, w2f)

    return var_out[:b].reshape(x_nchw.shape), logj[:b, 0] + log0


def _reference(x_nchw, params, t_span, n_steps):
    """Plain-JAX reference (same RK4 + exact trace, y-space formulation).

    Matmuls pinned to Precision.HIGHEST so the reference is an honest f32
    baseline (the TPU default would otherwise be a single bf16 pass).
    """
    w1, b1, w2, b2 = params
    b = x_nchw.shape[0]
    y = x_nchw.reshape(b, -1).astype(jnp.float32)
    hp = jax.lax.Precision.HIGHEST
    wdiag = jnp.diagonal(jnp.dot(w2, w1, precision=hp))

    def f(y):
        h = jnp.tanh(jnp.dot(y, w1, precision=hp) + b1)
        dy = jnp.dot(h, w2, precision=hp) + b2
        return dy, jnp.sum((1.0 - h * h) * wdiag, axis=-1)

    dt = (t_span[1] - t_span[0]) / n_steps
    lj = jnp.zeros((b,), jnp.float32)
    for _ in range(n_steps):
        k1, s1 = f(y)
        k2, s2 = f(y + 0.5 * dt * k1)
        k3, s3 = f(y + 0.5 * dt * k2)
        k4, s4 = f(y + dt * k3)
        y = y + dt / 6.0 * (k1 + 2.0 * k2 + 2.0 * k3 + k4)
        lj = lj + dt / 6.0 * (s1 + 2.0 * s2 + 2.0 * s3 + s4)
    return y.reshape(x_nchw.shape), lj


if __name__ == "__main__":
    key = jax.random.PRNGKey(0)
    kx, k1, k2, k3, k4 = jax.random.split(key, 5)

    # deterministic synthetic inputs / parameters
    x = jax.random.normal(kx, (B, C, Himg, Wimg), dtype=jnp.float32)
    w1 = 0.05 * jax.random.normal(k1, (D, HID), dtype=jnp.float32)
    b1 = 0.05 * jax.random.normal(k2, (HID,), dtype=jnp.float32)
    w2 = 0.05 * jax.random.normal(k3, (HID, D), dtype=jnp.float32)
    b2 = 0.05 * jax.random.normal(k4, (D,), dtype=jnp.float32)
    params = (w1, b1, w2, b2)

    var_out, logj = adj_odeflow_forward(x, params)
    jax.block_until_ready((var_out, logj))

    var_ref, logj_ref = _reference(x, params, T_SPAN, N_STEPS)
    np.testing.assert_allclose(np.asarray(var_out), np.asarray(var_ref),
                               rtol=2e-4, atol=2e-4)
    np.testing.assert_allclose(np.asarray(logj), np.asarray(logj_ref),
                               rtol=2e-4, atol=2e-4)

    print("KERNEL_OK")
</pallas_src>

<mosaic_0001>
module attributes {stable_mosaic.version = 11 : i64} {
  func.func @_adjode_kernel(%arg0: i32, %arg1: memref<8x1024xf32, #tpu.memory_space<vmem>>, %arg2: memref<1024x256xf32, #tpu.memory_space<vmem>>, %arg3: memref<256x256xf32, #tpu.memory_space<vmem>>, %arg4: memref<1x256xf32, #tpu.memory_space<vmem>>, %arg5: memref<1x256xf32, #tpu.memory_space<vmem>>, %arg6: memref<1x256xf32, #tpu.memory_space<vmem>>, %arg7: memref<1x1024xf32, #tpu.memory_space<vmem>>, %arg8: memref<256x1024xf32, #tpu.memory_space<any>>, %arg9: memref<8x1024xf32, #tpu.memory_space<vmem>>, %arg10: memref<8x1xf32, #tpu.memory_space<vmem>>, %arg11: memref<256x1024xf32, #tpu.memory_space<vmem>>, %arg12: memref<!tpu.dma_semaphore, #tpu.memory_space<semaphore_mem>>) attributes {dimension_semantics = [#tpu.dimension_semantics<parallel>], iteration_bounds = array<i64: 1>, scalar_prefetch = 0 : i64, scratch_operands = 2 : i64, tpu.core_type = #tpu.core_type<tc>, window_params = [{transform_indices = @transform_0, window_bounds = array<i64: 8, 1024>}, {pipeline_mode = #tpu.pipeline_mode<synchronous>, transform_indices = @transform_1, window_bounds = array<i64: 1024, 256>}, {pipeline_mode = #tpu.pipeline_mode<synchronous>, transform_indices = @transform_2, window_bounds = array<i64: 256, 256>}, {pipeline_mode = #tpu.pipeline_mode<synchronous>, transform_indices = @transform_3, window_bounds = array<i64: 1, 256>}, {pipeline_mode = #tpu.pipeline_mode<synchronous>, transform_indices = @transform_4, window_bounds = array<i64: 1, 256>}, {pipeline_mode = #tpu.pipeline_mode<synchronous>, transform_indices = @transform_5, window_bounds = array<i64: 1, 256>}, {pipeline_mode = #tpu.pipeline_mode<synchronous>, transform_indices = @transform_6, window_bounds = array<i64: 1, 1024>}, {}, {transform_indices = @transform_8, window_bounds = array<i64: 8, 1024>}, {transform_indices = @transform_9, window_bounds = array<i64: 8, 1>}]} {
    tpu.enqueue_dma source(%arg8 : memref<256x1024xf32, #tpu.memory_space<any>>) target(%arg11 : memref<256x1024xf32, #tpu.memory_space<vmem>>) target_semaphore(%arg12 : memref<!tpu.dma_semaphore, #tpu.memory_space<semaphore_mem>>)
    %c0 = arith.constant 0 : index
    %c0_0 = arith.constant 0 : index
    %0 = vector.load %arg1[%c0, %c0_0] : memref<8x1024xf32, #tpu.memory_space<vmem>>, vector<8x1024xf32>
    %c0_1 = arith.constant 0 : index
    %c0_2 = arith.constant 0 : index
    %1 = vector.load %arg2[%c0_1, %c0_2] : memref<1024x256xf32, #tpu.memory_space<vmem>>, vector<1024x256xf32>
    %c0_3 = arith.constant 0 : index
    %c0_4 = arith.constant 0 : index
    %2 = vector.load %arg3[%c0_3, %c0_4] : memref<256x256xf32, #tpu.memory_space<vmem>>, vector<256x256xf32>
    %c0_5 = arith.constant 0 : index
    %c0_6 = arith.constant 0 : index
    %3 = vector.load %arg4[%c0_5, %c0_6] : memref<1x256xf32, #tpu.memory_space<vmem>>, vector<1x256xf32>
    %4 = vector.shape_cast %3 : vector<1x256xf32> to vector<1x256xf32>
    %5 = vector.broadcast %4 : vector<1x256xf32> to vector<8x256xf32>
    %c0_7 = arith.constant 0 : index
    %c0_8 = arith.constant 0 : index
    %6 = vector.load %arg5[%c0_7, %c0_8] : memref<1x256xf32, #tpu.memory_space<vmem>>, vector<1x256xf32>
    %7 = vector.shape_cast %6 : vector<1x256xf32> to vector<1x256xf32>
    %8 = vector.broadcast %7 : vector<1x256xf32> to vector<8x256xf32>
    %c0_9 = arith.constant 0 : index
    %c0_10 = arith.constant 0 : index
    %9 = vector.load %arg6[%c0_9, %c0_10] : memref<1x256xf32, #tpu.memory_space<vmem>>, vector<1x256xf32>
    %10 = vector.shape_cast %9 : vector<1x256xf32> to vector<1x256xf32>
    %11 = vector.broadcast %10 : vector<1x256xf32> to vector<8x256xf32>
    %cst = arith.constant dense<0.000000e+00> : vector<8x256xf32>
    %12 = tpu.matmul %0, %1, %cst {dimension_numbers = #tpu.dot_dimension_numbers<[1], [0], [0], [1], [0, 0, 1, 1], [], []>} : vector<8x1024xf32>, vector<1024x256xf32>, vector<8x256xf32> -> vector<8x256xf32>
    %13 = arith.addf %12, %5 : vector<8x256xf32>
    %cst_11 = arith.constant 0.000000e+00 : f32
    %14 = vector.broadcast %cst_11 : f32 to vector<8x256xf32>
    %cst_12 = arith.constant 0.000000e+00 : f32
    %15 = vector.broadcast %cst_12 : f32 to vector<8x1xf32>
    %c0_i32 = arith.constant 0 : i32
    %16 = math.tanh %13 : vector<8x256xf32>
    %cst_13 = arith.constant dense<0.000000e+00> : vector<8x256xf32>
    %17 = tpu.matmul %16, %2, %cst_13 {dimension_numbers = #tpu.dot_dimension_numbers<[1], [0], [0], [1], [0, 0, 1, 1], [], []>} : vector<8x256xf32>, vector<256x256xf32>, vector<8x256xf32> -> vector<8x256xf32>
    %18 = arith.addf %17, %8 : vector<8x256xf32>
    %19 = arith.mulf %16, %16 : vector<8x256xf32>
    %cst_14 = arith.constant 1.000000e+00 : f32
    %20 = vector.broadcast %cst_14 : f32 to vector<8x256xf32>
    %21 = arith.subf %20, %19 : vector<8x256xf32>
    %22 = arith.mulf %21, %11 : vector<8x256xf32>
    %cst_15 = arith.constant dense<0.000000e+00> : vector<8xf32>
    %23 = vector.multi_reduction <add>, %22, %cst_15 [1] : vector<8x256xf32> to vector<8xf32>
    %24 = vector.shape_cast %23 : vector<8xf32> to vector<8x1xf32>
    %cst_16 = arith.constant 6.250000e-02 : f32
    %25 = vector.broadcast %cst_16 : f32 to vector<8x256xf32>
    %26 = arith.mulf %25, %18 : vector<8x256xf32>
    %27 = arith.addf %13, %26 : vector<8x256xf32>
    %28 = math.tanh %27 : vector<8x256xf32>
    %cst_17 = arith.constant dense<0.000000e+00> : vector<8x256xf32>
    %29 = tpu.matmul %28, %2, %cst_17 {dimension_numbers = #tpu.dot_dimension_numbers<[1], [0], [0], [1], [0, 0, 1, 1], [], []>} : vector<8x256xf32>, vector<256x256xf32>, vector<8x256xf32> -> vector<8x256xf32>
    %30 = arith.addf %29, %8 : vector<8x256xf32>
    %31 = arith.mulf %28, %28 : vector<8x256xf32>
    %cst_18 = arith.constant 1.000000e+00 : f32
    %32 = vector.broadcast %cst_18 : f32 to vector<8x256xf32>
    %33 = arith.subf %32, %31 : vector<8x256xf32>
    %34 = arith.mulf %33, %11 : vector<8x256xf32>
    %cst_19 = arith.constant dense<0.000000e+00> : vector<8xf32>
    %35 = vector.multi_reduction <add>, %34, %cst_19 [1] : vector<8x256xf32> to vector<8xf32>
    %36 = vector.shape_cast %35 : vector<8xf32> to vector<8x1xf32>
    %cst_20 = arith.constant 6.250000e-02 : f32
    %37 = vector.broadcast %cst_20 : f32 to vector<8x256xf32>
    %38 = arith.mulf %37, %30 : vector<8x256xf32>
    %39 = arith.addf %13, %38 : vector<8x256xf32>
    %40 = math.tanh %39 : vector<8x256xf32>
    %cst_21 = arith.constant dense<0.000000e+00> : vector<8x256xf32>
    %41 = tpu.matmul %40, %2, %cst_21 {dimension_numbers = #tpu.dot_dimension_numbers<[1], [0], [0], [1], [0, 0, 1, 1], [], []>} : vector<8x256xf32>, vector<256x256xf32>, vector<8x256xf32> -> vector<8x256xf32>
    %42 = arith.addf %41, %8 : vector<8x256xf32>
    %43 = arith.mulf %40, %40 : vector<8x256xf32>
    %cst_22 = arith.constant 1.000000e+00 : f32
    %44 = vector.broadcast %cst_22 : f32 to vector<8x256xf32>
    %45 = arith.subf %44, %43 : vector<8x256xf32>
    %46 = arith.mulf %45, %11 : vector<8x256xf32>
    %cst_23 = arith.constant dense<0.000000e+00> : vector<8xf32>
    %47 = vector.multi_reduction <add>, %46, %cst_23 [1] : vector<8x256xf32> to vector<8xf32>
    %48 = vector.shape_cast %47 : vector<8xf32> to vector<8x1xf32>
    %cst_24 = arith.constant 1.250000e-01 : f32
    %49 = vector.broadcast %cst_24 : f32 to vector<8x256xf32>
    %50 = arith.mulf %49, %42 : vector<8x256xf32>
    %51 = arith.addf %13, %50 : vector<8x256xf32>
    %52 = math.tanh %51 : vector<8x256xf32>
    %cst_25 = arith.constant dense<0.000000e+00> : vector<8x256xf32>
    %53 = tpu.matmul %52, %2, %cst_25 {dimension_numbers = #tpu.dot_dimension_numbers<[1], [0], [0], [1], [0, 0, 1, 1], [], []>} : vector<8x256xf32>, vector<256x256xf32>, vector<8x256xf32> -> vector<8x256xf32>
    %54 = arith.addf %53, %8 : vector<8x256xf32>
    %55 = arith.mulf %52, %52 : vector<8x256xf32>
    %cst_26 = arith.constant 1.000000e+00 : f32
    %56 = vector.broadcast %cst_26 : f32 to vector<8x256xf32>
    %57 = arith.subf %56, %55 : vector<8x256xf32>
    %58 = arith.mulf %57, %11 : vector<8x256xf32>
    %cst_27 = arith.constant dense<0.000000e+00> : vector<8xf32>
    %59 = vector.multi_reduction <add>, %58, %cst_27 [1] : vector<8x256xf32> to vector<8xf32>
    %60 = vector.shape_cast %59 : vector<8xf32> to vector<8x1xf32>
    %cst_28 = arith.constant 2.000000e+00 : f32
    %61 = vector.broadcast %cst_28 : f32 to vector<8x256xf32>
    %62 = arith.mulf %61, %30 : vector<8x256xf32>
    %63 = arith.addf %18, %62 : vector<8x256xf32>
    %cst_29 = arith.constant 2.000000e+00 : f32
    %64 = vector.broadcast %cst_29 : f32 to vector<8x256xf32>
    %65 = arith.mulf %64, %42 : vector<8x256xf32>
    %66 = arith.addf %63, %65 : vector<8x256xf32>
    %67 = arith.addf %66, %54 : vector<8x256xf32>
    %cst_30 = arith.constant 0.020833334 : f32
    %68 = vector.broadcast %cst_30 : f32 to vector<8x256xf32>
    %69 = arith.mulf %68, %67 : vector<8x256xf32>
    %70 = arith.addf %13, %69 : vector<8x256xf32>
    %cst_31 = arith.constant 2.000000e+00 : f32
    %71 = vector.broadcast %cst_31 : f32 to vector<8x256xf32>
    %72 = arith.mulf %71, %28 : vector<8x256xf32>
    %73 = arith.addf %16, %72 : vector<8x256xf32>
    %cst_32 = arith.constant 2.000000e+00 : f32
    %74 = vector.broadcast %cst_32 : f32 to vector<8x256xf32>
    %75 = arith.mulf %74, %40 : vector<8x256xf32>
    %76 = arith.addf %73, %75 : vector<8x256xf32>
    %77 = arith.addf %76, %52 : vector<8x256xf32>
    %78 = arith.addf %14, %77 : vector<8x256xf32>
    %cst_33 = arith.constant 2.000000e+00 : f32
    %79 = vector.broadcast %cst_33 : f32 to vector<8x1xf32>
    %80 = arith.mulf %79, %36 : vector<8x1xf32>
    %81 = arith.addf %24, %80 : vector<8x1xf32>
    %cst_34 = arith.constant 2.000000e+00 : f32
    %82 = vector.broadcast %cst_34 : f32 to vector<8x1xf32>
    %83 = arith.mulf %82, %48 : vector<8x1xf32>
    %84 = arith.addf %81, %83 : vector<8x1xf32>
    %85 = arith.addf %84, %60 : vector<8x1xf32>
    %cst_35 = arith.constant 0.020833334 : f32
    %86 = vector.broadcast %cst_35 : f32 to vector<8x1xf32>
    %87 = arith.mulf %86, %85 : vector<8x1xf32>
    %88 = arith.addf %15, %87 : vector<8x1xf32>
    %c1_i32 = arith.constant 1 : i32
    %89 = math.tanh %70 : vector<8x256xf32>
    %cst_36 = arith.constant dense<0.000000e+00> : vector<8x256xf32>
    %90 = tpu.matmul %89, %2, %cst_36 {dimension_numbers = #tpu.dot_dimension_numbers<[1], [0], [0], [1], [0, 0, 1, 1], [], []>} : vector<8x256xf32>, vector<256x256xf32>, vector<8x256xf32> -> vector<8x256xf32>
    %91 = arith.addf %90, %8 : vector<8x256xf32>
    %92 = arith.mulf %89, %89 : vector<8x256xf32>
    %cst_37 = arith.constant 1.000000e+00 : f32
    %93 = vector.broadcast %cst_37 : f32 to vector<8x256xf32>
    %94 = arith.subf %93, %92 : vector<8x256xf32>
    %95 = arith.mulf %94, %11 : vector<8x256xf32>
    %cst_38 = arith.constant dense<0.000000e+00> : vector<8xf32>
    %96 = vector.multi_reduction <add>, %95, %cst_38 [1] : vector<8x256xf32> to vector<8xf32>
    %97 = vector.shape_cast %96 : vector<8xf32> to vector<8x1xf32>
    %cst_39 = arith.constant 6.250000e-02 : f32
    %98 = vector.broadcast %cst_39 : f32 to vector<8x256xf32>
    %99 = arith.mulf %98, %91 : vector<8x256xf32>
    %100 = arith.addf %70, %99 : vector<8x256xf32>
    %101 = math.tanh %100 : vector<8x256xf32>
    %cst_40 = arith.constant dense<0.000000e+00> : vector<8x256xf32>
    %102 = tpu.matmul %101, %2, %cst_40 {dimension_numbers = #tpu.dot_dimension_numbers<[1], [0], [0], [1], [0, 0, 1, 1], [], []>} : vector<8x256xf32>, vector<256x256xf32>, vector<8x256xf32> -> vector<8x256xf32>
    %103 = arith.addf %102, %8 : vector<8x256xf32>
    %104 = arith.mulf %101, %101 : vector<8x256xf32>
    %cst_41 = arith.constant 1.000000e+00 : f32
    %105 = vector.broadcast %cst_41 : f32 to vector<8x256xf32>
    %106 = arith.subf %105, %104 : vector<8x256xf32>
    %107 = arith.mulf %106, %11 : vector<8x256xf32>
    %cst_42 = arith.constant dense<0.000000e+00> : vector<8xf32>
    %108 = vector.multi_reduction <add>, %107, %cst_42 [1] : vector<8x256xf32> to vector<8xf32>
    %109 = vector.shape_cast %108 : vector<8xf32> to vector<8x1xf32>
    %cst_43 = arith.constant 6.250000e-02 : f32
    %110 = vector.broadcast %cst_43 : f32 to vector<8x256xf32>
    %111 = arith.mulf %110, %103 : vector<8x256xf32>
    %112 = arith.addf %70, %111 : vector<8x256xf32>
    %113 = math.tanh %112 : vector<8x256xf32>
    %cst_44 = arith.constant dense<0.000000e+00> : vector<8x256xf32>
    %114 = tpu.matmul %113, %2, %cst_44 {dimension_numbers = #tpu.dot_dimension_numbers<[1], [0], [0], [1], [0, 0, 1, 1], [], []>} : vector<8x256xf32>, vector<256x256xf32>, vector<8x256xf32> -> vector<8x256xf32>
    %115 = arith.addf %114, %8 : vector<8x256xf32>
    %116 = arith.mulf %113, %113 : vector<8x256xf32>
    %cst_45 = arith.constant 1.000000e+00 : f32
    %117 = vector.broadcast %cst_45 : f32 to vector<8x256xf32>
    %118 = arith.subf %117, %116 : vector<8x256xf32>
    %119 = arith.mulf %118, %11 : vector<8x256xf32>
    %cst_46 = arith.constant dense<0.000000e+00> : vector<8xf32>
    %120 = vector.multi_reduction <add>, %119, %cst_46 [1] : vector<8x256xf32> to vector<8xf32>
    %121 = vector.shape_cast %120 : vector<8xf32> to vector<8x1xf32>
    %cst_47 = arith.constant 1.250000e-01 : f32
    %122 = vector.broadcast %cst_47 : f32 to vector<8x256xf32>
    %123 = arith.mulf %122, %115 : vector<8x256xf32>
    %124 = arith.addf %70, %123 : vector<8x256xf32>
    %125 = math.tanh %124 : vector<8x256xf32>
    %cst_48 = arith.constant dense<0.000000e+00> : vector<8x256xf32>
    %126 = tpu.matmul %125, %2, %cst_48 {dimension_numbers = #tpu.dot_dimension_numbers<[1], [0], [0], [1], [0, 0, 1, 1], [], []>} : vector<8x256xf32>, vector<256x256xf32>, vector<8x256xf32> -> vector<8x256xf32>
    %127 = arith.addf %126, %8 : vector<8x256xf32>
    %128 = arith.mulf %125, %125 : vector<8x256xf32>
    %cst_49 = arith.constant 1.000000e+00 : f32
    %129 = vector.broadcast %cst_49 : f32 to vector<8x256xf32>
    %130 = arith.subf %129, %128 : vector<8x256xf32>
    %131 = arith.mulf %130, %11 : vector<8x256xf32>
    %cst_50 = arith.constant dense<0.000000e+00> : vector<8xf32>
    %132 = vector.multi_reduction <add>, %131, %cst_50 [1] : vector<8x256xf32> to vector<8xf32>
    %133 = vector.shape_cast %132 : vector<8xf32> to vector<8x1xf32>
    %cst_51 = arith.constant 2.000000e+00 : f32
    %134 = vector.broadcast %cst_51 : f32 to vector<8x256xf32>
    %135 = arith.mulf %134, %103 : vector<8x256xf32>
    %136 = arith.addf %91, %135 : vector<8x256xf32>
    %cst_52 = arith.constant 2.000000e+00 : f32
    %137 = vector.broadcast %cst_52 : f32 to vector<8x256xf32>
    %138 = arith.mulf %137, %115 : vector<8x256xf32>
    %139 = arith.addf %136, %138 : vector<8x256xf32>
    %140 = arith.addf %139, %127 : vector<8x256xf32>
    %cst_53 = arith.constant 0.020833334 : f32
    %141 = vector.broadcast %cst_53 : f32 to vector<8x256xf32>
    %142 = arith.mulf %141, %140 : vector<8x256xf32>
    %143 = arith.addf %70, %142 : vector<8x256xf32>
    %cst_54 = arith.constant 2.000000e+00 : f32
    %144 = vector.broadcast %cst_54 : f32 to vector<8x256xf32>
    %145 = arith.mulf %144, %101 : vector<8x256xf32>
    %146 = arith.addf %89, %145 : vector<8x256xf32>
    %cst_55 = arith.constant 2.000000e+00 : f32
    %147 = vector.broadcast %cst_55 : f32 to vector<8x256xf32>
    %148 = arith.mulf %147, %113 : vector<8x256xf32>
    %149 = arith.addf %146, %148 : vector<8x256xf32>
    %150 = arith.addf %149, %125 : vector<8x256xf32>
    %151 = arith.addf %78, %150 : vector<8x256xf32>
    %cst_56 = arith.constant 2.000000e+00 : f32
    %152 = vector.broadcast %cst_56 : f32 to vector<8x1xf32>
    %153 = arith.mulf %152, %109 : vector<8x1xf32>
    %154 = arith.addf %97, %153 : vector<8x1xf32>
    %cst_57 = arith.constant 2.000000e+00 : f32
    %155 = vector.broadcast %cst_57 : f32 to vector<8x1xf32>
    %156 = arith.mulf %155, %121 : vector<8x1xf32>
    %157 = arith.addf %154, %156 : vector<8x1xf32>
    %158 = arith.addf %157, %133 : vector<8x1xf32>
    %cst_58 = arith.constant 0.020833334 : f32
    %159 = vector.broadcast %cst_58 : f32 to vector<8x1xf32>
    %160 = arith.mulf %159, %158 : vector<8x1xf32>
    %161 = arith.addf %88, %160 : vector<8x1xf32>
    %c2_i32 = arith.constant 2 : i32
    %162 = math.tanh %143 : vector<8x256xf32>
    %cst_59 = arith.constant dense<0.000000e+00> : vector<8x256xf32>
    %163 = tpu.matmul %162, %2, %cst_59 {dimension_numbers = #tpu.dot_dimension_numbers<[1], [0], [0], [1], [0, 0, 1, 1], [], []>} : vector<8x256xf32>, vector<256x256xf32>, vector<8x256xf32> -> vector<8x256xf32>
    %164 = arith.addf %163, %8 : vector<8x256xf32>
    %165 = arith.mulf %162, %162 : vector<8x256xf32>
    %cst_60 = arith.constant 1.000000e+00 : f32
    %166 = vector.broadcast %cst_60 : f32 to vector<8x256xf32>
    %167 = arith.subf %166, %165 : vector<8x256xf32>
    %168 = arith.mulf %167, %11 : vector<8x256xf32>
    %cst_61 = arith.constant dense<0.000000e+00> : vector<8xf32>
    %169 = vector.multi_reduction <add>, %168, %cst_61 [1] : vector<8x256xf32> to vector<8xf32>
    %170 = vector.shape_cast %169 : vector<8xf32> to vector<8x1xf32>
    %cst_62 = arith.constant 6.250000e-02 : f32
    %171 = vector.broadcast %cst_62 : f32 to vector<8x256xf32>
    %172 = arith.mulf %171, %164 : vector<8x256xf32>
    %173 = arith.addf %143, %172 : vector<8x256xf32>
    %174 = math.tanh %173 : vector<8x256xf32>
    %cst_63 = arith.constant dense<0.000000e+00> : vector<8x256xf32>
    %175 = tpu.matmul %174, %2, %cst_63 {dimension_numbers = #tpu.dot_dimension_numbers<[1], [0], [0], [1], [0, 0, 1, 1], [], []>} : vector<8x256xf32>, vector<256x256xf32>, vector<8x256xf32> -> vector<8x256xf32>
    %176 = arith.addf %175, %8 : vector<8x256xf32>
    %177 = arith.mulf %174, %174 : vector<8x256xf32>
    %cst_64 = arith.constant 1.000000e+00 : f32
    %178 = vector.broadcast %cst_64 : f32 to vector<8x256xf32>
    %179 = arith.subf %178, %177 : vector<8x256xf32>
    %180 = arith.mulf %179, %11 : vector<8x256xf32>
    %cst_65 = arith.constant dense<0.000000e+00> : vector<8xf32>
    %181 = vector.multi_reduction <add>, %180, %cst_65 [1] : vector<8x256xf32> to vector<8xf32>
    %182 = vector.shape_cast %181 : vector<8xf32> to vector<8x1xf32>
    %cst_66 = arith.constant 6.250000e-02 : f32
    %183 = vector.broadcast %cst_66 : f32 to vector<8x256xf32>
    %184 = arith.mulf %183, %176 : vector<8x256xf32>
    %185 = arith.addf %143, %184 : vector<8x256xf32>
    %186 = math.tanh %185 : vector<8x256xf32>
    %cst_67 = arith.constant dense<0.000000e+00> : vector<8x256xf32>
    %187 = tpu.matmul %186, %2, %cst_67 {dimension_numbers = #tpu.dot_dimension_numbers<[1], [0], [0], [1], [0, 0, 1, 1], [], []>} : vector<8x256xf32>, vector<256x256xf32>, vector<8x256xf32> -> vector<8x256xf32>
    %188 = arith.addf %187, %8 : vector<8x256xf32>
    %189 = arith.mulf %186, %186 : vector<8x256xf32>
    %cst_68 = arith.constant 1.000000e+00 : f32
    %190 = vector.broadcast %cst_68 : f32 to vector<8x256xf32>
    %191 = arith.subf %190, %189 : vector<8x256xf32>
    %192 = arith.mulf %191, %11 : vector<8x256xf32>
    %cst_69 = arith.constant dense<0.000000e+00> : vector<8xf32>
    %193 = vector.multi_reduction <add>, %192, %cst_69 [1] : vector<8x256xf32> to vector<8xf32>
    %194 = vector.shape_cast %193 : vector<8xf32> to vector<8x1xf32>
    %cst_70 = arith.constant 1.250000e-01 : f32
    %195 = vector.broadcast %cst_70 : f32 to vector<8x256xf32>
    %196 = arith.mulf %195, %188 : vector<8x256xf32>
    %197 = arith.addf %143, %196 : vector<8x256xf32>
    %198 = math.tanh %197 : vector<8x256xf32>
    %cst_71 = arith.constant dense<0.000000e+00> : vector<8x256xf32>
    %199 = tpu.matmul %198, %2, %cst_71 {dimension_numbers = #tpu.dot_dimension_numbers<[1], [0], [0], [1], [0, 0, 1, 1], [], []>} : vector<8x256xf32>, vector<256x256xf32>, vector<8x256xf32> -> vector<8x256xf32>
    %200 = arith.addf %199, %8 : vector<8x256xf32>
    %201 = arith.mulf %198, %198 : vector<8x256xf32>
    %cst_72 = arith.constant 1.000000e+00 : f32
    %202 = vector.broadcast %cst_72 : f32 to vector<8x256xf32>
    %203 = arith.subf %202, %201 : vector<8x256xf32>
    %204 = arith.mulf %203, %11 : vector<8x256xf32>
    %cst_73 = arith.constant dense<0.000000e+00> : vector<8xf32>
    %205 = vector.multi_reduction <add>, %204, %cst_73 [1] : vector<8x256xf32> to vector<8xf32>
    %206 = vector.shape_cast %205 : vector<8xf32> to vector<8x1xf32>
    %cst_74 = arith.constant 2.000000e+00 : f32
    %207 = vector.broadcast %cst_74 : f32 to vector<8x256xf32>
    %208 = arith.mulf %207, %176 : vector<8x256xf32>
    %209 = arith.addf %164, %208 : vector<8x256xf32>
    %cst_75 = arith.constant 2.000000e+00 : f32
    %210 = vector.broadcast %cst_75 : f32 to vector<8x256xf32>
    %211 = arith.mulf %210, %188 : vector<8x256xf32>
    %212 = arith.addf %209, %211 : vector<8x256xf32>
    %213 = arith.addf %212, %200 : vector<8x256xf32>
    %cst_76 = arith.constant 0.020833334 : f32
    %214 = vector.broadcast %cst_76 : f32 to vector<8x256xf32>
    %215 = arith.mulf %214, %213 : vector<8x256xf32>
    %216 = arith.addf %143, %215 : vector<8x256xf32>
    %cst_77 = arith.constant 2.000000e+00 : f32
    %217 = vector.broadcast %cst_77 : f32 to vector<8x256xf32>
    %218 = arith.mulf %217, %174 : vector<8x256xf32>
    %219 = arith.addf %162, %218 : vector<8x256xf32>
    %cst_78 = arith.constant 2.000000e+00 : f32
    %220 = vector.broadcast %cst_78 : f32 to vector<8x256xf32>
    %221 = arith.mulf %220, %186 : vector<8x256xf32>
    %222 = arith.addf %219, %221 : vector<8x256xf32>
    %223 = arith.addf %222, %198 : vector<8x256xf32>
    %224 = arith.addf %151, %223 : vector<8x256xf32>
    %cst_79 = arith.constant 2.000000e+00 : f32
    %225 = vector.broadcast %cst_79 : f32 to vector<8x1xf32>
    %226 = arith.mulf %225, %182 : vector<8x1xf32>
    %227 = arith.addf %170, %226 : vector<8x1xf32>
    %cst_80 = arith.constant 2.000000e+00 : f32
    %228 = vector.broadcast %cst_80 : f32 to vector<8x1xf32>
    %229 = arith.mulf %228, %194 : vector<8x1xf32>
    %230 = arith.addf %227, %229 : vector<8x1xf32>
    %231 = arith.addf %230, %206 : vector<8x1xf32>
    %cst_81 = arith.constant 0.020833334 : f32
    %232 = vector.broadcast %cst_81 : f32 to vector<8x1xf32>
    %233 = arith.mulf %232, %231 : vector<8x1xf32>
    %234 = arith.addf %161, %233 : vector<8x1xf32>
    %c3_i32 = arith.constant 3 : i32
    %235 = math.tanh %216 : vector<8x256xf32>
    %cst_82 = arith.constant dense<0.000000e+00> : vector<8x256xf32>
    %236 = tpu.matmul %235, %2, %cst_82 {dimension_numbers = #tpu.dot_dimension_numbers<[1], [0], [0], [1], [0, 0, 1, 1], [], []>} : vector<8x256xf32>, vector<256x256xf32>, vector<8x256xf32> -> vector<8x256xf32>
    %237 = arith.addf %236, %8 : vector<8x256xf32>
    %238 = arith.mulf %235, %235 : vector<8x256xf32>
    %cst_83 = arith.constant 1.000000e+00 : f32
    %239 = vector.broadcast %cst_83 : f32 to vector<8x256xf32>
    %240 = arith.subf %239, %238 : vector<8x256xf32>
    %241 = arith.mulf %240, %11 : vector<8x256xf32>
    %cst_84 = arith.constant dense<0.000000e+00> : vector<8xf32>
    %242 = vector.multi_reduction <add>, %241, %cst_84 [1] : vector<8x256xf32> to vector<8xf32>
    %243 = vector.shape_cast %242 : vector<8xf32> to vector<8x1xf32>
    %cst_85 = arith.constant 6.250000e-02 : f32
    %244 = vector.broadcast %cst_85 : f32 to vector<8x256xf32>
    %245 = arith.mulf %244, %237 : vector<8x256xf32>
    %246 = arith.addf %216, %245 : vector<8x256xf32>
    %247 = math.tanh %246 : vector<8x256xf32>
    %cst_86 = arith.constant dense<0.000000e+00> : vector<8x256xf32>
    %248 = tpu.matmul %247, %2, %cst_86 {dimension_numbers = #tpu.dot_dimension_numbers<[1], [0], [0], [1], [0, 0, 1, 1], [], []>} : vector<8x256xf32>, vector<256x256xf32>, vector<8x256xf32> -> vector<8x256xf32>
    %249 = arith.addf %248, %8 : vector<8x256xf32>
    %250 = arith.mulf %247, %247 : vector<8x256xf32>
    %cst_87 = arith.constant 1.000000e+00 : f32
    %251 = vector.broadcast %cst_87 : f32 to vector<8x256xf32>
    %252 = arith.subf %251, %250 : vector<8x256xf32>
    %253 = arith.mulf %252, %11 : vector<8x256xf32>
    %cst_88 = arith.constant dense<0.000000e+00> : vector<8xf32>
    %254 = vector.multi_reduction <add>, %253, %cst_88 [1] : vector<8x256xf32> to vector<8xf32>
    %255 = vector.shape_cast %254 : vector<8xf32> to vector<8x1xf32>
    %cst_89 = arith.constant 6.250000e-02 : f32
    %256 = vector.broadcast %cst_89 : f32 to vector<8x256xf32>
    %257 = arith.mulf %256, %249 : vector<8x256xf32>
    %258 = arith.addf %216, %257 : vector<8x256xf32>
    %259 = math.tanh %258 : vector<8x256xf32>
    %cst_90 = arith.constant dense<0.000000e+00> : vector<8x256xf32>
    %260 = tpu.matmul %259, %2, %cst_90 {dimension_numbers = #tpu.dot_dimension_numbers<[1], [0], [0], [1], [0, 0, 1, 1], [], []>} : vector<8x256xf32>, vector<256x256xf32>, vector<8x256xf32> -> vector<8x256xf32>
    %261 = arith.addf %260, %8 : vector<8x256xf32>
    %262 = arith.mulf %259, %259 : vector<8x256xf32>
    %cst_91 = arith.constant 1.000000e+00 : f32
    %263 = vector.broadcast %cst_91 : f32 to vector<8x256xf32>
    %264 = arith.subf %263, %262 : vector<8x256xf32>
    %265 = arith.mulf %264, %11 : vector<8x256xf32>
    %cst_92 = arith.constant dense<0.000000e+00> : vector<8xf32>
    %266 = vector.multi_reduction <add>, %265, %cst_92 [1] : vector<8x256xf32> to vector<8xf32>
    %267 = vector.shape_cast %266 : vector<8xf32> to vector<8x1xf32>
    %cst_93 = arith.constant 1.250000e-01 : f32
    %268 = vector.broadcast %cst_93 : f32 to vector<8x256xf32>
    %269 = arith.mulf %268, %261 : vector<8x256xf32>
    %270 = arith.addf %216, %269 : vector<8x256xf32>
    %271 = math.tanh %270 : vector<8x256xf32>
    %cst_94 = arith.constant dense<0.000000e+00> : vector<8x256xf32>
    %272 = tpu.matmul %271, %2, %cst_94 {dimension_numbers = #tpu.dot_dimension_numbers<[1], [0], [0], [1], [0, 0, 1, 1], [], []>} : vector<8x256xf32>, vector<256x256xf32>, vector<8x256xf32> -> vector<8x256xf32>
    %273 = arith.addf %272, %8 : vector<8x256xf32>
    %274 = arith.mulf %271, %271 : vector<8x256xf32>
    %cst_95 = arith.constant 1.000000e+00 : f32
    %275 = vector.broadcast %cst_95 : f32 to vector<8x256xf32>
    %276 = arith.subf %275, %274 : vector<8x256xf32>
    %277 = arith.mulf %276, %11 : vector<8x256xf32>
    %cst_96 = arith.constant dense<0.000000e+00> : vector<8xf32>
    %278 = vector.multi_reduction <add>, %277, %cst_96 [1] : vector<8x256xf32> to vector<8xf32>
    %279 = vector.shape_cast %278 : vector<8xf32> to vector<8x1xf32>
    %cst_97 = arith.constant 2.000000e+00 : f32
    %280 = vector.broadcast %cst_97 : f32 to vector<8x256xf32>
    %281 = arith.mulf %280, %249 : vector<8x256xf32>
    %282 = arith.addf %237, %281 : vector<8x256xf32>
    %cst_98 = arith.constant 2.000000e+00 : f32
    %283 = vector.broadcast %cst_98 : f32 to vector<8x256xf32>
    %284 = arith.mulf %283, %261 : vector<8x256xf32>
    %285 = arith.addf %282, %284 : vector<8x256xf32>
    %286 = arith.addf %285, %273 : vector<8x256xf32>
    %cst_99 = arith.constant 0.020833334 : f32
    %287 = vector.broadcast %cst_99 : f32 to vector<8x256xf32>
    %288 = arith.mulf %287, %286 : vector<8x256xf32>
    %289 = arith.addf %216, %288 : vector<8x256xf32>
    %cst_100 = arith.constant 2.000000e+00 : f32
    %290 = vector.broadcast %cst_100 : f32 to vector<8x256xf32>
    %291 = arith.mulf %290, %247 : vector<8x256xf32>
    %292 = arith.addf %235, %291 : vector<8x256xf32>
    %cst_101 = arith.constant 2.000000e+00 : f32
    %293 = vector.broadcast %cst_101 : f32 to vector<8x256xf32>
    %294 = arith.mulf %293, %259 : vector<8x256xf32>
    %295 = arith.addf %292, %294 : vector<8x256xf32>
    %296 = arith.addf %295, %271 : vector<8x256xf32>
    %297 = arith.addf %224, %296 : vector<8x256xf32>
    %cst_102 = arith.constant 2.000000e+00 : f32
    %298 = vector.broadcast %cst_102 : f32 to vector<8x1xf32>
    %299 = arith.mulf %298, %255 : vector<8x1xf32>
    %300 = arith.addf %243, %299 : vector<8x1xf32>
    %cst_103 = arith.constant 2.000000e+00 : f32
    %301 = vector.broadcast %cst_103 : f32 to vector<8x1xf32>
    %302 = arith.mulf %301, %267 : vector<8x1xf32>
    %303 = arith.addf %300, %302 : vector<8x1xf32>
    %304 = arith.addf %303, %279 : vector<8x1xf32>
    %cst_104 = arith.constant 0.020833334 : f32
    %305 = vector.broadcast %cst_104 : f32 to vector<8x1xf32>
    %306 = arith.mulf %305, %304 : vector<8x1xf32>
    %307 = arith.addf %234, %306 : vector<8x1xf32>
    %c4_i32 = arith.constant 4 : i32
    %308 = math.tanh %289 : vector<8x256xf32>
    %cst_105 = arith.constant dense<0.000000e+00> : vector<8x256xf32>
    %309 = tpu.matmul %308, %2, %cst_105 {dimension_numbers = #tpu.dot_dimension_numbers<[1], [0], [0], [1], [0, 0, 1, 1], [], []>} : vector<8x256xf32>, vector<256x256xf32>, vector<8x256xf32> -> vector<8x256xf32>
    %310 = arith.addf %309, %8 : vector<8x256xf32>
    %311 = arith.mulf %308, %308 : vector<8x256xf32>
    %cst_106 = arith.constant 1.000000e+00 : f32
    %312 = vector.broadcast %cst_106 : f32 to vector<8x256xf32>
    %313 = arith.subf %312, %311 : vector<8x256xf32>
    %314 = arith.mulf %313, %11 : vector<8x256xf32>
    %cst_107 = arith.constant dense<0.000000e+00> : vector<8xf32>
    %315 = vector.multi_reduction <add>, %314, %cst_107 [1] : vector<8x256xf32> to vector<8xf32>
    %316 = vector.shape_cast %315 : vector<8xf32> to vector<8x1xf32>
    %cst_108 = arith.constant 6.250000e-02 : f32
    %317 = vector.broadcast %cst_108 : f32 to vector<8x256xf32>
    %318 = arith.mulf %317, %310 : vector<8x256xf32>
    %319 = arith.addf %289, %318 : vector<8x256xf32>
    %320 = math.tanh %319 : vector<8x256xf32>
    %cst_109 = arith.constant dense<0.000000e+00> : vector<8x256xf32>
    %321 = tpu.matmul %320, %2, %cst_109 {dimension_numbers = #tpu.dot_dimension_numbers<[1], [0], [0], [1], [0, 0, 1, 1], [], []>} : vector<8x256xf32>, vector<256x256xf32>, vector<8x256xf32> -> vector<8x256xf32>
    %322 = arith.addf %321, %8 : vector<8x256xf32>
    %323 = arith.mulf %320, %320 : vector<8x256xf32>
    %cst_110 = arith.constant 1.000000e+00 : f32
    %324 = vector.broadcast %cst_110 : f32 to vector<8x256xf32>
    %325 = arith.subf %324, %323 : vector<8x256xf32>
    %326 = arith.mulf %325, %11 : vector<8x256xf32>
    %cst_111 = arith.constant dense<0.000000e+00> : vector<8xf32>
    %327 = vector.multi_reduction <add>, %326, %cst_111 [1] : vector<8x256xf32> to vector<8xf32>
    %328 = vector.shape_cast %327 : vector<8xf32> to vector<8x1xf32>
    %cst_112 = arith.constant 6.250000e-02 : f32
    %329 = vector.broadcast %cst_112 : f32 to vector<8x256xf32>
    %330 = arith.mulf %329, %322 : vector<8x256xf32>
    %331 = arith.addf %289, %330 : vector<8x256xf32>
    %332 = math.tanh %331 : vector<8x256xf32>
    %cst_113 = arith.constant dense<0.000000e+00> : vector<8x256xf32>
    %333 = tpu.matmul %332, %2, %cst_113 {dimension_numbers = #tpu.dot_dimension_numbers<[1], [0], [0], [1], [0, 0, 1, 1], [], []>} : vector<8x256xf32>, vector<256x256xf32>, vector<8x256xf32> -> vector<8x256xf32>
    %334 = arith.addf %333, %8 : vector<8x256xf32>
    %335 = arith.mulf %332, %332 : vector<8x256xf32>
    %cst_114 = arith.constant 1.000000e+00 : f32
    %336 = vector.broadcast %cst_114 : f32 to vector<8x256xf32>
    %337 = arith.subf %336, %335 : vector<8x256xf32>
    %338 = arith.mulf %337, %11 : vector<8x256xf32>
    %cst_115 = arith.constant dense<0.000000e+00> : vector<8xf32>
    %339 = vector.multi_reduction <add>, %338, %cst_115 [1] : vector<8x256xf32> to vector<8xf32>
    %340 = vector.shape_cast %339 : vector<8xf32> to vector<8x1xf32>
    %cst_116 = arith.constant 1.250000e-01 : f32
    %341 = vector.broadcast %cst_116 : f32 to vector<8x256xf32>
    %342 = arith.mulf %341, %334 : vector<8x256xf32>
    %343 = arith.addf %289, %342 : vector<8x256xf32>
    %344 = math.tanh %343 : vector<8x256xf32>
    %cst_117 = arith.constant dense<0.000000e+00> : vector<8x256xf32>
    %345 = tpu.matmul %344, %2, %cst_117 {dimension_numbers = #tpu.dot_dimension_numbers<[1], [0], [0], [1], [0, 0, 1, 1], [], []>} : vector<8x256xf32>, vector<256x256xf32>, vector<8x256xf32> -> vector<8x256xf32>
    %346 = arith.addf %345, %8 : vector<8x256xf32>
    %347 = arith.mulf %344, %344 : vector<8x256xf32>
    %cst_118 = arith.constant 1.000000e+00 : f32
    %348 = vector.broadcast %cst_118 : f32 to vector<8x256xf32>
    %349 = arith.subf %348, %347 : vector<8x256xf32>
    %350 = arith.mulf %349, %11 : vector<8x256xf32>
    %cst_119 = arith.constant dense<0.000000e+00> : vector<8xf32>
    %351 = vector.multi_reduction <add>, %350, %cst_119 [1] : vector<8x256xf32> to vector<8xf32>
    %352 = vector.shape_cast %351 : vector<8xf32> to vector<8x1xf32>
    %cst_120 = arith.constant 2.000000e+00 : f32
    %353 = vector.broadcast %cst_120 : f32 to vector<8x256xf32>
    %354 = arith.mulf %353, %322 : vector<8x256xf32>
    %355 = arith.addf %310, %354 : vector<8x256xf32>
    %cst_121 = arith.constant 2.000000e+00 : f32
    %356 = vector.broadcast %cst_121 : f32 to vector<8x256xf32>
    %357 = arith.mulf %356, %334 : vector<8x256xf32>
    %358 = arith.addf %355, %357 : vector<8x256xf32>
    %359 = arith.addf %358, %346 : vector<8x256xf32>
    %cst_122 = arith.constant 0.020833334 : f32
    %360 = vector.broadcast %cst_122 : f32 to vector<8x256xf32>
    %361 = arith.mulf %360, %359 : vector<8x256xf32>
    %362 = arith.addf %289, %361 : vector<8x256xf32>
    %cst_123 = arith.constant 2.000000e+00 : f32
    %363 = vector.broadcast %cst_123 : f32 to vector<8x256xf32>
    %364 = arith.mulf %363, %320 : vector<8x256xf32>
    %365 = arith.addf %308, %364 : vector<8x256xf32>
    %cst_124 = arith.constant 2.000000e+00 : f32
    %366 = vector.broadcast %cst_124 : f32 to vector<8x256xf32>
    %367 = arith.mulf %366, %332 : vector<8x256xf32>
    %368 = arith.addf %365, %367 : vector<8x256xf32>
    %369 = arith.addf %368, %344 : vector<8x256xf32>
    %370 = arith.addf %297, %369 : vector<8x256xf32>
    %cst_125 = arith.constant 2.000000e+00 : f32
    %371 = vector.broadcast %cst_125 : f32 to vector<8x1xf32>
    %372 = arith.mulf %371, %328 : vector<8x1xf32>
    %373 = arith.addf %316, %372 : vector<8x1xf32>
    %cst_126 = arith.constant 2.000000e+00 : f32
    %374 = vector.broadcast %cst_126 : f32 to vector<8x1xf32>
    %375 = arith.mulf %374, %340 : vector<8x1xf32>
    %376 = arith.addf %373, %375 : vector<8x1xf32>
    %377 = arith.addf %376, %352 : vector<8x1xf32>
    %cst_127 = arith.constant 0.020833334 : f32
    %378 = vector.broadcast %cst_127 : f32 to vector<8x1xf32>
    %379 = arith.mulf %378, %377 : vector<8x1xf32>
    %380 = arith.addf %307, %379 : vector<8x1xf32>
    %c5_i32 = arith.constant 5 : i32
    %381 = math.tanh %362 : vector<8x256xf32>
    %cst_128 = arith.constant dense<0.000000e+00> : vector<8x256xf32>
    %382 = tpu.matmul %381, %2, %cst_128 {dimension_numbers = #tpu.dot_dimension_numbers<[1], [0], [0], [1], [0, 0, 1, 1], [], []>} : vector<8x256xf32>, vector<256x256xf32>, vector<8x256xf32> -> vector<8x256xf32>
    %383 = arith.addf %382, %8 : vector<8x256xf32>
    %384 = arith.mulf %381, %381 : vector<8x256xf32>
    %cst_129 = arith.constant 1.000000e+00 : f32
    %385 = vector.broadcast %cst_129 : f32 to vector<8x256xf32>
    %386 = arith.subf %385, %384 : vector<8x256xf32>
    %387 = arith.mulf %386, %11 : vector<8x256xf32>
    %cst_130 = arith.constant dense<0.000000e+00> : vector<8xf32>
    %388 = vector.multi_reduction <add>, %387, %cst_130 [1] : vector<8x256xf32> to vector<8xf32>
    %389 = vector.shape_cast %388 : vector<8xf32> to vector<8x1xf32>
    %cst_131 = arith.constant 6.250000e-02 : f32
    %390 = vector.broadcast %cst_131 : f32 to vector<8x256xf32>
    %391 = arith.mulf %390, %383 : vector<8x256xf32>
    %392 = arith.addf %362, %391 : vector<8x256xf32>
    %393 = math.tanh %392 : vector<8x256xf32>
    %cst_132 = arith.constant dense<0.000000e+00> : vector<8x256xf32>
    %394 = tpu.matmul %393, %2, %cst_132 {dimension_numbers = #tpu.dot_dimension_numbers<[1], [0], [0], [1], [0, 0, 1, 1], [], []>} : vector<8x256xf32>, vector<256x256xf32>, vector<8x256xf32> -> vector<8x256xf32>
    %395 = arith.addf %394, %8 : vector<8x256xf32>
    %396 = arith.mulf %393, %393 : vector<8x256xf32>
    %cst_133 = arith.constant 1.000000e+00 : f32
    %397 = vector.broadcast %cst_133 : f32 to vector<8x256xf32>
    %398 = arith.subf %397, %396 : vector<8x256xf32>
    %399 = arith.mulf %398, %11 : vector<8x256xf32>
    %cst_134 = arith.constant dense<0.000000e+00> : vector<8xf32>
    %400 = vector.multi_reduction <add>, %399, %cst_134 [1] : vector<8x256xf32> to vector<8xf32>
    %401 = vector.shape_cast %400 : vector<8xf32> to vector<8x1xf32>
    %cst_135 = arith.constant 6.250000e-02 : f32
    %402 = vector.broadcast %cst_135 : f32 to vector<8x256xf32>
    %403 = arith.mulf %402, %395 : vector<8x256xf32>
    %404 = arith.addf %362, %403 : vector<8x256xf32>
    %405 = math.tanh %404 : vector<8x256xf32>
    %cst_136 = arith.constant dense<0.000000e+00> : vector<8x256xf32>
    %406 = tpu.matmul %405, %2, %cst_136 {dimension_numbers = #tpu.dot_dimension_numbers<[1], [0], [0], [1], [0, 0, 1, 1], [], []>} : vector<8x256xf32>, vector<256x256xf32>, vector<8x256xf32> -> vector<8x256xf32>
    %407 = arith.addf %406, %8 : vector<8x256xf32>
    %408 = arith.mulf %405, %405 : vector<8x256xf32>
    %cst_137 = arith.constant 1.000000e+00 : f32
    %409 = vector.broadcast %cst_137 : f32 to vector<8x256xf32>
    %410 = arith.subf %409, %408 : vector<8x256xf32>
    %411 = arith.mulf %410, %11 : vector<8x256xf32>
    %cst_138 = arith.constant dense<0.000000e+00> : vector<8xf32>
    %412 = vector.multi_reduction <add>, %411, %cst_138 [1] : vector<8x256xf32> to vector<8xf32>
    %413 = vector.shape_cast %412 : vector<8xf32> to vector<8x1xf32>
    %cst_139 = arith.constant 1.250000e-01 : f32
    %414 = vector.broadcast %cst_139 : f32 to vector<8x256xf32>
    %415 = arith.mulf %414, %407 : vector<8x256xf32>
    %416 = arith.addf %362, %415 : vector<8x256xf32>
    %417 = math.tanh %416 : vector<8x256xf32>
    %cst_140 = arith.constant dense<0.000000e+00> : vector<8x256xf32>
    %418 = tpu.matmul %417, %2, %cst_140 {dimension_numbers = #tpu.dot_dimension_numbers<[1], [0], [0], [1], [0, 0, 1, 1], [], []>} : vector<8x256xf32>, vector<256x256xf32>, vector<8x256xf32> -> vector<8x256xf32>
    %419 = arith.addf %418, %8 : vector<8x256xf32>
    %420 = arith.mulf %417, %417 : vector<8x256xf32>
    %cst_141 = arith.constant 1.000000e+00 : f32
    %421 = vector.broadcast %cst_141 : f32 to vector<8x256xf32>
    %422 = arith.subf %421, %420 : vector<8x256xf32>
    %423 = arith.mulf %422, %11 : vector<8x256xf32>
    %cst_142 = arith.constant dense<0.000000e+00> : vector<8xf32>
    %424 = vector.multi_reduction <add>, %423, %cst_142 [1] : vector<8x256xf32> to vector<8xf32>
    %425 = vector.shape_cast %424 : vector<8xf32> to vector<8x1xf32>
    %cst_143 = arith.constant 2.000000e+00 : f32
    %426 = vector.broadcast %cst_143 : f32 to vector<8x256xf32>
    %427 = arith.mulf %426, %395 : vector<8x256xf32>
    %428 = arith.addf %383, %427 : vector<8x256xf32>
    %cst_144 = arith.constant 2.000000e+00 : f32
    %429 = vector.broadcast %cst_144 : f32 to vector<8x256xf32>
    %430 = arith.mulf %429, %407 : vector<8x256xf32>
    %431 = arith.addf %428, %430 : vector<8x256xf32>
    %432 = arith.addf %431, %419 : vector<8x256xf32>
    %cst_145 = arith.constant 0.020833334 : f32
    %433 = vector.broadcast %cst_145 : f32 to vector<8x256xf32>
    %434 = arith.mulf %433, %432 : vector<8x256xf32>
    %435 = arith.addf %362, %434 : vector<8x256xf32>
    %cst_146 = arith.constant 2.000000e+00 : f32
    %436 = vector.broadcast %cst_146 : f32 to vector<8x256xf32>
    %437 = arith.mulf %436, %393 : vector<8x256xf32>
    %438 = arith.addf %381, %437 : vector<8x256xf32>
    %cst_147 = arith.constant 2.000000e+00 : f32
    %439 = vector.broadcast %cst_147 : f32 to vector<8x256xf32>
    %440 = arith.mulf %439, %405 : vector<8x256xf32>
    %441 = arith.addf %438, %440 : vector<8x256xf32>
    %442 = arith.addf %441, %417 : vector<8x256xf32>
    %443 = arith.addf %370, %442 : vector<8x256xf32>
    %cst_148 = arith.constant 2.000000e+00 : f32
    %444 = vector.broadcast %cst_148 : f32 to vector<8x1xf32>
    %445 = arith.mulf %444, %401 : vector<8x1xf32>
    %446 = arith.addf %389, %445 : vector<8x1xf32>
    %cst_149 = arith.constant 2.000000e+00 : f32
    %447 = vector.broadcast %cst_149 : f32 to vector<8x1xf32>
    %448 = arith.mulf %447, %413 : vector<8x1xf32>
    %449 = arith.addf %446, %448 : vector<8x1xf32>
    %450 = arith.addf %449, %425 : vector<8x1xf32>
    %cst_150 = arith.constant 0.020833334 : f32
    %451 = vector.broadcast %cst_150 : f32 to vector<8x1xf32>
    %452 = arith.mulf %451, %450 : vector<8x1xf32>
    %453 = arith.addf %380, %452 : vector<8x1xf32>
    %c6_i32 = arith.constant 6 : i32
    %454 = math.tanh %435 : vector<8x256xf32>
    %cst_151 = arith.constant dense<0.000000e+00> : vector<8x256xf32>
    %455 = tpu.matmul %454, %2, %cst_151 {dimension_numbers = #tpu.dot_dimension_numbers<[1], [0], [0], [1], [0, 0, 1, 1], [], []>} : vector<8x256xf32>, vector<256x256xf32>, vector<8x256xf32> -> vector<8x256xf32>
    %456 = arith.addf %455, %8 : vector<8x256xf32>
    %457 = arith.mulf %454, %454 : vector<8x256xf32>
    %cst_152 = arith.constant 1.000000e+00 : f32
    %458 = vector.broadcast %cst_152 : f32 to vector<8x256xf32>
    %459 = arith.subf %458, %457 : vector<8x256xf32>
    %460 = arith.mulf %459, %11 : vector<8x256xf32>
    %cst_153 = arith.constant dense<0.000000e+00> : vector<8xf32>
    %461 = vector.multi_reduction <add>, %460, %cst_153 [1] : vector<8x256xf32> to vector<8xf32>
    %462 = vector.shape_cast %461 : vector<8xf32> to vector<8x1xf32>
    %cst_154 = arith.constant 6.250000e-02 : f32
    %463 = vector.broadcast %cst_154 : f32 to vector<8x256xf32>
    %464 = arith.mulf %463, %456 : vector<8x256xf32>
    %465 = arith.addf %435, %464 : vector<8x256xf32>
    %466 = math.tanh %465 : vector<8x256xf32>
    %cst_155 = arith.constant dense<0.000000e+00> : vector<8x256xf32>
    %467 = tpu.matmul %466, %2, %cst_155 {dimension_numbers = #tpu.dot_dimension_numbers<[1], [0], [0], [1], [0, 0, 1, 1], [], []>} : vector<8x256xf32>, vector<256x256xf32>, vector<8x256xf32> -> vector<8x256xf32>
    %468 = arith.addf %467, %8 : vector<8x256xf32>
    %469 = arith.mulf %466, %466 : vector<8x256xf32>
    %cst_156 = arith.constant 1.000000e+00 : f32
    %470 = vector.broadcast %cst_156 : f32 to vector<8x256xf32>
    %471 = arith.subf %470, %469 : vector<8x256xf32>
    %472 = arith.mulf %471, %11 : vector<8x256xf32>
    %cst_157 = arith.constant dense<0.000000e+00> : vector<8xf32>
    %473 = vector.multi_reduction <add>, %472, %cst_157 [1] : vector<8x256xf32> to vector<8xf32>
    %474 = vector.shape_cast %473 : vector<8xf32> to vector<8x1xf32>
    %cst_158 = arith.constant 6.250000e-02 : f32
    %475 = vector.broadcast %cst_158 : f32 to vector<8x256xf32>
    %476 = arith.mulf %475, %468 : vector<8x256xf32>
    %477 = arith.addf %435, %476 : vector<8x256xf32>
    %478 = math.tanh %477 : vector<8x256xf32>
    %cst_159 = arith.constant dense<0.000000e+00> : vector<8x256xf32>
    %479 = tpu.matmul %478, %2, %cst_159 {dimension_numbers = #tpu.dot_dimension_numbers<[1], [0], [0], [1], [0, 0, 1, 1], [], []>} : vector<8x256xf32>, vector<256x256xf32>, vector<8x256xf32> -> vector<8x256xf32>
    %480 = arith.addf %479, %8 : vector<8x256xf32>
    %481 = arith.mulf %478, %478 : vector<8x256xf32>
    %cst_160 = arith.constant 1.000000e+00 : f32
    %482 = vector.broadcast %cst_160 : f32 to vector<8x256xf32>
    %483 = arith.subf %482, %481 : vector<8x256xf32>
    %484 = arith.mulf %483, %11 : vector<8x256xf32>
    %cst_161 = arith.constant dense<0.000000e+00> : vector<8xf32>
    %485 = vector.multi_reduction <add>, %484, %cst_161 [1] : vector<8x256xf32> to vector<8xf32>
    %486 = vector.shape_cast %485 : vector<8xf32> to vector<8x1xf32>
    %cst_162 = arith.constant 1.250000e-01 : f32
    %487 = vector.broadcast %cst_162 : f32 to vector<8x256xf32>
    %488 = arith.mulf %487, %480 : vector<8x256xf32>
    %489 = arith.addf %435, %488 : vector<8x256xf32>
    %490 = math.tanh %489 : vector<8x256xf32>
    %cst_163 = arith.constant dense<0.000000e+00> : vector<8x256xf32>
    %491 = tpu.matmul %490, %2, %cst_163 {dimension_numbers = #tpu.dot_dimension_numbers<[1], [0], [0], [1], [0, 0, 1, 1], [], []>} : vector<8x256xf32>, vector<256x256xf32>, vector<8x256xf32> -> vector<8x256xf32>
    %492 = arith.addf %491, %8 : vector<8x256xf32>
    %493 = arith.mulf %490, %490 : vector<8x256xf32>
    %cst_164 = arith.constant 1.000000e+00 : f32
    %494 = vector.broadcast %cst_164 : f32 to vector<8x256xf32>
    %495 = arith.subf %494, %493 : vector<8x256xf32>
    %496 = arith.mulf %495, %11 : vector<8x256xf32>
    %cst_165 = arith.constant dense<0.000000e+00> : vector<8xf32>
    %497 = vector.multi_reduction <add>, %496, %cst_165 [1] : vector<8x256xf32> to vector<8xf32>
    %498 = vector.shape_cast %497 : vector<8xf32> to vector<8x1xf32>
    %cst_166 = arith.constant 2.000000e+00 : f32
    %499 = vector.broadcast %cst_166 : f32 to vector<8x256xf32>
    %500 = arith.mulf %499, %468 : vector<8x256xf32>
    %501 = arith.addf %456, %500 : vector<8x256xf32>
    %cst_167 = arith.constant 2.000000e+00 : f32
    %502 = vector.broadcast %cst_167 : f32 to vector<8x256xf32>
    %503 = arith.mulf %502, %480 : vector<8x256xf32>
    %504 = arith.addf %501, %503 : vector<8x256xf32>
    %505 = arith.addf %504, %492 : vector<8x256xf32>
    %cst_168 = arith.constant 0.020833334 : f32
    %506 = vector.broadcast %cst_168 : f32 to vector<8x256xf32>
    %507 = arith.mulf %506, %505 : vector<8x256xf32>
    %508 = arith.addf %435, %507 : vector<8x256xf32>
    %cst_169 = arith.constant 2.000000e+00 : f32
    %509 = vector.broadcast %cst_169 : f32 to vector<8x256xf32>
    %510 = arith.mulf %509, %466 : vector<8x256xf32>
    %511 = arith.addf %454, %510 : vector<8x256xf32>
    %cst_170 = arith.constant 2.000000e+00 : f32
    %512 = vector.broadcast %cst_170 : f32 to vector<8x256xf32>
    %513 = arith.mulf %512, %478 : vector<8x256xf32>
    %514 = arith.addf %511, %513 : vector<8x256xf32>
    %515 = arith.addf %514, %490 : vector<8x256xf32>
    %516 = arith.addf %443, %515 : vector<8x256xf32>
    %cst_171 = arith.constant 2.000000e+00 : f32
    %517 = vector.broadcast %cst_171 : f32 to vector<8x1xf32>
    %518 = arith.mulf %517, %474 : vector<8x1xf32>
    %519 = arith.addf %462, %518 : vector<8x1xf32>
    %cst_172 = arith.constant 2.000000e+00 : f32
    %520 = vector.broadcast %cst_172 : f32 to vector<8x1xf32>
    %521 = arith.mulf %520, %486 : vector<8x1xf32>
    %522 = arith.addf %519, %521 : vector<8x1xf32>
    %523 = arith.addf %522, %498 : vector<8x1xf32>
    %cst_173 = arith.constant 0.020833334 : f32
    %524 = vector.broadcast %cst_173 : f32 to vector<8x1xf32>
    %525 = arith.mulf %524, %523 : vector<8x1xf32>
    %526 = arith.addf %453, %525 : vector<8x1xf32>
    %c7_i32 = arith.constant 7 : i32
    %527 = math.tanh %508 : vector<8x256xf32>
    %cst_174 = arith.constant dense<0.000000e+00> : vector<8x256xf32>
    %528 = tpu.matmul %527, %2, %cst_174 {dimension_numbers = #tpu.dot_dimension_numbers<[1], [0], [0], [1], [0, 0, 1, 1], [], []>} : vector<8x256xf32>, vector<256x256xf32>, vector<8x256xf32> -> vector<8x256xf32>
    %529 = arith.addf %528, %8 : vector<8x256xf32>
    %530 = arith.mulf %527, %527 : vector<8x256xf32>
    %cst_175 = arith.constant 1.000000e+00 : f32
    %531 = vector.broadcast %cst_175 : f32 to vector<8x256xf32>
    %532 = arith.subf %531, %530 : vector<8x256xf32>
    %533 = arith.mulf %532, %11 : vector<8x256xf32>
    %cst_176 = arith.constant dense<0.000000e+00> : vector<8xf32>
    %534 = vector.multi_reduction <add>, %533, %cst_176 [1] : vector<8x256xf32> to vector<8xf32>
    %535 = vector.shape_cast %534 : vector<8xf32> to vector<8x1xf32>
    %cst_177 = arith.constant 6.250000e-02 : f32
    %536 = vector.broadcast %cst_177 : f32 to vector<8x256xf32>
    %537 = arith.mulf %536, %529 : vector<8x256xf32>
    %538 = arith.addf %508, %537 : vector<8x256xf32>
    %539 = math.tanh %538 : vector<8x256xf32>
    %cst_178 = arith.constant dense<0.000000e+00> : vector<8x256xf32>
    %540 = tpu.matmul %539, %2, %cst_178 {dimension_numbers = #tpu.dot_dimension_numbers<[1], [0], [0], [1], [0, 0, 1, 1], [], []>} : vector<8x256xf32>, vector<256x256xf32>, vector<8x256xf32> -> vector<8x256xf32>
    %541 = arith.addf %540, %8 : vector<8x256xf32>
    %542 = arith.mulf %539, %539 : vector<8x256xf32>
    %cst_179 = arith.constant 1.000000e+00 : f32
    %543 = vector.broadcast %cst_179 : f32 to vector<8x256xf32>
    %544 = arith.subf %543, %542 : vector<8x256xf32>
    %545 = arith.mulf %544, %11 : vector<8x256xf32>
    %cst_180 = arith.constant dense<0.000000e+00> : vector<8xf32>
    %546 = vector.multi_reduction <add>, %545, %cst_180 [1] : vector<8x256xf32> to vector<8xf32>
    %547 = vector.shape_cast %546 : vector<8xf32> to vector<8x1xf32>
    %cst_181 = arith.constant 6.250000e-02 : f32
    %548 = vector.broadcast %cst_181 : f32 to vector<8x256xf32>
    %549 = arith.mulf %548, %541 : vector<8x256xf32>
    %550 = arith.addf %508, %549 : vector<8x256xf32>
    %551 = math.tanh %550 : vector<8x256xf32>
    %cst_182 = arith.constant dense<0.000000e+00> : vector<8x256xf32>
    %552 = tpu.matmul %551, %2, %cst_182 {dimension_numbers = #tpu.dot_dimension_numbers<[1], [0], [0], [1], [0, 0, 1, 1], [], []>} : vector<8x256xf32>, vector<256x256xf32>, vector<8x256xf32> -> vector<8x256xf32>
    %553 = arith.addf %552, %8 : vector<8x256xf32>
    %554 = arith.mulf %551, %551 : vector<8x256xf32>
    %cst_183 = arith.constant 1.000000e+00 : f32
    %555 = vector.broadcast %cst_183 : f32 to vector<8x256xf32>
    %556 = arith.subf %555, %554 : vector<8x256xf32>
    %557 = arith.mulf %556, %11 : vector<8x256xf32>
    %cst_184 = arith.constant dense<0.000000e+00> : vector<8xf32>
    %558 = vector.multi_reduction <add>, %557, %cst_184 [1] : vector<8x256xf32> to vector<8xf32>
    %559 = vector.shape_cast %558 : vector<8xf32> to vector<8x1xf32>
    %cst_185 = arith.constant 1.250000e-01 : f32
    %560 = vector.broadcast %cst_185 : f32 to vector<8x256xf32>
    %561 = arith.mulf %560, %553 : vector<8x256xf32>
    %562 = arith.addf %508, %561 : vector<8x256xf32>
    %563 = math.tanh %562 : vector<8x256xf32>
    %cst_186 = arith.constant dense<0.000000e+00> : vector<8x256xf32>
    %564 = tpu.matmul %563, %2, %cst_186 {dimension_numbers = #tpu.dot_dimension_numbers<[1], [0], [0], [1], [0, 0, 1, 1], [], []>} : vector<8x256xf32>, vector<256x256xf32>, vector<8x256xf32> -> vector<8x256xf32>
    %565 = arith.addf %564, %8 : vector<8x256xf32>
    %566 = arith.mulf %563, %563 : vector<8x256xf32>
    %cst_187 = arith.constant 1.000000e+00 : f32
    %567 = vector.broadcast %cst_187 : f32 to vector<8x256xf32>
    %568 = arith.subf %567, %566 : vector<8x256xf32>
    %569 = arith.mulf %568, %11 : vector<8x256xf32>
    %cst_188 = arith.constant dense<0.000000e+00> : vector<8xf32>
    %570 = vector.multi_reduction <add>, %569, %cst_188 [1] : vector<8x256xf32> to vector<8xf32>
    %571 = vector.shape_cast %570 : vector<8xf32> to vector<8x1xf32>
    %cst_189 = arith.constant 2.000000e+00 : f32
    %572 = vector.broadcast %cst_189 : f32 to vector<8x256xf32>
    %573 = arith.mulf %572, %541 : vector<8x256xf32>
    %574 = arith.addf %529, %573 : vector<8x256xf32>
    %cst_190 = arith.constant 2.000000e+00 : f32
    %575 = vector.broadcast %cst_190 : f32 to vector<8x256xf32>
    %576 = arith.mulf %575, %553 : vector<8x256xf32>
    %577 = arith.addf %574, %576 : vector<8x256xf32>
    %578 = arith.addf %577, %565 : vector<8x256xf32>
    %cst_191 = arith.constant 0.020833334 : f32
    %579 = vector.broadcast %cst_191 : f32 to vector<8x256xf32>
    %580 = arith.mulf %579, %578 : vector<8x256xf32>
    %581 = arith.addf %508, %580 : vector<8x256xf32>
    %cst_192 = arith.constant 2.000000e+00 : f32
    %582 = vector.broadcast %cst_192 : f32 to vector<8x256xf32>
    %583 = arith.mulf %582, %539 : vector<8x256xf32>
    %584 = arith.addf %527, %583 : vector<8x256xf32>
    %cst_193 = arith.constant 2.000000e+00 : f32
    %585 = vector.broadcast %cst_193 : f32 to vector<8x256xf32>
    %586 = arith.mulf %585, %551 : vector<8x256xf32>
    %587 = arith.addf %584, %586 : vector<8x256xf32>
    %588 = arith.addf %587, %563 : vector<8x256xf32>
    %589 = arith.addf %516, %588 : vector<8x256xf32>
    %cst_194 = arith.constant 2.000000e+00 : f32
    %590 = vector.broadcast %cst_194 : f32 to vector<8x1xf32>
    %591 = arith.mulf %590, %547 : vector<8x1xf32>
    %592 = arith.addf %535, %591 : vector<8x1xf32>
    %cst_195 = arith.constant 2.000000e+00 : f32
    %593 = vector.broadcast %cst_195 : f32 to vector<8x1xf32>
    %594 = arith.mulf %593, %559 : vector<8x1xf32>
    %595 = arith.addf %592, %594 : vector<8x1xf32>
    %596 = arith.addf %595, %571 : vector<8x1xf32>
    %cst_196 = arith.constant 0.020833334 : f32
    %597 = vector.broadcast %cst_196 : f32 to vector<8x1xf32>
    %598 = arith.mulf %597, %596 : vector<8x1xf32>
    %599 = arith.addf %526, %598 : vector<8x1xf32>
    tpu.wait_dma2 semaphore(%arg12 : memref<!tpu.dma_semaphore, #tpu.memory_space<semaphore_mem>>) src(%arg8 : memref<256x1024xf32, #tpu.memory_space<any>>) dst(%arg11 : memref<256x1024xf32, #tpu.memory_space<vmem>>)
    %c0_197 = arith.constant 0 : index
    %c0_198 = arith.constant 0 : index
    %600 = vector.load %arg7[%c0_197, %c0_198] : memref<1x1024xf32, #tpu.memory_space<vmem>>, vector<1x1024xf32>
    %601 = vector.shape_cast %600 : vector<1x1024xf32> to vector<1x1024xf32>
    %602 = vector.broadcast %601 : vector<1x1024xf32> to vector<8x1024xf32>
    %c0_199 = arith.constant 0 : index
    %c0_200 = arith.constant 0 : index
    %603 = vector.load %arg11[%c0_199, %c0_200] : memref<256x1024xf32, #tpu.memory_space<vmem>>, vector<256x1024xf32>
    %cst_201 = arith.constant dense<0.000000e+00> : vector<8x1024xf32>
    %604 = tpu.matmul %589, %603, %cst_201 {dimension_numbers = #tpu.dot_dimension_numbers<[1], [0], [0], [1], [0, 0, 1, 1], [], []>} : vector<8x256xf32>, vector<256x1024xf32>, vector<8x1024xf32> -> vector<8x1024xf32>
    %cst_202 = arith.constant 0.020833334 : f32
    %605 = vector.broadcast %cst_202 : f32 to vector<8x1024xf32>
    %606 = arith.mulf %605, %604 : vector<8x1024xf32>
    %607 = arith.addf %0, %606 : vector<8x1024xf32>
    %cst_203 = arith.constant 1.000000e+00 : f32
    %608 = vector.broadcast %cst_203 : f32 to vector<8x1024xf32>
    %609 = arith.mulf %608, %602 : vector<8x1024xf32>
    %610 = arith.addf %607, %609 : vector<8x1024xf32>
    %c0_204 = arith.constant 0 : index
    %c0_205 = arith.constant 0 : index
    %611 = vector.load %arg9[%c0_204, %c0_205] : memref<8x1024xf32, #tpu.memory_space<vmem>>, vector<8x1024xf32>
    tpu.vector_store %arg9[%c0_204, %c0_205], %610 {strides = array<i32>} : memref<8x1024xf32, #tpu.memory_space<vmem>>, vector<8x1024xf32>,
    %c0_206 = arith.constant 0 : index
    %c0_207 = arith.constant 0 : index
    %612 = vector.load %arg10[%c0_206, %c0_207] : memref<8x1xf32, #tpu.memory_space<vmem>>, vector<8x1xf32>
    tpu.vector_store %arg10[%c0_206, %c0_207], %599 {strides = array<i32>} : memref<8x1xf32, #tpu.memory_space<vmem>>, vector<8x1xf32>,
    return
  }
  func.func @transform_0(%arg0: i32) -> (i32, i32) {
    %c0_i32 = arith.constant 0 : i32
    %c0_i32_0 = arith.constant 0 : i32
    return %arg0, %c0_i32 : i32, i32
  }
  func.func @transform_1(%arg0: i32) -> (i32, i32) {
    %c0_i32 = arith.constant 0 : i32
    %c0_i32_0 = arith.constant 0 : i32
    %c0_i32_1 = arith.constant 0 : i32
    return %c0_i32, %c0_i32_0 : i32, i32
  }
  func.func @transform_2(%arg0: i32) -> (i32, i32) {
    %c0_i32 = arith.constant 0 : i32
    %c0_i32_0 = arith.constant 0 : i32
    %c0_i32_1 = arith.constant 0 : i32
    return %c0_i32, %c0_i32_0 : i32, i32
  }
  func.func @transform_3(%arg0: i32) -> (i32, i32) {
    %c0_i32 = arith.constant 0 : i32
    %c0_i32_0 = arith.constant 0 : i32
    %c0_i32_1 = arith.constant 0 : i32
    return %c0_i32, %c0_i32_0 : i32, i32
  }
  func.func @transform_4(%arg0: i32) -> (i32, i32) {
    %c0_i32 = arith.constant 0 : i32
    %c0_i32_0 = arith.constant 0 : i32
    %c0_i32_1 = arith.constant 0 : i32
    return %c0_i32, %c0_i32_0 : i32, i32
  }
  func.func @transform_5(%arg0: i32) -> (i32, i32) {
    %c0_i32 = arith.constant 0 : i32
    %c0_i32_0 = arith.constant 0 : i32
    %c0_i32_1 = arith.constant 0 : i32
    return %c0_i32, %c0_i32_0 : i32, i32
  }
  func.func @transform_6(%arg0: i32) -> (i32, i32) {
    %c0_i32 = arith.constant 0 : i32
    %c0_i32_0 = arith.constant 0 : i32
    %c0_i32_1 = arith.constant 0 : i32
    return %c0_i32, %c0_i32_0 : i32, i32
  }
  func.func @transform_8(%arg0: i32) -> (i32, i32) {
    %c0_i32 = arith.constant 0 : i32
    %c0_i32_0 = arith.constant 0 : i32
    return %arg0, %c0_i32 : i32, i32
  }
  func.func @transform_9(%arg0: i32) -> (i32, i32) {
    %c0_i32 = arith.constant 0 : i32
    %c0_i32_0 = arith.constant 0 : i32
    return %arg0, %c0_i32 : i32, i32
  }
}

</mosaic_0001>

<llo_original>
// kernel: tpu_custom_call.1
$region0: #{tpu_custom_call.1}
  #allocation0 [shape = 'u32[]', space=smem, size = 0x4, offset = 0x4, fixed_abs, tag = 'smem constant byte address 0x4 - core index']
  #allocation1 [shape = 'u32[144,128]{1,0:T(1,128)}', space=vmem, size = 0x12000, scoped, tag = 'internal scratch']
  #allocation2 [shape = 'f32[256,1024]{1,0:T(8,128)}', space=vmem, size = 0x100000, scoped, tag = 'scratch operand']
  #allocation3 [shape = 's32[1]{0}', space=sflag, size = 0x4, scoped, tag = 'scratch operand']
  #allocation11 [shape = 's32[]', space=sflag, size = 0x4, offset = 0, fixed_abs, tag = 'sflag constant byte address 0x0 - dummy sync flag']
  #allocation12 [shape = 's32[]', space=sflag, size = 0x4, offset = 0, fixed_abs, tag = 'sflag constant byte address 0x0 - dummy sync flag']
  #allocation13 [shape = 'u32[]', space=smem, size = 0x4, offset = 0x44, fixed_abs, tag = 'smem constant byte address 0x44 - assertion arg 0']
  #allocation14 [shape = 'u32[]', space=smem, size = 0x4, offset = 0x48, fixed_abs, tag = 'smem constant byte address 0x48 - assertion arg 1']
  %s0 = inlined_call_operand.hbm [shape: f32[8,1024], index: 0, kind: input, shape index: {}]
  %s1 = inlined_call_operand.hbm [shape: f32[1024,256], index: 1, kind: input, shape index: {}]
  %s2 = inlined_call_operand.hbm [shape: f32[256,256], index: 2, kind: input, shape index: {}]
  %s3 = inlined_call_operand.vmem [shape: f32[1,256], index: 3, kind: input, shape index: {}]
  %s4 = inlined_call_operand.vmem [shape: f32[1,256], index: 4, kind: input, shape index: {}]
  %s5 = inlined_call_operand.vmem [shape: f32[1,256], index: 5, kind: input, shape index: {}]
  %s6 = inlined_call_operand.vmem [shape: f32[1,1024], index: 6, kind: input, shape index: {}]
  %s7 = inlined_call_operand.hbm [shape: f32[256,1024], index: 7, kind: input, shape index: {}]
  %s8 = inlined_call_operand.hbm [shape: f32[8,1024], index: 8, kind: output, shape index: {0}]
  %s9 = inlined_call_operand.vmem [shape: f32[8,1], index: 9, kind: output, shape index: {1}]
  %10 = xla_tuple %s8, %s9
  %s11 = sld [smem:[#allocation0]]
  $region62: #{tpu_custom_call.1} parent=0
    _
  %s13 = ssub.s32 1, %s11
  %s14 = scalar_select 0, %s13, %s11
  $region1: #{tpu_custom_call.1} parent=0
    #allocation4 [shape = 'u8[32768]{0}', space=vmem, size = 0x8000, scoped, tag = 'input window, operand 0, single buffered']
    #allocation5 [shape = 's32[1]{0}', space=sflag, size = 0x4, scoped, tag = 'scoped memory for tpu_custom_call.1']
    #allocation6 [shape = 's32[1]{0}', space=sflag, size = 0x4, scoped, tag = 'scoped memory for tpu_custom_call.1']
    #allocation7 [shape = 'u8[1048576]{0}', space=vmem, size = 0x100000, scoped, tag = 'input window, operand 1, single buffered']
    #allocation8 [shape = 's32[1]{0}', space=sflag, size = 0x4, scoped, tag = 'scoped memory for tpu_custom_call.1']
    #allocation9 [shape = 'u8[262144]{0}', space=vmem, size = 0x40000, scoped, tag = 'input window, operand 2, single buffered']
    #allocation10 [shape = 'u8[32768]{0}', space=vmem, size = 0x8000, scoped, tag = 'output window, operand 0, single buffered']
    %15 = vsyncpa [#allocation5], 0
    %16 = vsyncpa [#allocation8], 0
    %17 = vsyncpa [#allocation6], 0
    // Predicated region
    $region2: #{tpu_custom_call.1} parent=1 // pred_check
      _
    $region3: #{tpu_custom_call.1} parent=1 // pred_check_branch
      %19 = sbr.rel (0) target = $region5
    $region4: #{tpu_custom_call.1} parent=1 // pred_region
      %s21 = ssub.s32 1024, 1024
      %22 = vsyncadd [#allocation5], %s21
      %s24 = sshll.u32 [#allocation4], 4
      %s25 = int_to_ptr.vmem [resolvable:$true] %s24
      %27 = dma.hbm_to_vmem [thread:$0]  %s0, 1024, %s25, [#allocation5]
    $region5: #{tpu_custom_call.1} parent=1 // pred_fallthru
      _
    // Predicated region
    $region6: #{tpu_custom_call.1} parent=1 // pred_check
      _
    $region7: #{tpu_custom_call.1} parent=1 // pred_check_branch
      %29 = sbr.rel (0) target = $region9
    $region8: #{tpu_custom_call.1} parent=1 // pred_region
      %s31 = ssub.s32 32768, 32768
      %32 = vsyncadd [#allocation8], %s31
      %s33 = sshll.u32 [#allocation7], 4
      %s34 = int_to_ptr.vmem [resolvable:$true] %s33
      %39 = dma.hbm_to_vmem [thread:$0]  %s1, 32768, %s34, [#allocation8], 256, 256, 16
    $region9: #{tpu_custom_call.1} parent=1 // pred_fallthru
      _
    // Predicated region
    $region10: #{tpu_custom_call.1} parent=1 // pred_check
      _
    $region11: #{tpu_custom_call.1} parent=1 // pred_check_branch
      %41 = sbr.rel (0) target = $region13
    $region12: #{tpu_custom_call.1} parent=1 // pred_region
      %s43 = ssub.s32 8192, 8192
      %44 = vsyncadd [#allocation8], %s43
      %s45 = sshll.u32 [#allocation9], 4
      %s46 = int_to_ptr.vmem [resolvable:$true] %s45
      %51 = dma.hbm_to_vmem [thread:$0]  %s2, 8192, %s46, [#allocation8], 256, 256, 16
    $region13: #{tpu_custom_call.1} parent=1 // pred_fallthru
      _
    // Predicated region
    $region14: #{tpu_custom_call.1} parent=1 // pred_check
      _
    $region15: #{tpu_custom_call.1} parent=1 // pred_check_branch
      %53 = sbr.rel (0) target = $region17
    $region16: #{tpu_custom_call.1} parent=1 // pred_region
      _
    $region17: #{tpu_custom_call.1} parent=1 // pred_fallthru
      _
    // Predicated region
    $region18: #{tpu_custom_call.1} parent=1 // pred_check
      _
    $region19: #{tpu_custom_call.1} parent=1 // pred_check_branch
      %55 = sbr.rel (0) target = $region21
    $region20: #{tpu_custom_call.1} parent=1 // pred_region
      _
    $region21: #{tpu_custom_call.1} parent=1 // pred_fallthru
      _
    // Predicated region
    $region22: #{tpu_custom_call.1} parent=1 // pred_check
      _
    $region23: #{tpu_custom_call.1} parent=1 // pred_check_branch
      %57 = sbr.rel (0) target = $region25
    $region24: #{tpu_custom_call.1} parent=1 // pred_region
      _
    $region25: #{tpu_custom_call.1} parent=1 // pred_fallthru
      _
    // Predicated region
    $region26: #{tpu_custom_call.1} parent=1 // pred_check
      _
    $region27: #{tpu_custom_call.1} parent=1 // pred_check_branch
      %59 = sbr.rel (0) target = $region29
    $region28: #{tpu_custom_call.1} parent=1 // pred_region
      _
    $region29: #{tpu_custom_call.1} parent=1 // pred_fallthru
      _
    // Predicated region
    $region30: #{tpu_custom_call.1} parent=1 // pred_check
      _
    $region31: #{tpu_custom_call.1} parent=1 // pred_check_branch
      %61 = sbr.rel (0) target = $region33
    $region32: #{tpu_custom_call.1} parent=1 // pred_region
      %62 = dma.done [#allocation5], 1024
    $region33: #{tpu_custom_call.1} parent=1 // pred_fallthru
      _
    // Predicated region
    $region34: #{tpu_custom_call.1} parent=1 // pred_check
      _
    $region35: #{tpu_custom_call.1} parent=1 // pred_check_branch
      %64 = sbr.rel (0) target = $region37
    $region36: #{tpu_custom_call.1} parent=1 // pred_region
      %65 = dma.done [#allocation8], 32768
    $region37: #{tpu_custom_call.1} parent=1 // pred_fallthru
      _
    // Predicated region
    $region38: #{tpu_custom_call.1} parent=1 // pred_check
      _
    $region39: #{tpu_custom_call.1} parent=1 // pred_check_branch
      %67 = sbr.rel (0) target = $region41
    $region40: #{tpu_custom_call.1} parent=1 // pred_region
      %68 = dma.done [#allocation8], 8192
    $region41: #{tpu_custom_call.1} parent=1 // pred_fallthru
      _
    // Predicated region
    $region42: #{tpu_custom_call.1} parent=1 // pred_check
      _
    $region43: #{tpu_custom_call.1} parent=1 // pred_check_branch
      %70 = sbr.rel target = $region45
    $region44: #{tpu_custom_call.1} parent=1 // pred_region
      %71 = sst [smem:[#allocation13]] [#allocation12]
      %72 = sst [smem:[#allocation14]] [#allocation11]
    $region45: #{tpu_custom_call.1} parent=1 // pred_fallthru
      _
    %74 = shalt.err (0)
    %s76 = sshll.u32 [#allocation2], 4
    %s77 = int_to_ptr.vmem [resolvable:$true] %s76
    %79 = dma.hbm_to_vmem [thread:$0]  %s7, 32768, %s77, [#allocation3]
    %v80 = vld [vmem:[#allocation4] sm:$0xff]
    %v81 = vld [vmem:[#allocation4 + $0x8] sm:$0xff]
    %v82 = vld [vmem:[#allocation4 + $0x10] sm:$0xff]
    %v83 = vld [vmem:[#allocation4 + $0x18] sm:$0xff]
    %v84 = vld [vmem:[#allocation4 + $0x20] sm:$0xff]
    %v85 = vld [vmem:[#allocation4 + $0x28] sm:$0xff]
    %v86 = vld [vmem:[#allocation4 + $0x30] sm:$0xff]
    %v87 = vld [vmem:[#allocation4 + $0x38] sm:$0xff]
    %v88 = vld [vmem:[#allocation7] sm:$0xff]
    %v89 = vld [vmem:[#allocation7 + $0x8] sm:$0xff]
    %v90 = vld [vmem:[#allocation7 + $0x10] sm:$0xff]
    %v91 = vld [vmem:[#allocation7 + $0x18] sm:$0xff]
    %v92 = vld [vmem:[#allocation7 + $0x20] sm:$0xff]
    %v93 = vld [vmem:[#allocation7 + $0x28] sm:$0xff]
    %v94 = vld [vmem:[#allocation7 + $0x30] sm:$0xff]
    %v95 = vld [vmem:[#allocation7 + $0x38] sm:$0xff]
    %v96 = vld [vmem:[#allocation7 + $0x40] sm:$0xff]
    %v97 = vld [vmem:[#allocation7 + $0x48] sm:$0xff]
    %v98 = vld [vmem:[#allocation7 + $0x50] sm:$0xff]
    %v99 = vld [vmem:[#allocation7 + $0x58] sm:$0xff]
    %v100 = vld [vmem:[#allocation7 + $0x60] sm:$0xff]
    %v101 = vld [vmem:[#allocation7 + $0x68] sm:$0xff]
    %v102 = vld [vmem:[#allocation7 + $0x70] sm:$0xff]
    %v103 = vld [vmem:[#allocation7 + $0x78] sm:$0xff]
    %v104 = vld [vmem:[#allocation7 + $0x80] sm:$0xff]
    %v105 = vld [vmem:[#allocation7 + $0x88] sm:$0xff]
    %v106 = vld [vmem:[#allocation7 + $0x90] sm:$0xff]
    %v107 = vld [vmem:[#allocation7 + $0x98] sm:$0xff]
    %v108 = vld [vmem:[#allocation7 + $0xa0] sm:$0xff]
    %v109 = vld [vmem:[#allocation7 + $0xa8] sm:$0xff]
    %v110 = vld [vmem:[#allocation7 + $0xb0] sm:$0xff]
    %v111 = vld [vmem:[#allocation7 + $0xb8] sm:$0xff]
    %v112 = vld [vmem:[#allocation7 + $0xc0] sm:$0xff]
    %v113 = vld [vmem:[#allocation7 + $0xc8] sm:$0xff]
    %v114 = vld [vmem:[#allocation7 + $0xd0] sm:$0xff]
    %v115 = vld [vmem:[#allocation7 + $0xd8] sm:$0xff]
    %v116 = vld [vmem:[#allocation7 + $0xe0] sm:$0xff]
    %v117 = vld [vmem:[#allocation7 + $0xe8] sm:$0xff]
    %v118 = vld [vmem:[#allocation7 + $0xf0] sm:$0xff]
    %v119 = vld [vmem:[#allocation7 + $0xf8] sm:$0xff]
    %v120 = vld [vmem:[#allocation7 + $0x100] sm:$0xff]
    %v121 = vld [vmem:[#allocation7 + $0x108] sm:$0xff]
    %v122 = vld [vmem:[#allocation7 + $0x110] sm:$0xff]
    %v123 = vld [vmem:[#allocation7 + $0x118] sm:$0xff]
    %v124 = vld [vmem:[#allocation7 + $0x120] sm:$0xff]
    %v125 = vld [vmem:[#allocation7 + $0x128] sm:$0xff]
    %v126 = vld [vmem:[#allocation7 + $0x130] sm:$0xff]
    %v127 = vld [vmem:[#allocation7 + $0x138] sm:$0xff]
    %v128 = vld [vmem:[#allocation7 + $0x140] sm:$0xff]
    %v129 = vld [vmem:[#allocation7 + $0x148] sm:$0xff]
    %v130 = vld [vmem:[#allocation7 + $0x150] sm:$0xff]
    %v131 = vld [vmem:[#allocation7 + $0x158] sm:$0xff]
    %v132 = vld [vmem:[#allocation7 + $0x160] sm:$0xff]
    %v133 = vld [vmem:[#allocation7 + $0x168] sm:$0xff]
    %v134 = vld [vmem:[#allocation7 + $0x170] sm:$0xff]
    %v135 = vld [vmem:[#allocation7 + $0x178] sm:$0xff]
    %v136 = vld [vmem:[#allocation7 + $0x180] sm:$0xff]
    %v137 = vld [vmem:[#allocation7 + $0x188] sm:$0xff]
    %v138 = vld [vmem:[#allocation7 + $0x190] sm:$0xff]
    %v139 = vld [vmem:[#allocation7 + $0x198] sm:$0xff]
    %v140 = vld [vmem:[#allocation7 + $0x1a0] sm:$0xff]
    %v141 = vld [vmem:[#allocation7 + $0x1a8] sm:$0xff]
    %v142 = vld [vmem:[#allocation7 + $0x1b0] sm:$0xff]
    %v143 = vld [vmem:[#allocation7 + $0x1b8] sm:$0xff]
    %v144 = vld [vmem:[#allocation7 + $0x1c0] sm:$0xff]
    %v145 = vld [vmem:[#allocation7 + $0x1c8] sm:$0xff]
    %v146 = vld [vmem:[#allocation7 + $0x1d0] sm:$0xff]
    %v147 = vld [vmem:[#allocation7 + $0x1d8] sm:$0xff]
    %v148 = vld [vmem:[#allocation7 + $0x1e0] sm:$0xff]
    %v149 = vld [vmem:[#allocation7 + $0x1e8] sm:$0xff]
    %v150 = vld [vmem:[#allocation7 + $0x1f0] sm:$0xff]
    %v151 = vld [vmem:[#allocation7 + $0x1f8] sm:$0xff]
    %v152 = vld [vmem:[#allocation7 + $0x200] sm:$0xff]
    %v153 = vld [vmem:[#allocation7 + $0x208] sm:$0xff]
    %v154 = vld [vmem:[#allocation7 + $0x210] sm:$0xff]
    %v155 = vld [vmem:[#allocation7 + $0x218] sm:$0xff]
    %v156 = vld [vmem:[#allocation7 + $0x220] sm:$0xff]
    %v157 = vld [vmem:[#allocation7 + $0x228] sm:$0xff]
    %v158 = vld [vmem:[#allocation7 + $0x230] sm:$0xff]
    %v159 = vld [vmem:[#allocation7 + $0x238] sm:$0xff]
    %v160 = vld [vmem:[#allocation7 + $0x240] sm:$0xff]
    %v161 = vld [vmem:[#allocation7 + $0x248] sm:$0xff]
    %v162 = vld [vmem:[#allocation7 + $0x250] sm:$0xff]
    %v163 = vld [vmem:[#allocation7 + $0x258] sm:$0xff]
    %v164 = vld [vmem:[#allocation7 + $0x260] sm:$0xff]
    %v165 = vld [vmem:[#allocation7 + $0x268] sm:$0xff]
    %v166 = vld [vmem:[#allocation7 + $0x270] sm:$0xff]
    %v167 = vld [vmem:[#allocation7 + $0x278] sm:$0xff]
    %v168 = vld [vmem:[#allocation7 + $0x280] sm:$0xff]
    %v169 = vld [vmem:[#allocation7 + $0x288] sm:$0xff]
    %v170 = vld [vmem:[#allocation7 + $0x290] sm:$0xff]
    %v171 = vld [vmem:[#allocation7 + $0x298] sm:$0xff]
    %v172 = vld [vmem:[#allocation7 + $0x2a0] sm:$0xff]
    %v173 = vld [vmem:[#allocation7 + $0x2a8] sm:$0xff]
    %v174 = vld [vmem:[#allocation7 + $0x2b0] sm:$0xff]
    %v175 = vld [vmem:[#allocation7 + $0x2b8] sm:$0xff]
    %v176 = vld [vmem:[#allocation7 + $0x2c0] sm:$0xff]
    %v177 = vld [vmem:[#allocation7 + $0x2c8] sm:$0xff]
    %v178 = vld [vmem:[#allocation7 + $0x2d0] sm:$0xff]
    %v179 = vld [vmem:[#allocation7 + $0x2d8] sm:$0xff]
    %v180 = vld [vmem:[#allocation7 + $0x2e0] sm:$0xff]
    %v181 = vld [vmem:[#allocation7 + $0x2e8] sm:$0xff]
    %v182 = vld [vmem:[#allocation7 + $0x2f0] sm:$0xff]
    %v183 = vld [vmem:[#allocation7 + $0x2f8] sm:$0xff]
    %v184 = vld [vmem:[#allocation7 + $0x300] sm:$0xff]
    %v185 = vld [vmem:[#allocation7 + $0x308] sm:$0xff]
    %v186 = vld [vmem:[#allocation7 + $0x310] sm:$0xff]
    %v187 = vld [vmem:[#allocation7 + $0x318] sm:$0xff]
    %v188 = vld [vmem:[#allocation7 + $0x320] sm:$0xff]
    %v189 = vld [vmem:[#allocation7 + $0x328] sm:$0xff]
    %v190 = vld [vmem:[#allocation7 + $0x330] sm:$0xff]
    %v191 = vld [vmem:[#allocation7 + $0x338] sm:$0xff]
    %v192 = vld [vmem:[#allocation7 + $0x340] sm:$0xff]
    %v193 = vld [vmem:[#allocation7 + $0x348] sm:$0xff]
    %v194 = vld [vmem:[#allocation7 + $0x350] sm:$0xff]
    %v195 = vld [vmem:[#allocation7 + $0x358] sm:$0xff]
    %v196 = vld [vmem:[#allocation7 + $0x360] sm:$0xff]
    %v197 = vld [vmem:[#allocation7 + $0x368] sm:$0xff]
    %v198 = vld [vmem:[#allocation7 + $0x370] sm:$0xff]
    %v199 = vld [vmem:[#allocation7 + $0x378] sm:$0xff]
    %v200 = vld [vmem:[#allocation7 + $0x380] sm:$0xff]
    %v201 = vld [vmem:[#allocation7 + $0x388] sm:$0xff]
    %v202 = vld [vmem:[#allocation7 + $0x390] sm:$0xff]
    %v203 = vld [vmem:[#allocation7 + $0x398] sm:$0xff]
    %v204 = vld [vmem:[#allocation7 + $0x3a0] sm:$0xff]
    %v205 = vld [vmem:[#allocation7 + $0x3a8] sm:$0xff]
    %v206 = vld [vmem:[#allocation7 + $0x3b0] sm:$0xff]
    %v207 = vld [vmem:[#allocation7 + $0x3b8] sm:$0xff]
    %v208 = vld [vmem:[#allocation7 + $0x3c0] sm:$0xff]
    %v209 = vld [vmem:[#allocation7 + $0x3c8] sm:$0xff]
    %v210 = vld [vmem:[#allocation7 + $0x3d0] sm:$0xff]
    %v211 = vld [vmem:[#allocation7 + $0x3d8] sm:$0xff]
    %v212 = vld [vmem:[#allocation7 + $0x3e0] sm:$0xff]
    %v213 = vld [vmem:[#allocation7 + $0x3e8] sm:$0xff]
    %v214 = vld [vmem:[#allocation7 + $0x3f0] sm:$0xff]
    %v215 = vld [vmem:[#allocation7 + $0x3f8] sm:$0xff]
    %v216 = vld [vmem:[#allocation7 + $0x400] sm:$0xff]
    %v217 = vld [vmem:[#allocation7 + $0x408] sm:$0xff]
    %v218 = vld [vmem:[#allocation7 + $0x410] sm:$0xff]
    %v219 = vld [vmem:[#allocation7 + $0x418] sm:$0xff]
    %v220 = vld [vmem:[#allocation7 + $0x420] sm:$0xff]
    %v221 = vld [vmem:[#allocation7 + $0x428] sm:$0xff]
    %v222 = vld [vmem:[#allocation7 + $0x430] sm:$0xff]
    %v223 = vld [vmem:[#allocation7 + $0x438] sm:$0xff]
    %v224 = vld [vmem:[#allocation7 + $0x440] sm:$0xff]
    %v225 = vld [vmem:[#allocation7 + $0x448] sm:$0xff]
    %v226 = vld [vmem:[#allocation7 + $0x450] sm:$0xff]
    %v227 = vld [vmem:[#allocation7 + $0x458] sm:$0xff]
    %v228 = vld [vmem:[#allocation7 + $0x460] sm:$0xff]
    %v229 = vld [vmem:[#allocation7 + $0x468] sm:$0xff]
    %v230 = vld [vmem:[#allocation7 + $0x470] sm:$0xff]
    %v231 = vld [vmem:[#allocation7 + $0x478] sm:$0xff]
    %v232 = vld [vmem:[#allocation7 + $0x480] sm:$0xff]
    %v233 = vld [vmem:[#allocation7 + $0x488] sm:$0xff]
    %v234 = vld [vmem:[#allocation7 + $0x490] sm:$0xff]
    %v235 = vld [vmem:[#allocation7 + $0x498] sm:$0xff]
    %v236 = vld [vmem:[#allocation7 + $0x4a0] sm:$0xff]
    %v237 = vld [vmem:[#allocation7 + $0x4a8] sm:$0xff]
    %v238 = vld [vmem:[#allocation7 + $0x4b0] sm:$0xff]
    %v239 = vld [vmem:[#allocation7 + $0x4b8] sm:$0xff]
    %v240 = vld [vmem:[#allocation7 + $0x4c0] sm:$0xff]
    %v241 = vld [vmem:[#allocation7 + $0x4c8] sm:$0xff]
    %v242 = vld [vmem:[#allocation7 + $0x4d0] sm:$0xff]
    %v243 = vld [vmem:[#allocation7 + $0x4d8] sm:$0xff]
    %v244 = vld [vmem:[#allocation7 + $0x4e0] sm:$0xff]
    %v245 = vld [vmem:[#allocation7 + $0x4e8] sm:$0xff]
    %v246 = vld [vmem:[#allocation7 + $0x4f0] sm:$0xff]
    %v247 = vld [vmem:[#allocation7 + $0x4f8] sm:$0xff]
    %v248 = vld [vmem:[#allocation7 + $0x500] sm:$0xff]
    %v249 = vld [vmem:[#allocation7 + $0x508] sm:$0xff]
    %v250 = vld [vmem:[#allocation7 + $0x510] sm:$0xff]
    %v251 = vld [vmem:[#allocation7 + $0x518] sm:$0xff]
    %v252 = vld [vmem:[#allocation7 + $0x520] sm:$0xff]
    %v253 = vld [vmem:[#allocation7 + $0x528] sm:$0xff]
    %v254 = vld [vmem:[#allocation7 + $0x530] sm:$0xff]
    %v255 = vld [vmem:[#allocation7 + $0x538] sm:$0xff]
    %v256 = vld [vmem:[#allocation7 + $0x540] sm:$0xff]
    %v257 = vld [vmem:[#allocation7 + $0x548] sm:$0xff]
    %v258 = vld [vmem:[#allocation7 + $0x550] sm:$0xff]
    %v259 = vld [vmem:[#allocation7 + $0x558] sm:$0xff]
    %v260 = vld [vmem:[#allocation7 + $0x560] sm:$0xff]
    %v261 = vld [vmem:[#allocation7 + $0x568] sm:$0xff]
    %v262 = vld [vmem:[#allocation7 + $0x570] sm:$0xff]
    %v263 = vld [vmem:[#allocation7 + $0x578] sm:$0xff]
    %v264 = vld [vmem:[#allocation7 + $0x580] sm:$0xff]
    %v265 = vld [vmem:[#allocation7 + $0x588] sm:$0xff]
    %v266 = vld [vmem:[#allocation7 + $0x590] sm:$0xff]
    %v267 = vld [vmem:[#allocation7 + $0x598] sm:$0xff]
    %v268 = vld [vmem:[#allocation7 + $0x5a0] sm:$0xff]
    %v269 = vld [vmem:[#allocation7 + $0x5a8] sm:$0xff]
    %v270 = vld [vmem:[#allocation7 + $0x5b0] sm:$0xff]
    %v271 = vld [vmem:[#allocation7 + $0x5b8] sm:$0xff]
    %v272 = vld [vmem:[#allocation7 + $0x5c0] sm:$0xff]
    %v273 = vld [vmem:[#allocation7 + $0x5c8] sm:$0xff]
    %v274 = vld [vmem:[#allocation7 + $0x5d0] sm:$0xff]
    %v275 = vld [vmem:[#allocation7 + $0x5d8] sm:$0xff]
    %v276 = vld [vmem:[#allocation7 + $0x5e0] sm:$0xff]
    %v277 = vld [vmem:[#allocation7 + $0x5e8] sm:$0xff]
    %v278 = vld [vmem:[#allocation7 + $0x5f0] sm:$0xff]
    %v279 = vld [vmem:[#allocation7 + $0x5f8] sm:$0xff]
    %v280 = vld [vmem:[#allocation7 + $0x600] sm:$0xff]
    %v281 = vld [vmem:[#allocation7 + $0x608] sm:$0xff]
    %v282 = vld [vmem:[#allocation7 + $0x610] sm:$0xff]
    %v283 = vld [vmem:[#allocation7 + $0x618] sm:$0xff]
    %v284 = vld [vmem:[#allocation7 + $0x620] sm:$0xff]
    %v285 = vld [vmem:[#allocation7 + $0x628] sm:$0xff]
    %v286 = vld [vmem:[#allocation7 + $0x630] sm:$0xff]
    %v287 = vld [vmem:[#allocation7 + $0x638] sm:$0xff]
    %v288 = vld [vmem:[#allocation7 + $0x640] sm:$0xff]
    %v289 = vld [vmem:[#allocation7 + $0x648] sm:$0xff]
    %v290 = vld [vmem:[#allocation7 + $0x650] sm:$0xff]
    %v291 = vld [vmem:[#allocation7 + $0x658] sm:$0xff]
    %v292 = vld [vmem:[#allocation7 + $0x660] sm:$0xff]
    %v293 = vld [vmem:[#allocation7 + $0x668] sm:$0xff]
    %v294 = vld [vmem:[#allocation7 + $0x670] sm:$0xff]
    %v295 = vld [vmem:[#allocation7 + $0x678] sm:$0xff]
    %v296 = vld [vmem:[#allocation7 + $0x680] sm:$0xff]
    %v297 = vld [vmem:[#allocation7 + $0x688] sm:$0xff]
    %v298 = vld [vmem:[#allocation7 + $0x690] sm:$0xff]
    %v299 = vld [vmem:[#allocation7 + $0x698] sm:$0xff]
    %v300 = vld [vmem:[#allocation7 + $0x6a0] sm:$0xff]
    %v301 = vld [vmem:[#allocation7 + $0x6a8] sm:$0xff]
    %v302 = vld [vmem:[#allocation7 + $0x6b0] sm:$0xff]
    %v303 = vld [vmem:[#allocation7 + $0x6b8] sm:$0xff]
    %v304 = vld [vmem:[#allocation7 + $0x6c0] sm:$0xff]
    %v305 = vld [vmem:[#allocation7 + $0x6c8] sm:$0xff]
    %v306 = vld [vmem:[#allocation7 + $0x6d0] sm:$0xff]
    %v307 = vld [vmem:[#allocation7 + $0x6d8] sm:$0xff]
    %v308 = vld [vmem:[#allocation7 + $0x6e0] sm:$0xff]
    %v309 = vld [vmem:[#allocation7 + $0x6e8] sm:$0xff]
    %v310 = vld [vmem:[#allocation7 + $0x6f0] sm:$0xff]
    %v311 = vld [vmem:[#allocation7 + $0x6f8] sm:$0xff]
    %v312 = vld [vmem:[#allocation7 + $0x700] sm:$0xff]
    %v313 = vld [vmem:[#allocation7 + $0x708] sm:$0xff]
    %v314 = vld [vmem:[#allocation7 + $0x710] sm:$0xff]
    %v315 = vld [vmem:[#allocation7 + $0x718] sm:$0xff]
    %v316 = vld [vmem:[#allocation7 + $0x720] sm:$0xff]
    %v317 = vld [vmem:[#allocation7 + $0x728] sm:$0xff]
    %v318 = vld [vmem:[#allocation7 + $0x730] sm:$0xff]
    %v319 = vld [vmem:[#allocation7 + $0x738] sm:$0xff]
    %v320 = vld [vmem:[#allocation7 + $0x740] sm:$0xff]
    %v321 = vld [vmem:[#allocation7 + $0x748] sm:$0xff]
    %v322 = vld [vmem:[#allocation7 + $0x750] sm:$0xff]
    %v323 = vld [vmem:[#allocation7 + $0x758] sm:$0xff]
    %v324 = vld [vmem:[#allocation7 + $0x760] sm:$0xff]
    %v325 = vld [vmem:[#allocation7 + $0x768] sm:$0xff]
    %v326 = vld [vmem:[#allocation7 + $0x770] sm:$0xff]
    %v327 = vld [vmem:[#allocation7 + $0x778] sm:$0xff]
    %v328 = vld [vmem:[#allocation7 + $0x780] sm:$0xff]
    %v329 = vld [vmem:[#allocation7 + $0x788] sm:$0xff]
    %v330 = vld [vmem:[#allocation7 + $0x790] sm:$0xff]
    %v331 = vld [vmem:[#allocation7 + $0x798] sm:$0xff]
    %v332 = vld [vmem:[#allocation7 + $0x7a0] sm:$0xff]
    %v333 = vld [vmem:[#allocation7 + $0x7a8] sm:$0xff]
    %v334 = vld [vmem:[#allocation7 + $0x7b0] sm:$0xff]
    %v335 = vld [vmem:[#allocation7 + $0x7b8] sm:$0xff]
    %v336 = vld [vmem:[#allocation7 + $0x7c0] sm:$0xff]
    %v337 = vld [vmem:[#allocation7 + $0x7c8] sm:$0xff]
    %v338 = vld [vmem:[#allocation7 + $0x7d0] sm:$0xff]
    %v339 = vld [vmem:[#allocation7 + $0x7d8] sm:$0xff]
    %v340 = vld [vmem:[#allocation7 + $0x7e0] sm:$0xff]
    %v341 = vld [vmem:[#allocation7 + $0x7e8] sm:$0xff]
    %v342 = vld [vmem:[#allocation7 + $0x7f0] sm:$0xff]
    %v343 = vld [vmem:[#allocation7 + $0x7f8] sm:$0xff]
    %v344 = vld [vmem:[#allocation9] sm:$0xff]
    %v345 = vld [vmem:[#allocation9 + $0x8] sm:$0xff]
    %v346 = vld [vmem:[#allocation9 + $0x10] sm:$0xff]
    %v347 = vld [vmem:[#allocation9 + $0x18] sm:$0xff]
    %v348 = vld [vmem:[#allocation9 + $0x20] sm:$0xff]
    %v349 = vld [vmem:[#allocation9 + $0x28] sm:$0xff]
    %v350 = vld [vmem:[#allocation9 + $0x30] sm:$0xff]
    %v351 = vld [vmem:[#allocation9 + $0x38] sm:$0xff]
    %v352 = vld [vmem:[#allocation9 + $0x40] sm:$0xff]
    %v353 = vld [vmem:[#allocation9 + $0x48] sm:$0xff]
    %v354 = vld [vmem:[#allocation9 + $0x50] sm:$0xff]
    %v355 = vld [vmem:[#allocation9 + $0x58] sm:$0xff]
    %v356 = vld [vmem:[#allocation9 + $0x60] sm:$0xff]
    %v357 = vld [vmem:[#allocation9 + $0x68] sm:$0xff]
    %v358 = vld [vmem:[#allocation9 + $0x70] sm:$0xff]
    %v359 = vld [vmem:[#allocation9 + $0x78] sm:$0xff]
    %v360 = vld [vmem:[#allocation9 + $0x80] sm:$0xff]
    %v361 = vld [vmem:[#allocation9 + $0x88] sm:$0xff]
    %v362 = vld [vmem:[#allocation9 + $0x90] sm:$0xff]
    %v363 = vld [vmem:[#allocation9 + $0x98] sm:$0xff]
    %v364 = vld [vmem:[#allocation9 + $0xa0] sm:$0xff]
    %v365 = vld [vmem:[#allocation9 + $0xa8] sm:$0xff]
    %v366 = vld [vmem:[#allocation9 + $0xb0] sm:$0xff]
    %v367 = vld [vmem:[#allocation9 + $0xb8] sm:$0xff]
    %v368 = vld [vmem:[#allocation9 + $0xc0] sm:$0xff]
    %v369 = vld [vmem:[#allocation9 + $0xc8] sm:$0xff]
    %v370 = vld [vmem:[#allocation9 + $0xd0] sm:$0xff]
    %v371 = vld [vmem:[#allocation9 + $0xd8] sm:$0xff]
    %v372 = vld [vmem:[#allocation9 + $0xe0] sm:$0xff]
    %v373 = vld [vmem:[#allocation9 + $0xe8] sm:$0xff]
    %v374 = vld [vmem:[#allocation9 + $0xf0] sm:$0xff]
    %v375 = vld [vmem:[#allocation9 + $0xf8] sm:$0xff]
    %v376 = vld [vmem:[#allocation9 + $0x100] sm:$0xff]
    %v377 = vld [vmem:[#allocation9 + $0x108] sm:$0xff]
    %v378 = vld [vmem:[#allocation9 + $0x110] sm:$0xff]
    %v379 = vld [vmem:[#allocation9 + $0x118] sm:$0xff]
    %v380 = vld [vmem:[#allocation9 + $0x120] sm:$0xff]
    %v381 = vld [vmem:[#allocation9 + $0x128] sm:$0xff]
    %v382 = vld [vmem:[#allocation9 + $0x130] sm:$0xff]
    %v383 = vld [vmem:[#allocation9 + $0x138] sm:$0xff]
    %v384 = vld [vmem:[#allocation9 + $0x140] sm:$0xff]
    %v385 = vld [vmem:[#allocation9 + $0x148] sm:$0xff]
    %v386 = vld [vmem:[#allocation9 + $0x150] sm:$0xff]
    %v387 = vld [vmem:[#allocation9 + $0x158] sm:$0xff]
    %v388 = vld [vmem:[#allocation9 + $0x160] sm:$0xff]
    %v389 = vld [vmem:[#allocation9 + $0x168] sm:$0xff]
    %v390 = vld [vmem:[#allocation9 + $0x170] sm:$0xff]
    %v391 = vld [vmem:[#allocation9 + $0x178] sm:$0xff]
    %v392 = vld [vmem:[#allocation9 + $0x180] sm:$0xff]
    %v393 = vld [vmem:[#allocation9 + $0x188] sm:$0xff]
    %v394 = vld [vmem:[#allocation9 + $0x190] sm:$0xff]
    %v395 = vld [vmem:[#allocation9 + $0x198] sm:$0xff]
    %v396 = vld [vmem:[#allocation9 + $0x1a0] sm:$0xff]
    %v397 = vld [vmem:[#allocation9 + $0x1a8] sm:$0xff]
    %v398 = vld [vmem:[#allocation9 + $0x1b0] sm:$0xff]
    %v399 = vld [vmem:[#allocation9 + $0x1b8] sm:$0xff]
    %v400 = vld [vmem:[#allocation9 + $0x1c0] sm:$0xff]
    %v401 = vld [vmem:[#allocation9 + $0x1c8] sm:$0xff]
    %v402 = vld [vmem:[#allocation9 + $0x1d0] sm:$0xff]
    %v403 = vld [vmem:[#allocation9 + $0x1d8] sm:$0xff]
    %v404 = vld [vmem:[#allocation9 + $0x1e0] sm:$0xff]
    %v405 = vld [vmem:[#allocation9 + $0x1e8] sm:$0xff]
    %v406 = vld [vmem:[#allocation9 + $0x1f0] sm:$0xff]
    %v407 = vld [vmem:[#allocation9 + $0x1f8] sm:$0xff]
    %v408 = vld [vmem:[%s3] sm:$0x3]
    %v410 = vlaneseq
    %v411 = vshrl.u32 %v410, 7
    %v412 = vsub.s32 0, %v411
    %v413 = vrot.slane %v408, %v412
    %v414 = vlaneseq
    %v415 = vshrl.u32 %v414, 7
    %v416 = vsub.s32 1, %v415
    %v417 = vrot.slane %v408, %v416
    %v420 = vld [vmem:[%s4] sm:$0x3]
    %v422 = vlaneseq
    %v423 = vshrl.u32 %v422, 7
    %v424 = vsub.s32 0, %v423
    %v425 = vrot.slane %v420, %v424
    %v426 = vlaneseq
    %v427 = vshrl.u32 %v426, 7
    %v428 = vsub.s32 1, %v427
    %v429 = vrot.slane %v420, %v428
    %v432 = vld [vmem:[%s5] sm:$0x3]
    %v434 = vlaneseq
    %v435 = vshrl.u32 %v434, 7
    %v436 = vsub.s32 0, %v435
    %v437 = vrot.slane %v432, %v436
    %v438 = vlaneseq
    %v439 = vshrl.u32 %v438, 7
    %v440 = vsub.s32 1, %v439
    %v441 = vrot.slane %v432, %v440
    %444 = vmatprep.subr.mxu0 %v89
    %445 = vmatpush1.msra.mxu0 %v88
    %446 = vmatprep.subr.mxu0 %v91
    %447 = vmatpush1.msra.mxu0 %v90
    %448 = vmatprep.subr.mxu0 %v93
    %449 = vmatpush1.msra.mxu0 %v92
    %450 = vmatprep.subr.mxu0 %v95
    %451 = vmatpush1.msra.mxu0 %v94
    %452 = vmatprep.subr.mxu0 %v97
    %453 = vmatpush1.msra.mxu0 %v96
    %454 = vmatprep.subr.mxu0 %v99
    %455 = vmatpush1.msra.mxu0 %v98
    %456 = vmatprep.subr.mxu0 %v101
    %457 = vmatpush1.msra.mxu0 %v100
    %458 = vmatprep.subr.mxu0 %v103
    %459 = vmatpush1.msra.mxu0 %v102
    %460 = vmatprep.subr.mxu0 %v105
    %461 = vmatpush1.msra.mxu0 %v104
    %462 = vmatprep.subr.mxu0 %v107
    %463 = vmatpush1.msra.mxu0 %v106
    %464 = vmatprep.subr.mxu0 %v109
    %465 = vmatpush1.msra.mxu0 %v108
    %466 = vmatprep.subr.mxu0 %v111
    %467 = vmatpush1.msra.mxu0 %v110
    %468 = vmatprep.subr.mxu0 %v113
    %469 = vmatpush1.msra.mxu0 %v112
    %470 = vmatprep.subr.mxu0 %v115
    %471 = vmatpush1.msra.mxu0 %v114
    %472 = vmatprep.subr.mxu0 %v117
    %473 = vmatpush1.msra.mxu0 %v116
    %474 = vmatprep.subr.mxu0 %v119
    %475 = vmatpush1.msra.mxu0 %v118
    %476 = vmatprep.subr.mxu0 %v121
    %477 = vmatpush1.msra.mxu0 %v120
    %478 = vmatprep.subr.mxu0 %v123
    %479 = vmatpush1.msra.mxu0 %v122
    %480 = vmatprep.subr.mxu0 %v125
    %481 = vmatpush1.msra.mxu0 %v124
    %482 = vmatprep.subr.mxu0 %v127
    %483 = vmatpush1.msra.mxu0 %v126
    %484 = vmatprep.subr.mxu0 %v129
    %485 = vmatpush1.msra.mxu0 %v128
    %486 = vmatprep.subr.mxu0 %v131
    %487 = vmatpush1.msra.mxu0 %v130
    %488 = vmatprep.subr.mxu0 %v133
    %489 = vmatpush1.msra.mxu0 %v132
    %490 = vmatprep.subr.mxu0 %v135
    %491 = vmatpush1.msra.mxu0 %v134
    %492 = vmatprep.subr.mxu0 %v137
    %493 = vmatpush1.msra.mxu0 %v136
    %494 = vmatprep.subr.mxu0 %v139
    %495 = vmatpush1.msra.mxu0 %v138
    %496 = vmatprep.subr.mxu0 %v141
    %497 = vmatpush1.msra.mxu0 %v140
    %498 = vmatprep.subr.mxu0 %v143
    %499 = vmatpush1.msra.mxu0 %v142
    %500 = vmatprep.subr.mxu0 %v145
    %501 = vmatpush1.msra.mxu0 %v144
    %502 = vmatprep.subr.mxu0 %v147
    %503 = vmatpush1.msra.mxu0 %v146
    %504 = vmatprep.subr.mxu0 %v149
    %505 = vmatpush1.msra.mxu0 %v148
    %506 = vmatprep.subr.mxu0 %v151
    %507 = vmatpush1.msra.mxu0 %v150
    %508 = vmatprep.mubr.f32.mxu0 %v81
    %509 = vmatmul.mubr.f32.gmra.mrb[0].mxu0 %v80
    %v510 = vpop.f32.mrb[0].mxu0
    %v511 = vadd.f32 %v413, %v510
    %v512 = vpop.f32.mrb[0].mxu0
    %v513 = vadd.f32 %v417, %v512
    %514 = vdwg.mxu0
    %515 = vmatprep.subr.mxu0 %v153
    %516 = vmatpush1.msra.mxu0 %v152
    %517 = vmatprep.subr.mxu0 %v155
    %518 = vmatpush1.msra.mxu0 %v154
    %519 = vmatprep.subr.mxu0 %v157
    %520 = vmatpush1.msra.mxu0 %v156
    %521 = vmatprep.subr.mxu0 %v159
    %522 = vmatpush1.msra.mxu0 %v158
    %523 = vmatprep.subr.mxu0 %v161
    %524 = vmatpush1.msra.mxu0 %v160
    %525 = vmatprep.subr.mxu0 %v163
    %526 = vmatpush1.msra.mxu0 %v162
    %527 = vmatprep.subr.mxu0 %v165
    %528 = vmatpush1.msra.mxu0 %v164
    %529 = vmatprep.subr.mxu0 %v167
    %530 = vmatpush1.msra.mxu0 %v166
    %531 = vmatprep.subr.mxu0 %v169
    %532 = vmatpush1.msra.mxu0 %v168
    %533 = vmatprep.subr.mxu0 %v171
    %534 = vmatpush1.msra.mxu0 %v170
    %535 = vmatprep.subr.mxu0 %v173
    %536 = vmatpush1.msra.mxu0 %v172
    %537 = vmatprep.subr.mxu0 %v175
    %538 = vmatpush1.msra.mxu0 %v174
    %539 = vmatprep.subr.mxu0 %v177
    %540 = vmatpush1.msra.mxu0 %v176
    %541 = vmatprep.subr.mxu0 %v179
    %542 = vmatpush1.msra.mxu0 %v178
    %543 = vmatprep.subr.mxu0 %v181
    %544 = vmatpush1.msra.mxu0 %v180
    %545 = vmatprep.subr.mxu0 %v183
    %546 = vmatpush1.msra.mxu0 %v182
    %547 = vmatprep.subr.mxu0 %v185
    %548 = vmatpush1.msra.mxu0 %v184
    %549 = vmatprep.subr.mxu0 %v187
    %550 = vmatpush1.msra.mxu0 %v186
    %551 = vmatprep.subr.mxu0 %v189
    %552 = vmatpush1.msra.mxu0 %v188
    %553 = vmatprep.subr.mxu0 %v191
    %554 = vmatpush1.msra.mxu0 %v190
    %555 = vmatprep.subr.mxu0 %v193
    %556 = vmatpush1.msra.mxu0 %v192
    %557 = vmatprep.subr.mxu0 %v195
    %558 = vmatpush1.msra.mxu0 %v194
    %559 = vmatprep.subr.mxu0 %v197
    %560 = vmatpush1.msra.mxu0 %v196
    %561 = vmatprep.subr.mxu0 %v199
    %562 = vmatpush1.msra.mxu0 %v198
    %563 = vmatprep.subr.mxu0 %v201
    %564 = vmatpush1.msra.mxu0 %v200
    %565 = vmatprep.subr.mxu0 %v203
    %566 = vmatpush1.msra.mxu0 %v202
    %567 = vmatprep.subr.mxu0 %v205
    %568 = vmatpush1.msra.mxu0 %v204
    %569 = vmatprep.subr.mxu0 %v207
    %570 = vmatpush1.msra.mxu0 %v206
    %571 = vmatprep.subr.mxu0 %v209
    %572 = vmatpush1.msra.mxu0 %v208
    %573 = vmatprep.subr.mxu0 %v211
    %574 = vmatpush1.msra.mxu0 %v210
    %575 = vmatprep.subr.mxu0 %v213
    %576 = vmatpush1.msra.mxu0 %v212
    %577 = vmatprep.subr.mxu0 %v215
    %578 = vmatpush1.msra.mxu0 %v214
    %579 = vmatprep.mubr.f32.mxu0 %v83
    %580 = vmatmul.mubr.f32.gmra.mrb[0].mxu0 %v82
    %v581 = vpop.f32.mrb[0].mxu0
    %v582 = vadd.f32 %v511, %v581
    %v583 = vpop.f32.mrb[0].mxu0
    %v584 = vadd.f32 %v513, %v583
    %585 = vdwg.mxu0
    %586 = vmatprep.subr.mxu0 %v217
    %587 = vmatpush1.msra.mxu0 %v216
    %588 = vmatprep.subr.mxu0 %v219
    %589 = vmatpush1.msra.mxu0 %v218
    %590 = vmatprep.subr.mxu0 %v221
    %591 = vmatpush1.msra.mxu0 %v220
    %592 = vmatprep.subr.mxu0 %v223
    %593 = vmatpush1.msra.mxu0 %v222
    %594 = vmatprep.subr.mxu0 %v225
    %595 = vmatpush1.msra.mxu0 %v224
    %596 = vmatprep.subr.mxu0 %v227
    %597 = vmatpush1.msra.mxu0 %v226
    %598 = vmatprep.subr.mxu0 %v229
    %599 = vmatpush1.msra.mxu0 %v228
    %600 = vmatprep.subr.mxu0 %v231
    %601 = vmatpush1.msra.mxu0 %v230
    %602 = vmatprep.subr.mxu0 %v233
    %603 = vmatpush1.msra.mxu0 %v232
    %604 = vmatprep.subr.mxu0 %v235
    %605 = vmatpush1.msra.mxu0 %v234
    %606 = vmatprep.subr.mxu0 %v237
    %607 = vmatpush1.msra.mxu0 %v236
    %608 = vmatprep.subr.mxu0 %v239
    %609 = vmatpush1.msra.mxu0 %v238
    %610 = vmatprep.subr.mxu0 %v241
    %611 = vmatpush1.msra.mxu0 %v240
    %612 = vmatprep.subr.mxu0 %v243
    %613 = vmatpush1.msra.mxu0 %v242
    %614 = vmatprep.subr.mxu0 %v245
    %615 = vmatpush1.msra.mxu0 %v244
    %616 = vmatprep.subr.mxu0 %v247
    %617 = vmatpush1.msra.mxu0 %v246
    %618 = vmatprep.subr.mxu0 %v249
    %619 = vmatpush1.msra.mxu0 %v248
    %620 = vmatprep.subr.mxu0 %v251
    %621 = vmatpush1.msra.mxu0 %v250
    %622 = vmatprep.subr.mxu0 %v253
    %623 = vmatpush1.msra.mxu0 %v252
    %624 = vmatprep.subr.mxu0 %v255
    %625 = vmatpush1.msra.mxu0 %v254
    %626 = vmatprep.subr.mxu0 %v257
    %627 = vmatpush1.msra.mxu0 %v256
    %628 = vmatprep.subr.mxu0 %v259
    %629 = vmatpush1.msra.mxu0 %v258
    %630 = vmatprep.subr.mxu0 %v261
    %631 = vmatpush1.msra.mxu0 %v260
    %632 = vmatprep.subr.mxu0 %v263
    %633 = vmatpush1.msra.mxu0 %v262
    %634 = vmatprep.subr.mxu0 %v265
    %635 = vmatpush1.msra.mxu0 %v264
    %636 = vmatprep.subr.mxu0 %v267
    %637 = vmatpush1.msra.mxu0 %v266
    %638 = vmatprep.subr.mxu0 %v269
    %639 = vmatpush1.msra.mxu0 %v268
    %640 = vmatprep.subr.mxu0 %v271
    %641 = vmatpush1.msra.mxu0 %v270
    %642 = vmatprep.subr.mxu0 %v273
    %643 = vmatpush1.msra.mxu0 %v272
    %644 = vmatprep.subr.mxu0 %v275
    %645 = vmatpush1.msra.mxu0 %v274
    %646 = vmatprep.subr.mxu0 %v277
    %647 = vmatpush1.msra.mxu0 %v276
    %648 = vmatprep.subr.mxu0 %v279
    %649 = vmatpush1.msra.mxu0 %v278
    %650 = vmatprep.mubr.f32.mxu0 %v85
    %651 = vmatmul.mubr.f32.gmra.mrb[0].mxu0 %v84
    %v652 = vpop.f32.mrb[0].mxu0
    %v653 = vadd.f32 %v582, %v652
    %v654 = vpop.f32.mrb[0].mxu0
    %v655 = vadd.f32 %v584, %v654
    %656 = vdwg.mxu0
    %657 = vmatprep.subr.mxu0 %v281
    %658 = vmatpush1.msra.mxu0 %v280
    %659 = vmatprep.subr.mxu0 %v283
    %660 = vmatpush1.msra.mxu0 %v282
    %661 = vmatprep.subr.mxu0 %v285
    %662 = vmatpush1.msra.mxu0 %v284
    %663 = vmatprep.subr.mxu0 %v287
    %664 = vmatpush1.msra.mxu0 %v286
    %665 = vmatprep.subr.mxu0 %v289
    %666 = vmatpush1.msra.mxu0 %v288
    %667 = vmatprep.subr.mxu0 %v291
    %668 = vmatpush1.msra.mxu0 %v290
    %669 = vmatprep.subr.mxu0 %v293
    %670 = vmatpush1.msra.mxu0 %v292
    %671 = vmatprep.subr.mxu0 %v295
    %672 = vmatpush1.msra.mxu0 %v294
    %673 = vmatprep.subr.mxu0 %v297
    %674 = vmatpush1.msra.mxu0 %v296
    %675 = vmatprep.subr.mxu0 %v299
    %676 = vmatpush1.msra.mxu0 %v298
    %677 = vmatprep.subr.mxu0 %v301
    %678 = vmatpush1.msra.mxu0 %v300
    %679 = vmatprep.subr.mxu0 %v303
    %680 = vmatpush1.msra.mxu0 %v302
    %681 = vmatprep.subr.mxu0 %v305
    %682 = vmatpush1.msra.mxu0 %v304
    %683 = vmatprep.subr.mxu0 %v307
    %684 = vmatpush1.msra.mxu0 %v306
    %685 = vmatprep.subr.mxu0 %v309
    %686 = vmatpush1.msra.mxu0 %v308
    %687 = vmatprep.subr.mxu0 %v311
    %688 = vmatpush1.msra.mxu0 %v310
    %689 = vmatprep.subr.mxu0 %v313
    %690 = vmatpush1.msra.mxu0 %v312
    %691 = vmatprep.subr.mxu0 %v315
    %692 = vmatpush1.msra.mxu0 %v314
    %693 = vmatprep.subr.mxu0 %v317
    %694 = vmatpush1.msra.mxu0 %v316
    %695 = vmatprep.subr.mxu0 %v319
    %696 = vmatpush1.msra.mxu0 %v318
    %697 = vmatprep.subr.mxu0 %v321
    %698 = vmatpush1.msra.mxu0 %v320
    %699 = vmatprep.subr.mxu0 %v323
    %700 = vmatpush1.msra.mxu0 %v322
    %701 = vmatprep.subr.mxu0 %v325
    %702 = vmatpush1.msra.mxu0 %v324
    %703 = vmatprep.subr.mxu0 %v327
    %704 = vmatpush1.msra.mxu0 %v326
    %705 = vmatprep.subr.mxu0 %v329
    %706 = vmatpush1.msra.mxu0 %v328
    %707 = vmatprep.subr.mxu0 %v331
    %708 = vmatpush1.msra.mxu0 %v330
    %709 = vmatprep.subr.mxu0 %v333
    %710 = vmatpush1.msra.mxu0 %v332
    %711 = vmatprep.subr.mxu0 %v335
    %712 = vmatpush1.msra.mxu0 %v334
    %713 = vmatprep.subr.mxu0 %v337
    %714 = vmatpush1.msra.mxu0 %v336
    %715 = vmatprep.subr.mxu0 %v339
    %716 = vmatpush1.msra.mxu0 %v338
    %717 = vmatprep.subr.mxu0 %v341
    %718 = vmatpush1.msra.mxu0 %v340
    %719 = vmatprep.subr.mxu0 %v343
    %720 = vmatpush1.msra.mxu0 %v342
    %721 = vmatprep.mubr.f32.mxu0 %v87
    %722 = vmatmul.mubr.f32.gmra.mrb[0].mxu0 %v86
    %v723 = vpop.f32.mrb[0].mxu0
    %v724 = vadd.f32 %v653, %v723
    %v725 = vpop.f32.mrb[0].mxu0
    %v726 = vadd.f32 %v655, %v725
    %727 = vdwg.mxu0
    %v728 = vtanh.pop %v724
    %v729 = vtanh.pop %v726
    %730 = vmatprep.subr.mxu0 %v345
    %731 = vmatpush1.msra.mxu0 %v344
    %732 = vmatprep.subr.mxu0 %v347
    %733 = vmatpush1.msra.mxu0 %v346
    %734 = vmatprep.subr.mxu0 %v349
    %735 = vmatpush1.msra.mxu0 %v348
    %736 = vmatprep.subr.mxu0 %v351
    %737 = vmatpush1.msra.mxu0 %v350
    %738 = vmatprep.subr.mxu0 %v353
    %739 = vmatpush1.msra.mxu0 %v352
    %740 = vmatprep.subr.mxu0 %v355
    %741 = vmatpush1.msra.mxu0 %v354
    %742 = vmatprep.subr.mxu0 %v357
    %743 = vmatpush1.msra.mxu0 %v356
    %744 = vmatprep.subr.mxu0 %v359
    %745 = vmatpush1.msra.mxu0 %v358
    %746 = vmatprep.subr.mxu0 %v361
    %747 = vmatpush1.msra.mxu0 %v360
    %748 = vmatprep.subr.mxu0 %v363
    %749 = vmatpush1.msra.mxu0 %v362
    %750 = vmatprep.subr.mxu0 %v365
    %751 = vmatpush1.msra.mxu0 %v364
    %752 = vmatprep.subr.mxu0 %v367
    %753 = vmatpush1.msra.mxu0 %v366
    %754 = vmatprep.subr.mxu0 %v369
    %755 = vmatpush1.msra.mxu0 %v368
    %756 = vmatprep.subr.mxu0 %v371
    %757 = vmatpush1.msra.mxu0 %v370
    %758 = vmatprep.subr.mxu0 %v373
    %759 = vmatpush1.msra.mxu0 %v372
    %760 = vmatprep.subr.mxu0 %v375
    %761 = vmatpush1.msra.mxu0 %v374
    %762 = vmatprep.subr.mxu0 %v377
    %763 = vmatpush1.msra.mxu0 %v376
    %764 = vmatprep.subr.mxu0 %v379
    %765 = vmatpush1.msra.mxu0 %v378
    %766 = vmatprep.subr.mxu0 %v381
    %767 = vmatpush1.msra.mxu0 %v380
    %768 = vmatprep.subr.mxu0 %v383
    %769 = vmatpush1.msra.mxu0 %v382
    %770 = vmatprep.subr.mxu0 %v385
    %771 = vmatpush1.msra.mxu0 %v384
    %772 = vmatprep.subr.mxu0 %v387
    %773 = vmatpush1.msra.mxu0 %v386
    %774 = vmatprep.subr.mxu0 %v389
    %775 = vmatpush1.msra.mxu0 %v388
    %776 = vmatprep.subr.mxu0 %v391
    %777 = vmatpush1.msra.mxu0 %v390
    %778 = vmatprep.subr.mxu0 %v393
    %779 = vmatpush1.msra.mxu0 %v392
    %780 = vmatprep.subr.mxu0 %v395
    %781 = vmatpush1.msra.mxu0 %v394
    %782 = vmatprep.subr.mxu0 %v397
    %783 = vmatpush1.msra.mxu0 %v396
    %784 = vmatprep.subr.mxu0 %v399
    %785 = vmatpush1.msra.mxu0 %v398
    %786 = vmatprep.subr.mxu0 %v401
    %787 = vmatpush1.msra.mxu0 %v400
    %788 = vmatprep.subr.mxu0 %v403
    %789 = vmatpush1.msra.mxu0 %v402
    %790 = vmatprep.subr.mxu0 %v405
    %791 = vmatpush1.msra.mxu0 %v404
    %792 = vmatprep.subr.mxu0 %v407
    %793 = vmatpush1.msra.mxu0 %v406
    %794 = vmatprep.mubr.f32.mxu0 %v729
    %795 = vmatmul.mubr.f32.gmra.mrb[0].mxu0 %v728
    %v796 = vpop.f32.mrb[0].mxu0
    %v797 = vadd.f32 %v425, %v796
    %v798 = vpop.f32.mrb[0].mxu0
    %v799 = vadd.f32 %v429, %v798
    %800 = vdwg.mxu0
    %v801 = vmul.f32 %v728, %v728
    %v802 = vmul.f32 %v729, %v729
    %v803 = vsub.f32 1.0, %v801
    %v804 = vsub.f32 1.0, %v802
    %v805 = vmul.f32 %v803, %v437
    %v806 = vmul.f32 %v804, %v441
    %v807 = vadd.f32 %v805, %v806
    %808 = vadd.xlane.f32.xlu0 %v807
    %v809 = vpop.xlane.xlu0 %808
    %v810 = vmul.f32 %v797, 0.0625
    %v811 = vmul.f32 %v799, 0.0625
    %v812 = vadd.f32 %v724, %v810
    %v813 = vadd.f32 %v726, %v811
    %v814 = vtanh.pop %v812
    %v815 = vtanh.pop %v813
    %816 = vmatprep.subr.mxu0 %v345
    %817 = vmatpush1.msra.mxu0 %v344
    %818 = vmatprep.subr.mxu0 %v347
    %819 = vmatpush1.msra.mxu0 %v346
    %820 = vmatprep.subr.mxu0 %v349
    %821 = vmatpush1.msra.mxu0 %v348
    %822 = vmatprep.subr.mxu0 %v351
    %823 = vmatpush1.msra.mxu0 %v350
    %824 = vmatprep.subr.mxu0 %v353
    %825 = vmatpush1.msra.mxu0 %v352
    %826 = vmatprep.subr.mxu0 %v355
    %827 = vmatpush1.msra.mxu0 %v354
    %828 = vmatprep.subr.mxu0 %v357
    %829 = vmatpush1.msra.mxu0 %v356
    %830 = vmatprep.subr.mxu0 %v359
    %831 = vmatpush1.msra.mxu0 %v358
    %832 = vmatprep.subr.mxu0 %v361
    %833 = vmatpush1.msra.mxu0 %v360
    %834 = vmatprep.subr.mxu0 %v363
    %835 = vmatpush1.msra.mxu0 %v362
    %836 = vmatprep.subr.mxu0 %v365
    %837 = vmatpush1.msra.mxu0 %v364
    %838 = vmatprep.subr.mxu0 %v367
    %839 = vmatpush1.msra.mxu0 %v366
    %840 = vmatprep.subr.mxu0 %v369
    %841 = vmatpush1.msra.mxu0 %v368
    %842 = vmatprep.subr.mxu0 %v371
    %843 = vmatpush1.msra.mxu0 %v370
    %844 = vmatprep.subr.mxu0 %v373
    %845 = vmatpush1.msra.mxu0 %v372
    %846 = vmatprep.subr.mxu0 %v375
    %847 = vmatpush1.msra.mxu0 %v374
    %848 = vmatprep.subr.mxu0 %v377
    %849 = vmatpush1.msra.mxu0 %v376
    %850 = vmatprep.subr.mxu0 %v379
    %851 = vmatpush1.msra.mxu0 %v378
    %852 = vmatprep.subr.mxu0 %v381
    %853 = vmatpush1.msra.mxu0 %v380
    %854 = vmatprep.subr.mxu0 %v383
    %855 = vmatpush1.msra.mxu0 %v382
    %856 = vmatprep.subr.mxu0 %v385
    %857 = vmatpush1.msra.mxu0 %v384
    %858 = vmatprep.subr.mxu0 %v387
    %859 = vmatpush1.msra.mxu0 %v386
    %860 = vmatprep.subr.mxu0 %v389
    %861 = vmatpush1.msra.mxu0 %v388
    %862 = vmatprep.subr.mxu0 %v391
    %863 = vmatpush1.msra.mxu0 %v390
    %864 = vmatprep.subr.mxu0 %v393
    %865 = vmatpush1.msra.mxu0 %v392
    %866 = vmatprep.subr.mxu0 %v395
    %867 = vmatpush1.msra.mxu0 %v394
    %868 = vmatprep.subr.mxu0 %v397
    %869 = vmatpush1.msra.mxu0 %v396
    %870 = vmatprep.subr.mxu0 %v399
    %871 = vmatpush1.msra.mxu0 %v398
    %872 = vmatprep.subr.mxu0 %v401
    %873 = vmatpush1.msra.mxu0 %v400
    %874 = vmatprep.subr.mxu0 %v403
    %875 = vmatpush1.msra.mxu0 %v402
    %876 = vmatprep.subr.mxu0 %v405
    %877 = vmatpush1.msra.mxu0 %v404
    %878 = vmatprep.subr.mxu0 %v407
    %879 = vmatpush1.msra.mxu0 %v406
    %880 = vmatprep.mubr.f32.mxu0 %v815
    %881 = vmatmul.mubr.f32.gmra.mrb[0].mxu0 %v814
    %v882 = vpop.f32.mrb[0].mxu0
    %v883 = vadd.f32 %v425, %v882
    %v884 = vpop.f32.mrb[0].mxu0
    %v885 = vadd.f32 %v429, %v884
    %886 = vdwg.mxu0
    %v887 = vmul.f32 %v814, %v814
    %v888 = vmul.f32 %v815, %v815
    %v889 = vsub.f32 1.0, %v887
    %v890 = vsub.f32 1.0, %v888
    %v891 = vmul.f32 %v889, %v437
    %v892 = vmul.f32 %v890, %v441
    %v893 = vadd.f32 %v891, %v892
    %894 = vadd.xlane.f32.xlu0 %v893
    %v895 = vpop.xlane.xlu0 %894
    %v896 = vmul.f32 %v883, 0.0625
    %v897 = vmul.f32 %v885, 0.0625
    %v898 = vadd.f32 %v724, %v896
    %v899 = vadd.f32 %v726, %v897
    %v900 = vtanh.pop %v898
    %v901 = vtanh.pop %v899
    %902 = vmatprep.subr.mxu0 %v345
    %903 = vmatpush1.msra.mxu0 %v344
    %904 = vmatprep.subr.mxu0 %v347
    %905 = vmatpush1.msra.mxu0 %v346
    %906 = vmatprep.subr.mxu0 %v349
    %907 = vmatpush1.msra.mxu0 %v348
    %908 = vmatprep.subr.mxu0 %v351
    %909 = vmatpush1.msra.mxu0 %v350
    %910 = vmatprep.subr.mxu0 %v353
    %911 = vmatpush1.msra.mxu0 %v352
    %912 = vmatprep.subr.mxu0 %v355
    %913 = vmatpush1.msra.mxu0 %v354
    %914 = vmatprep.subr.mxu0 %v357
    %915 = vmatpush1.msra.mxu0 %v356
    %916 = vmatprep.subr.mxu0 %v359
    %917 = vmatpush1.msra.mxu0 %v358
    %918 = vmatprep.subr.mxu0 %v361
    %919 = vmatpush1.msra.mxu0 %v360
    %920 = vmatprep.subr.mxu0 %v363
    %921 = vmatpush1.msra.mxu0 %v362
    %922 = vmatprep.subr.mxu0 %v365
    %923 = vmatpush1.msra.mxu0 %v364
    %924 = vmatprep.subr.mxu0 %v367
    %925 = vmatpush1.msra.mxu0 %v366
    %926 = vmatprep.subr.mxu0 %v369
    %927 = vmatpush1.msra.mxu0 %v368
    %928 = vmatprep.subr.mxu0 %v371
    %929 = vmatpush1.msra.mxu0 %v370
    %930 = vmatprep.subr.mxu0 %v373
    %931 = vmatpush1.msra.mxu0 %v372
    %932 = vmatprep.subr.mxu0 %v375
    %933 = vmatpush1.msra.mxu0 %v374
    %934 = vmatprep.subr.mxu0 %v377
    %935 = vmatpush1.msra.mxu0 %v376
    %936 = vmatprep.subr.mxu0 %v379
    %937 = vmatpush1.msra.mxu0 %v378
    %938 = vmatprep.subr.mxu0 %v381
    %939 = vmatpush1.msra.mxu0 %v380
    %940 = vmatprep.subr.mxu0 %v383
    %941 = vmatpush1.msra.mxu0 %v382
    %942 = vmatprep.subr.mxu0 %v385
    %943 = vmatpush1.msra.mxu0 %v384
    %944 = vmatprep.subr.mxu0 %v387
    %945 = vmatpush1.msra.mxu0 %v386
    %946 = vmatprep.subr.mxu0 %v389
    %947 = vmatpush1.msra.mxu0 %v388
    %948 = vmatprep.subr.mxu0 %v391
    %949 = vmatpush1.msra.mxu0 %v390
    %950 = vmatprep.subr.mxu0 %v393
    %951 = vmatpush1.msra.mxu0 %v392
    %952 = vmatprep.subr.mxu0 %v395
    %953 = vmatpush1.msra.mxu0 %v394
    %954 = vmatprep.subr.mxu0 %v397
    %955 = vmatpush1.msra.mxu0 %v396
    %956 = vmatprep.subr.mxu0 %v399
    %957 = vmatpush1.msra.mxu0 %v398
    %958 = vmatprep.subr.mxu0 %v401
    %959 = vmatpush1.msra.mxu0 %v400
    %960 = vmatprep.subr.mxu0 %v403
    %961 = vmatpush1.msra.mxu0 %v402
    %962 = vmatprep.subr.mxu0 %v405
    %963 = vmatpush1.msra.mxu0 %v404
    %964 = vmatprep.subr.mxu0 %v407
    %965 = vmatpush1.msra.mxu0 %v406
    %966 = vmatprep.mubr.f32.mxu0 %v901
    %967 = vmatmul.mubr.f32.gmra.mrb[0].mxu0 %v900
    %v968 = vpop.f32.mrb[0].mxu0
    %v969 = vadd.f32 %v425, %v968
    %v970 = vpop.f32.mrb[0].mxu0
    %v971 = vadd.f32 %v429, %v970
    %972 = vdwg.mxu0
    %v973 = vmul.f32 %v900, %v900
    %v974 = vmul.f32 %v901, %v901
    %v975 = vsub.f32 1.0, %v973
    %v976 = vsub.f32 1.0, %v974
    %v977 = vmul.f32 %v975, %v437
    %v978 = vmul.f32 %v976, %v441
    %v979 = vadd.f32 %v977, %v978
    %980 = vadd.xlane.f32.xlu0 %v979
    %v981 = vpop.xlane.xlu0 %980
    %v982 = vmul.f32 %v969, 0.125
    %v983 = vmul.f32 %v971, 0.125
    %v984 = vadd.f32 %v724, %v982
    %v985 = vadd.f32 %v726, %v983
    %v986 = vtanh.pop %v984
    %v987 = vtanh.pop %v985
    %988 = vmatprep.subr.mxu0 %v345
    %989 = vmatpush1.msra.mxu0 %v344
    %990 = vmatprep.subr.mxu0 %v347
    %991 = vmatpush1.msra.mxu0 %v346
    %992 = vmatprep.subr.mxu0 %v349
    %993 = vmatpush1.msra.mxu0 %v348
    %994 = vmatprep.subr.mxu0 %v351
    %995 = vmatpush1.msra.mxu0 %v350
    %996 = vmatprep.subr.mxu0 %v353
    %997 = vmatpush1.msra.mxu0 %v352
    %998 = vmatprep.subr.mxu0 %v355
    %999 = vmatpush1.msra.mxu0 %v354
    %1000 = vmatprep.subr.mxu0 %v357
    %1001 = vmatpush1.msra.mxu0 %v356
    %1002 = vmatprep.subr.mxu0 %v359
    %1003 = vmatpush1.msra.mxu0 %v358
    %1004 = vmatprep.subr.mxu0 %v361
    %1005 = vmatpush1.msra.mxu0 %v360
    %1006 = vmatprep.subr.mxu0 %v363
    %1007 = vmatpush1.msra.mxu0 %v362
    %1008 = vmatprep.subr.mxu0 %v365
    %1009 = vmatpush1.msra.mxu0 %v364
    %1010 = vmatprep.subr.mxu0 %v367
    %1011 = vmatpush1.msra.mxu0 %v366
    %1012 = vmatprep.subr.mxu0 %v369
    %1013 = vmatpush1.msra.mxu0 %v368
    %1014 = vmatprep.subr.mxu0 %v371
    %1015 = vmatpush1.msra.mxu0 %v370
    %1016 = vmatprep.subr.mxu0 %v373
    %1017 = vmatpush1.msra.mxu0 %v372
    %1018 = vmatprep.subr.mxu0 %v375
    %1019 = vmatpush1.msra.mxu0 %v374
    %1020 = vmatprep.subr.mxu0 %v377
    %1021 = vmatpush1.msra.mxu0 %v376
    %1022 = vmatprep.subr.mxu0 %v379
    %1023 = vmatpush1.msra.mxu0 %v378
    %1024 = vmatprep.subr.mxu0 %v381
    %1025 = vmatpush1.msra.mxu0 %v380
    %1026 = vmatprep.subr.mxu0 %v383
    %1027 = vmatpush1.msra.mxu0 %v382
    %1028 = vmatprep.subr.mxu0 %v385
    %1029 = vmatpush1.msra.mxu0 %v384
    %1030 = vmatprep.subr.mxu0 %v387
    %1031 = vmatpush1.msra.mxu0 %v386
    %1032 = vmatprep.subr.mxu0 %v389
    %1033 = vmatpush1.msra.mxu0 %v388
    %1034 = vmatprep.subr.mxu0 %v391
    %1035 = vmatpush1.msra.mxu0 %v390
    %1036 = vmatprep.subr.mxu0 %v393
    %1037 = vmatpush1.msra.mxu0 %v392
    %1038 = vmatprep.subr.mxu0 %v395
    %1039 = vmatpush1.msra.mxu0 %v394
    %1040 = vmatprep.subr.mxu0 %v397
    %1041 = vmatpush1.msra.mxu0 %v396
    %1042 = vmatprep.subr.mxu0 %v399
    %1043 = vmatpush1.msra.mxu0 %v398
    %1044 = vmatprep.subr.mxu0 %v401
    %1045 = vmatpush1.msra.mxu0 %v400
    %1046 = vmatprep.subr.mxu0 %v403
    %1047 = vmatpush1.msra.mxu0 %v402
    %1048 = vmatprep.subr.mxu0 %v405
    %1049 = vmatpush1.msra.mxu0 %v404
    %1050 = vmatprep.subr.mxu0 %v407
    %1051 = vmatpush1.msra.mxu0 %v406
    %1052 = vmatprep.mubr.f32.mxu0 %v987
    %1053 = vmatmul.mubr.f32.gmra.mrb[0].mxu0 %v986
    %v1054 = vpop.f32.mrb[0].mxu0
    %v1055 = vadd.f32 %v425, %v1054
    %v1056 = vpop.f32.mrb[0].mxu0
    %v1057 = vadd.f32 %v429, %v1056
    %1058 = vdwg.mxu0
    %v1059 = vmul.f32 %v986, %v986
    %v1060 = vmul.f32 %v987, %v987
    %v1061 = vsub.f32 1.0, %v1059
    %v1062 = vsub.f32 1.0, %v1060
    %v1063 = vmul.f32 %v1061, %v437
    %v1064 = vmul.f32 %v1062, %v441
    %v1065 = vadd.f32 %v1063, %v1064
    %1066 = vadd.xlane.f32.xlu0 %v1065
    %v1067 = vpop.xlane.xlu0 %1066
    %v1068 = vmul.f32 %v883, 2.0
    %v1069 = vmul.f32 %v885, 2.0
    %v1070 = vadd.f32 %v797, %v1068
    %v1071 = vadd.f32 %v799, %v1069
    %v1072 = vmul.f32 %v969, 2.0
    %v1073 = vmul.f32 %v971, 2.0
    %v1074 = vadd.f32 %v1070, %v1072
    %v1075 = vadd.f32 %v1071, %v1073
    %v1076 = vadd.f32 %v1074, %v1055
    %v1077 = vadd.f32 %v1075, %v1057
    %v1078 = vmul.f32 %v1076, 0.020833334
    %v1079 = vmul.f32 %v1077, 0.020833334
    %v1080 = vadd.f32 %v724, %v1078
    %v1081 = vadd.f32 %v726, %v1079
    %v1082 = vmul.f32 %v814, 2.0
    %v1083 = vmul.f32 %v815, 2.0
    %v1084 = vadd.f32 %v728, %v1082
    %v1085 = vadd.f32 %v729, %v1083
    %v1086 = vmul.f32 %v900, 2.0
    %v1087 = vmul.f32 %v901, 2.0
    %v1088 = vadd.f32 %v1084, %v1086
    %v1089 = vadd.f32 %v1085, %v1087
    %v1090 = vadd.f32 %v1088, %v986
    %v1091 = vadd.f32 %v1089, %v987
    %v1092 = vadd.f32 %v1090, 0.0
    %v1093 = vadd.f32 %v1091, 0.0
    %v1094 = vmul.f32 %v895, 2.0
    %v1095 = vadd.f32 %v809, %v1094
    %v1096 = vmul.f32 %v981, 2.0
    %v1097 = vadd.f32 %v1095, %v1096
    %v1098 = vadd.f32 %v1097, %v1067
    %v1099 = vmul.f32 %v1098, 0.020833334
    %v1100 = vadd.f32 %v1099, 0.0
    %v1101 = vtanh.pop %v1080
    %v1102 = vtanh.pop %v1081
    %1103 = vmatprep.subr.mxu0 %v345
    %1104 = vmatpush1.msra.mxu0 %v344
    %1105 = vmatprep.subr.mxu0 %v347
    %1106 = vmatpush1.msra.mxu0 %v346
    %1107 = vmatprep.subr.mxu0 %v349
    %1108 = vmatpush1.msra.mxu0 %v348
    %1109 = vmatprep.subr.mxu0 %v351
    %1110 = vmatpush1.msra.mxu0 %v350
    %1111 = vmatprep.subr.mxu0 %v353
    %1112 = vmatpush1.msra.mxu0 %v352
    %1113 = vmatprep.subr.mxu0 %v355
    %1114 = vmatpush1.msra.mxu0 %v354
    %1115 = vmatprep.subr.mxu0 %v357
    %1116 = vmatpush1.msra.mxu0 %v356
    %1117 = vmatprep.subr.mxu0 %v359
    %1118 = vmatpush1.msra.mxu0 %v358
    %1119 = vmatprep.subr.mxu0 %v361
    %1120 = vmatpush1.msra.mxu0 %v360
    %1121 = vmatprep.subr.mxu0 %v363
    %1122 = vmatpush1.msra.mxu0 %v362
    %1123 = vmatprep.subr.mxu0 %v365
    %1124 = vmatpush1.msra.mxu0 %v364
    %1125 = vmatprep.subr.mxu0 %v367
    %1126 = vmatpush1.msra.mxu0 %v366
    %1127 = vmatprep.subr.mxu0 %v369
    %1128 = vmatpush1.msra.mxu0 %v368
    %1129 = vmatprep.subr.mxu0 %v371
    %1130 = vmatpush1.msra.mxu0 %v370
    %1131 = vmatprep.subr.mxu0 %v373
    %1132 = vmatpush1.msra.mxu0 %v372
    %1133 = vmatprep.subr.mxu0 %v375
    %1134 = vmatpush1.msra.mxu0 %v374
    %1135 = vmatprep.subr.mxu0 %v377
    %1136 = vmatpush1.msra.mxu0 %v376
    %1137 = vmatprep.subr.mxu0 %v379
    %1138 = vmatpush1.msra.mxu0 %v378
    %1139 = vmatprep.subr.mxu0 %v381
    %1140 = vmatpush1.msra.mxu0 %v380
    %1141 = vmatprep.subr.mxu0 %v383
    %1142 = vmatpush1.msra.mxu0 %v382
    %1143 = vmatprep.subr.mxu0 %v385
    %1144 = vmatpush1.msra.mxu0 %v384
    %1145 = vmatprep.subr.mxu0 %v387
    %1146 = vmatpush1.msra.mxu0 %v386
    %1147 = vmatprep.subr.mxu0 %v389
    %1148 = vmatpush1.msra.mxu0 %v388
    %1149 = vmatprep.subr.mxu0 %v391
    %1150 = vmatpush1.msra.mxu0 %v390
    %1151 = vmatprep.subr.mxu0 %v393
    %1152 = vmatpush1.msra.mxu0 %v392
    %1153 = vmatprep.subr.mxu0 %v395
    %1154 = vmatpush1.msra.mxu0 %v394
    %1155 = vmatprep.subr.mxu0 %v397
    %1156 = vmatpush1.msra.mxu0 %v396
    %1157 = vmatprep.subr.mxu0 %v399
    %1158 = vmatpush1.msra.mxu0 %v398
    %1159 = vmatprep.subr.mxu0 %v401
    %1160 = vmatpush1.msra.mxu0 %v400
    %1161 = vmatprep.subr.mxu0 %v403
    %1162 = vmatpush1.msra.mxu0 %v402
    %1163 = vmatprep.subr.mxu0 %v405
    %1164 = vmatpush1.msra.mxu0 %v404
    %1165 = vmatprep.subr.mxu0 %v407
    %1166 = vmatpush1.msra.mxu0 %v406
    %1167 = vmatprep.mubr.f32.mxu0 %v1102
    %1168 = vmatmul.mubr.f32.gmra.mrb[0].mxu0 %v1101
    %v1169 = vpop.f32.mrb[0].mxu0
    %v1170 = vadd.f32 %v425, %v1169
    %v1171 = vpop.f32.mrb[0].mxu0
    %v1172 = vadd.f32 %v429, %v1171
    %1173 = vdwg.mxu0
    %v1174 = vmul.f32 %v1101, %v1101
    %v1175 = vmul.f32 %v1102, %v1102
    %v1176 = vsub.f32 1.0, %v1174
    %v1177 = vsub.f32 1.0, %v1175
    %v1178 = vmul.f32 %v1176, %v437
    %v1179 = vmul.f32 %v1177, %v441
    %v1180 = vadd.f32 %v1178, %v1179
    %1181 = vadd.xlane.f32.xlu0 %v1180
    %v1182 = vpop.xlane.xlu0 %1181
    %v1183 = vmul.f32 %v1170, 0.0625
    %v1184 = vmul.f32 %v1172, 0.0625
    %v1185 = vadd.f32 %v1080, %v1183
    %v1186 = vadd.f32 %v1081, %v1184
    %v1187 = vtanh.pop %v1185
    %v1188 = vtanh.pop %v1186
    %1189 = vmatprep.subr.mxu0 %v345
    %1190 = vmatpush1.msra.mxu0 %v344
    %1191 = vmatprep.subr.mxu0 %v347
    %1192 = vmatpush1.msra.mxu0 %v346
    %1193 = vmatprep.subr.mxu0 %v349
    %1194 = vmatpush1.msra.mxu0 %v348
    %1195 = vmatprep.subr.mxu0 %v351
    %1196 = vmatpush1.msra.mxu0 %v350
    %1197 = vmatprep.subr.mxu0 %v353
    %1198 = vmatpush1.msra.mxu0 %v352
    %1199 = vmatprep.subr.mxu0 %v355
    %1200 = vmatpush1.msra.mxu0 %v354
    %1201 = vmatprep.subr.mxu0 %v357
    %1202 = vmatpush1.msra.mxu0 %v356
    %1203 = vmatprep.subr.mxu0 %v359
    %1204 = vmatpush1.msra.mxu0 %v358
    %1205 = vmatprep.subr.mxu0 %v361
    %1206 = vmatpush1.msra.mxu0 %v360
    %1207 = vmatprep.subr.mxu0 %v363
    %1208 = vmatpush1.msra.mxu0 %v362
    %1209 = vmatprep.subr.mxu0 %v365
    %1210 = vmatpush1.msra.mxu0 %v364
    %1211 = vmatprep.subr.mxu0 %v367
    %1212 = vmatpush1.msra.mxu0 %v366
    %1213 = vmatprep.subr.mxu0 %v369
    %1214 = vmatpush1.msra.mxu0 %v368
    %1215 = vmatprep.subr.mxu0 %v371
    %1216 = vmatpush1.msra.mxu0 %v370
    %1217 = vmatprep.subr.mxu0 %v373
    %1218 = vmatpush1.msra.mxu0 %v372
    %1219 = vmatprep.subr.mxu0 %v375
    %1220 = vmatpush1.msra.mxu0 %v374
    %1221 = vmatprep.subr.mxu0 %v377
    %1222 = vmatpush1.msra.mxu0 %v376
    %1223 = vmatprep.subr.mxu0 %v379
    %1224 = vmatpush1.msra.mxu0 %v378
    %1225 = vmatprep.subr.mxu0 %v381
    %1226 = vmatpush1.msra.mxu0 %v380
    %1227 = vmatprep.subr.mxu0 %v383
    %1228 = vmatpush1.msra.mxu0 %v382
    %1229 = vmatprep.subr.mxu0 %v385
    %1230 = vmatpush1.msra.mxu0 %v384
    %1231 = vmatprep.subr.mxu0 %v387
    %1232 = vmatpush1.msra.mxu0 %v386
    %1233 = vmatprep.subr.mxu0 %v389
    %1234 = vmatpush1.msra.mxu0 %v388
    %1235 = vmatprep.subr.mxu0 %v391
    %1236 = vmatpush1.msra.mxu0 %v390
    %1237 = vmatprep.subr.mxu0 %v393
    %1238 = vmatpush1.msra.mxu0 %v392
    %1239 = vmatprep.subr.mxu0 %v395
    %1240 = vmatpush1.msra.mxu0 %v394
    %1241 = vmatprep.subr.mxu0 %v397
    %1242 = vmatpush1.msra.mxu0 %v396
    %1243 = vmatprep.subr.mxu0 %v399
    %1244 = vmatpush1.msra.mxu0 %v398
    %1245 = vmatprep.subr.mxu0 %v401
    %1246 = vmatpush1.msra.mxu0 %v400
    %1247 = vmatprep.subr.mxu0 %v403
    %1248 = vmatpush1.msra.mxu0 %v402
    %1249 = vmatprep.subr.mxu0 %v405
    %1250 = vmatpush1.msra.mxu0 %v404
    %1251 = vmatprep.subr.mxu0 %v407
    %1252 = vmatpush1.msra.mxu0 %v406
    %1253 = vmatprep.mubr.f32.mxu0 %v1188
    %1254 = vmatmul.mubr.f32.gmra.mrb[0].mxu0 %v1187
    %v1255 = vpop.f32.mrb[0].mxu0
    %v1256 = vadd.f32 %v425, %v1255
    %v1257 = vpop.f32.mrb[0].mxu0
    %v1258 = vadd.f32 %v429, %v1257
    %1259 = vdwg.mxu0
    %v1260 = vmul.f32 %v1187, %v1187
    %v1261 = vmul.f32 %v1188, %v1188
    %v1262 = vsub.f32 1.0, %v1260
    %v1263 = vsub.f32 1.0, %v1261
    %v1264 = vmul.f32 %v1262, %v437
    %v1265 = vmul.f32 %v1263, %v441
    %v1266 = vadd.f32 %v1264, %v1265
    %1267 = vadd.xlane.f32.xlu0 %v1266
    %v1268 = vpop.xlane.xlu0 %1267
    %v1269 = vmul.f32 %v1256, 0.0625
    %v1270 = vmul.f32 %v1258, 0.0625
    %v1271 = vadd.f32 %v1080, %v1269
    %v1272 = vadd.f32 %v1081, %v1270
    %v1273 = vtanh.pop %v1271
    %v1274 = vtanh.pop %v1272
    %1275 = vmatprep.subr.mxu0 %v345
    %1276 = vmatpush1.msra.mxu0 %v344
    %1277 = vmatprep.subr.mxu0 %v347
    %1278 = vmatpush1.msra.mxu0 %v346
    %1279 = vmatprep.subr.mxu0 %v349
    %1280 = vmatpush1.msra.mxu0 %v348
    %1281 = vmatprep.subr.mxu0 %v351
    %1282 = vmatpush1.msra.mxu0 %v350
    %1283 = vmatprep.subr.mxu0 %v353
    %1284 = vmatpush1.msra.mxu0 %v352
    %1285 = vmatprep.subr.mxu0 %v355
    %1286 = vmatpush1.msra.mxu0 %v354
    %1287 = vmatprep.subr.mxu0 %v357
    %1288 = vmatpush1.msra.mxu0 %v356
    %1289 = vmatprep.subr.mxu0 %v359
    %1290 = vmatpush1.msra.mxu0 %v358
    %1291 = vmatprep.subr.mxu0 %v361
    %1292 = vmatpush1.msra.mxu0 %v360
    %1293 = vmatprep.subr.mxu0 %v363
    %1294 = vmatpush1.msra.mxu0 %v362
    %1295 = vmatprep.subr.mxu0 %v365
    %1296 = vmatpush1.msra.mxu0 %v364
    %1297 = vmatprep.subr.mxu0 %v367
    %1298 = vmatpush1.msra.mxu0 %v366
    %1299 = vmatprep.subr.mxu0 %v369
    %1300 = vmatpush1.msra.mxu0 %v368
    %1301 = vmatprep.subr.mxu0 %v371
    %1302 = vmatpush1.msra.mxu0 %v370
    %1303 = vmatprep.subr.mxu0 %v373
    %1304 = vmatpush1.msra.mxu0 %v372
    %1305 = vmatprep.subr.mxu0 %v375
    %1306 = vmatpush1.msra.mxu0 %v374
    %1307 = vmatprep.subr.mxu0 %v377
    %1308 = vmatpush1.msra.mxu0 %v376
    %1309 = vmatprep.subr.mxu0 %v379
    %1310 = vmatpush1.msra.mxu0 %v378
    %1311 = vmatprep.subr.mxu0 %v381
    %1312 = vmatpush1.msra.mxu0 %v380
    %1313 = vmatprep.subr.mxu0 %v383
    %1314 = vmatpush1.msra.mxu0 %v382
    %1315 = vmatprep.subr.mxu0 %v385
    %1316 = vmatpush1.msra.mxu0 %v384
    %1317 = vmatprep.subr.mxu0 %v387
    %1318 = vmatpush1.msra.mxu0 %v386
    %1319 = vmatprep.subr.mxu0 %v389
    %1320 = vmatpush1.msra.mxu0 %v388
    %1321 = vmatprep.subr.mxu0 %v391
    %1322 = vmatpush1.msra.mxu0 %v390
    %1323 = vmatprep.subr.mxu0 %v393
    %1324 = vmatpush1.msra.mxu0 %v392
    %1325 = vmatprep.subr.mxu0 %v395
    %1326 = vmatpush1.msra.mxu0 %v394
    %1327 = vmatprep.subr.mxu0 %v397
    %1328 = vmatpush1.msra.mxu0 %v396
    %1329 = vmatprep.subr.mxu0 %v399
    %1330 = vmatpush1.msra.mxu0 %v398
    %1331 = vmatprep.subr.mxu0 %v401
    %1332 = vmatpush1.msra.mxu0 %v400
    %1333 = vmatprep.subr.mxu0 %v403
    %1334 = vmatpush1.msra.mxu0 %v402
    %1335 = vmatprep.subr.mxu0 %v405
    %1336 = vmatpush1.msra.mxu0 %v404
    %1337 = vmatprep.subr.mxu0 %v407
    %1338 = vmatpush1.msra.mxu0 %v406
    %1339 = vmatprep.mubr.f32.mxu0 %v1274
    %1340 = vmatmul.mubr.f32.gmra.mrb[0].mxu0 %v1273
    %v1341 = vpop.f32.mrb[0].mxu0
    %v1342 = vadd.f32 %v425, %v1341
    %v1343 = vpop.f32.mrb[0].mxu0
    %v1344 = vadd.f32 %v429, %v1343
    %1345 = vdwg.mxu0
    %v1346 = vmul.f32 %v1273, %v1273
    %v1347 = vmul.f32 %v1274, %v1274
    %v1348 = vsub.f32 1.0, %v1346
    %v1349 = vsub.f32 1.0, %v1347
    %v1350 = vmul.f32 %v1348, %v437
    %v1351 = vmul.f32 %v1349, %v441
    %v1352 = vadd.f32 %v1350, %v1351
    %1353 = vadd.xlane.f32.xlu0 %v1352
    %v1354 = vpop.xlane.xlu0 %1353
    %v1355 = vmul.f32 %v1342, 0.125
    %v1356 = vmul.f32 %v1344, 0.125
    %v1357 = vadd.f32 %v1080, %v1355
    %v1358 = vadd.f32 %v1081, %v1356
    %v1359 = vtanh.pop %v1357
    %v1360 = vtanh.pop %v1358
    %1361 = vmatprep.subr.mxu0 %v345
    %1362 = vmatpush1.msra.mxu0 %v344
    %1363 = vmatprep.subr.mxu0 %v347
    %1364 = vmatpush1.msra.mxu0 %v346
    %1365 = vmatprep.subr.mxu0 %v349
    %1366 = vmatpush1.msra.mxu0 %v348
    %1367 = vmatprep.subr.mxu0 %v351
    %1368 = vmatpush1.msra.mxu0 %v350
    %1369 = vmatprep.subr.mxu0 %v353
    %1370 = vmatpush1.msra.mxu0 %v352
    %1371 = vmatprep.subr.mxu0 %v355
    %1372 = vmatpush1.msra.mxu0 %v354
    %1373 = vmatprep.subr.mxu0 %v357
    %1374 = vmatpush1.msra.mxu0 %v356
    %1375 = vmatprep.subr.mxu0 %v359
    %1376 = vmatpush1.msra.mxu0 %v358
    %1377 = vmatprep.subr.mxu0 %v361
    %1378 = vmatpush1.msra.mxu0 %v360
    %1379 = vmatprep.subr.mxu0 %v363
    %1380 = vmatpush1.msra.mxu0 %v362
    %1381 = vmatprep.subr.mxu0 %v365
    %1382 = vmatpush1.msra.mxu0 %v364
    %1383 = vmatprep.subr.mxu0 %v367
    %1384 = vmatpush1.msra.mxu0 %v366
    %1385 = vmatprep.subr.mxu0 %v369
    %1386 = vmatpush1.msra.mxu0 %v368
    %1387 = vmatprep.subr.mxu0 %v371
    %1388 = vmatpush1.msra.mxu0 %v370
    %1389 = vmatprep.subr.mxu0 %v373
    %1390 = vmatpush1.msra.mxu0 %v372
    %1391 = vmatprep.subr.mxu0 %v375
    %1392 = vmatpush1.msra.mxu0 %v374
    %1393 = vmatprep.subr.mxu0 %v377
    %1394 = vmatpush1.msra.mxu0 %v376
    %1395 = vmatprep.subr.mxu0 %v379
    %1396 = vmatpush1.msra.mxu0 %v378
    %1397 = vmatprep.subr.mxu0 %v381
    %1398 = vmatpush1.msra.mxu0 %v380
    %1399 = vmatprep.subr.mxu0 %v383
    %1400 = vmatpush1.msra.mxu0 %v382
    %1401 = vmatprep.subr.mxu0 %v385
    %1402 = vmatpush1.msra.mxu0 %v384
    %1403 = vmatprep.subr.mxu0 %v387
    %1404 = vmatpush1.msra.mxu0 %v386
    %1405 = vmatprep.subr.mxu0 %v389
    %1406 = vmatpush1.msra.mxu0 %v388
    %1407 = vmatprep.subr.mxu0 %v391
    %1408 = vmatpush1.msra.mxu0 %v390
    %1409 = vmatprep.subr.mxu0 %v393
    %1410 = vmatpush1.msra.mxu0 %v392
    %1411 = vmatprep.subr.mxu0 %v395
    %1412 = vmatpush1.msra.mxu0 %v394
    %1413 = vmatprep.subr.mxu0 %v397
    %1414 = vmatpush1.msra.mxu0 %v396
    %1415 = vmatprep.subr.mxu0 %v399
    %1416 = vmatpush1.msra.mxu0 %v398
    %1417 = vmatprep.subr.mxu0 %v401
    %1418 = vmatpush1.msra.mxu0 %v400
    %1419 = vmatprep.subr.mxu0 %v403
    %1420 = vmatpush1.msra.mxu0 %v402
    %1421 = vmatprep.subr.mxu0 %v405
    %1422 = vmatpush1.msra.mxu0 %v404
    %1423 = vmatprep.subr.mxu0 %v407
    %1424 = vmatpush1.msra.mxu0 %v406
    %1425 = vmatprep.mubr.f32.mxu0 %v1360
    %1426 = vmatmul.mubr.f32.gmra.mrb[0].mxu0 %v1359
    %v1427 = vpop.f32.mrb[0].mxu0
    %v1428 = vadd.f32 %v425, %v1427
    %v1429 = vpop.f32.mrb[0].mxu0
    %v1430 = vadd.f32 %v429, %v1429
    %1431 = vdwg.mxu0
    %v1432 = vmul.f32 %v1359, %v1359
    %v1433 = vmul.f32 %v1360, %v1360
    %v1434 = vsub.f32 1.0, %v1432
    %v1435 = vsub.f32 1.0, %v1433
    %v1436 = vmul.f32 %v1434, %v437
    %v1437 = vmul.f32 %v1435, %v441
    %v1438 = vadd.f32 %v1436, %v1437
    %1439 = vadd.xlane.f32.xlu0 %v1438
    %v1440 = vpop.xlane.xlu0 %1439
    %v1441 = vmul.f32 %v1256, 2.0
    %v1442 = vmul.f32 %v1258, 2.0
    %v1443 = vadd.f32 %v1170, %v1441
    %v1444 = vadd.f32 %v1172, %v1442
    %v1445 = vmul.f32 %v1342, 2.0
    %v1446 = vmul.f32 %v1344, 2.0
    %v1447 = vadd.f32 %v1443, %v1445
    %v1448 = vadd.f32 %v1444, %v1446
    %v1449 = vadd.f32 %v1447, %v1428
    %v1450 = vadd.f32 %v1448, %v1430
    %v1451 = vmul.f32 %v1449, 0.020833334
    %v1452 = vmul.f32 %v1450, 0.020833334
    %v1453 = vadd.f32 %v1080, %v1451
    %v1454 = vadd.f32 %v1081, %v1452
    %v1455 = vmul.f32 %v1187, 2.0
    %v1456 = vmul.f32 %v1188, 2.0
    %v1457 = vadd.f32 %v1101, %v1455
    %v1458 = vadd.f32 %v1102, %v1456
    %v1459 = vmul.f32 %v1273, 2.0
    %v1460 = vmul.f32 %v1274, 2.0
    %v1461 = vadd.f32 %v1457, %v1459
    %v1462 = vadd.f32 %v1458, %v1460
    %v1463 = vadd.f32 %v1461, %v1359
    %v1464 = vadd.f32 %v1462, %v1360
    %v1465 = vadd.f32 %v1092, %v1463
    %v1466 = vadd.f32 %v1093, %v1464
    %v1467 = vmul.f32 %v1268, 2.0
    %v1468 = vadd.f32 %v1182, %v1467
    %v1469 = vmul.f32 %v1354, 2.0
    %v1470 = vadd.f32 %v1468, %v1469
    %v1471 = vadd.f32 %v1470, %v1440
    %v1472 = vmul.f32 %v1471, 0.020833334
    %v1473 = vadd.f32 %v1100, %v1472
    %v1474 = vtanh.pop %v1453
    %v1475 = vtanh.pop %v1454
    %1476 = vmatprep.subr.mxu0 %v345
    %1477 = vmatpush1.msra.mxu0 %v344
    %1478 = vmatprep.subr.mxu0 %v347
    %1479 = vmatpush1.msra.mxu0 %v346
    %1480 = vmatprep.subr.mxu0 %v349
    %1481 = vmatpush1.msra.mxu0 %v348
    %1482 = vmatprep.subr.mxu0 %v351
    %1483 = vmatpush1.msra.mxu0 %v350
    %1484 = vmatprep.subr.mxu0 %v353
    %1485 = vmatpush1.msra.mxu0 %v352
    %1486 = vmatprep.subr.mxu0 %v355
    %1487 = vmatpush1.msra.mxu0 %v354
    %1488 = vmatprep.subr.mxu0 %v357
    %1489 = vmatpush1.msra.mxu0 %v356
    %1490 = vmatprep.subr.mxu0 %v359
    %1491 = vmatpush1.msra.mxu0 %v358
    %1492 = vmatprep.subr.mxu0 %v361
    %1493 = vmatpush1.msra.mxu0 %v360
    %1494 = vmatprep.subr.mxu0 %v363
    %1495 = vmatpush1.msra.mxu0 %v362
    %1496 = vmatprep.subr.mxu0 %v365
    %1497 = vmatpush1.msra.mxu0 %v364
    %1498 = vmatprep.subr.mxu0 %v367
    %1499 = vmatpush1.msra.mxu0 %v366
    %1500 = vmatprep.subr.mxu0 %v369
    %1501 = vmatpush1.msra.mxu0 %v368
    %1502 = vmatprep.subr.mxu0 %v371
    %1503 = vmatpush1.msra.mxu0 %v370
    %1504 = vmatprep.subr.mxu0 %v373
    %1505 = vmatpush1.msra.mxu0 %v372
    %1506 = vmatprep.subr.mxu0 %v375
    %1507 = vmatpush1.msra.mxu0 %v374
    %1508 = vmatprep.subr.mxu0 %v377
    %1509 = vmatpush1.msra.mxu0 %v376
    %1510 = vmatprep.subr.mxu0 %v379
    %1511 = vmatpush1.msra.mxu0 %v378
    %1512 = vmatprep.subr.mxu0 %v381
    %1513 = vmatpush1.msra.mxu0 %v380
    %1514 = vmatprep.subr.mxu0 %v383
    %1515 = vmatpush1.msra.mxu0 %v382
    %1516 = vmatprep.subr.mxu0 %v385
    %1517 = vmatpush1.msra.mxu0 %v384
    %1518 = vmatprep.subr.mxu0 %v387
    %1519 = vmatpush1.msra.mxu0 %v386
    %1520 = vmatprep.subr.mxu0 %v389
    %1521 = vmatpush1.msra.mxu0 %v388
    %1522 = vmatprep.subr.mxu0 %v391
    %1523 = vmatpush1.msra.mxu0 %v390
    %1524 = vmatprep.subr.mxu0 %v393
    %1525 = vmatpush1.msra.mxu0 %v392
    %1526 = vmatprep.subr.mxu0 %v395
    %1527 = vmatpush1.msra.mxu0 %v394
    %1528 = vmatprep.subr.mxu0 %v397
    %1529 = vmatpush1.msra.mxu0 %v396
    %1530 = vmatprep.subr.mxu0 %v399
    %1531 = vmatpush1.msra.mxu0 %v398
    %1532 = vmatprep.subr.mxu0 %v401
    %1533 = vmatpush1.msra.mxu0 %v400
    %1534 = vmatprep.subr.mxu0 %v403
    %1535 = vmatpush1.msra.mxu0 %v402
    %1536 = vmatprep.subr.mxu0 %v405
    %1537 = vmatpush1.msra.mxu0 %v404
    %1538 = vmatprep.subr.mxu0 %v407
    %1539 = vmatpush1.msra.mxu0 %v406
    %1540 = vmatprep.mubr.f32.mxu0 %v1475
    %1541 = vmatmul.mubr.f32.gmra.mrb[0].mxu0 %v1474
    %v1542 = vpop.f32.mrb[0].mxu0
    %v1543 = vadd.f32 %v425, %v1542
    %v1544 = vpop.f32.mrb[0].mxu0
    %v1545 = vadd.f32 %v429, %v1544
    %1546 = vdwg.mxu0
    %v1547 = vmul.f32 %v1474, %v1474
    %v1548 = vmul.f32 %v1475, %v1475
    %v1549 = vsub.f32 1.0, %v1547
    %v1550 = vsub.f32 1.0, %v1548
    %v1551 = vmul.f32 %v1549, %v437
    %v1552 = vmul.f32 %v1550, %v441
    %v1553 = vadd.f32 %v1551, %v1552
    %1554 = vadd.xlane.f32.xlu0 %v1553
    %v1555 = vpop.xlane.xlu0 %1554
    %v1556 = vmul.f32 %v1543, 0.0625
    %v1557 = vmul.f32 %v1545, 0.0625
    %v1558 = vadd.f32 %v1453, %v1556
    %v1559 = vadd.f32 %v1454, %v1557
    %v1560 = vtanh.pop %v1558
    %v1561 = vtanh.pop %v1559
    %1562 = vmatprep.subr.mxu0 %v345
    %1563 = vmatpush1.msra.mxu0 %v344
    %1564 = vmatprep.subr.mxu0 %v347
    %1565 = vmatpush1.msra.mxu0 %v346
    %1566 = vmatprep.subr.mxu0 %v349
    %1567 = vmatpush1.msra.mxu0 %v348
    %1568 = vmatprep.subr.mxu0 %v351
    %1569 = vmatpush1.msra.mxu0 %v350
    %1570 = vmatprep.subr.mxu0 %v353
    %1571 = vmatpush1.msra.mxu0 %v352
    %1572 = vmatprep.subr.mxu0 %v355
    %1573 = vmatpush1.msra.mxu0 %v354
    %1574 = vmatprep.subr.mxu0 %v357
    %1575 = vmatpush1.msra.mxu0 %v356
    %1576 = vmatprep.subr.mxu0 %v359
    %1577 = vmatpush1.msra.mxu0 %v358
    %1578 = vmatprep.subr.mxu0 %v361
    %1579 = vmatpush1.msra.mxu0 %v360
    %1580 = vmatprep.subr.mxu0 %v363
    %1581 = vmatpush1.msra.mxu0 %v362
    %1582 = vmatprep.subr.mxu0 %v365
    %1583 = vmatpush1.msra.mxu0 %v364
    %1584 = vmatprep.subr.mxu0 %v367
    %1585 = vmatpush1.msra.mxu0 %v366
    %1586 = vmatprep.subr.mxu0 %v369
    %1587 = vmatpush1.msra.mxu0 %v368
    %1588 = vmatprep.subr.mxu0 %v371
    %1589 = vmatpush1.msra.mxu0 %v370
    %1590 = vmatprep.subr.mxu0 %v373
    %1591 = vmatpush1.msra.mxu0 %v372
    %1592 = vmatprep.subr.mxu0 %v375
    %1593 = vmatpush1.msra.mxu0 %v374
    %1594 = vmatprep.subr.mxu0 %v377
    %1595 = vmatpush1.msra.mxu0 %v376
    %1596 = vmatprep.subr.mxu0 %v379
    %1597 = vmatpush1.msra.mxu0 %v378
    %1598 = vmatprep.subr.mxu0 %v381
    %1599 = vmatpush1.msra.mxu0 %v380
    %1600 = vmatprep.subr.mxu0 %v383
    %1601 = vmatpush1.msra.mxu0 %v382
    %1602 = vmatprep.subr.mxu0 %v385
    %1603 = vmatpush1.msra.mxu0 %v384
    %1604 = vmatprep.subr.mxu0 %v387
    %1605 = vmatpush1.msra.mxu0 %v386
    %1606 = vmatprep.subr.mxu0 %v389
    %1607 = vmatpush1.msra.mxu0 %v388
    %1608 = vmatprep.subr.mxu0 %v391
    %1609 = vmatpush1.msra.mxu0 %v390
    %1610 = vmatprep.subr.mxu0 %v393
    %1611 = vmatpush1.msra.mxu0 %v392
    %1612 = vmatprep.subr.mxu0 %v395
    %1613 = vmatpush1.msra.mxu0 %v394
    %1614 = vmatprep.subr.mxu0 %v397
    %1615 = vmatpush1.msra.mxu0 %v396
    %1616 = vmatprep.subr.mxu0 %v399
    %1617 = vmatpush1.msra.mxu0 %v398
    %1618 = vmatprep.subr.mxu0 %v401
    %1619 = vmatpush1.msra.mxu0 %v400
    %1620 = vmatprep.subr.mxu0 %v403
    %1621 = vmatpush1.msra.mxu0 %v402
    %1622 = vmatprep.subr.mxu0 %v405
    %1623 = vmatpush1.msra.mxu0 %v404
    %1624 = vmatprep.subr.mxu0 %v407
    %1625 = vmatpush1.msra.mxu0 %v406
    %1626 = vmatprep.mubr.f32.mxu0 %v1561
    %1627 = vmatmul.mubr.f32.gmra.mrb[0].mxu0 %v1560
    %v1628 = vpop.f32.mrb[0].mxu0
    %v1629 = vadd.f32 %v425, %v1628
    %v1630 = vpop.f32.mrb[0].mxu0
    %v1631 = vadd.f32 %v429, %v1630
    %1632 = vdwg.mxu0
    %v1633 = vmul.f32 %v1560, %v1560
    %v1634 = vmul.f32 %v1561, %v1561
    %v1635 = vsub.f32 1.0, %v1633
    %v1636 = vsub.f32 1.0, %v1634
    %v1637 = vmul.f32 %v1635, %v437
    %v1638 = vmul.f32 %v1636, %v441
    %v1639 = vadd.f32 %v1637, %v1638
    %1640 = vadd.xlane.f32.xlu0 %v1639
    %v1641 = vpop.xlane.xlu0 %1640
    %v1642 = vmul.f32 %v1629, 0.0625
    %v1643 = vmul.f32 %v1631, 0.0625
    %v1644 = vadd.f32 %v1453, %v1642
    %v1645 = vadd.f32 %v1454, %v1643
    %v1646 = vtanh.pop %v1644
    %v1647 = vtanh.pop %v1645
    %1648 = vmatprep.subr.mxu0 %v345
    %1649 = vmatpush1.msra.mxu0 %v344
    %1650 = vmatprep.subr.mxu0 %v347
    %1651 = vmatpush1.msra.mxu0 %v346
    %1652 = vmatprep.subr.mxu0 %v349
    %1653 = vmatpush1.msra.mxu0 %v348
    %1654 = vmatprep.subr.mxu0 %v351
    %1655 = vmatpush1.msra.mxu0 %v350
    %1656 = vmatprep.subr.mxu0 %v353
    %1657 = vmatpush1.msra.mxu0 %v352
    %1658 = vmatprep.subr.mxu0 %v355
    %1659 = vmatpush1.msra.mxu0 %v354
    %1660 = vmatprep.subr.mxu0 %v357
    %1661 = vmatpush1.msra.mxu0 %v356
    %1662 = vmatprep.subr.mxu0 %v359
    %1663 = vmatpush1.msra.mxu0 %v358
    %1664 = vmatprep.subr.mxu0 %v361
    %1665 = vmatpush1.msra.mxu0 %v360
    %1666 = vmatprep.subr.mxu0 %v363
    %1667 = vmatpush1.msra.mxu0 %v362
    %1668 = vmatprep.subr.mxu0 %v365
    %1669 = vmatpush1.msra.mxu0 %v364
    %1670 = vmatprep.subr.mxu0 %v367
    %1671 = vmatpush1.msra.mxu0 %v366
    %1672 = vmatprep.subr.mxu0 %v369
    %1673 = vmatpush1.msra.mxu0 %v368
    %1674 = vmatprep.subr.mxu0 %v371
    %1675 = vmatpush1.msra.mxu0 %v370
    %1676 = vmatprep.subr.mxu0 %v373
    %1677 = vmatpush1.msra.mxu0 %v372
    %1678 = vmatprep.subr.mxu0 %v375
    %1679 = vmatpush1.msra.mxu0 %v374
    %1680 = vmatprep.subr.mxu0 %v377
    %1681 = vmatpush1.msra.mxu0 %v376
    %1682 = vmatprep.subr.mxu0 %v379
    %1683 = vmatpush1.msra.mxu0 %v378
    %1684 = vmatprep.subr.mxu0 %v381
    %1685 = vmatpush1.msra.mxu0 %v380
    %1686 = vmatprep.subr.mxu0 %v383
    %1687 = vmatpush1.msra.mxu0 %v382
    %1688 = vmatprep.subr.mxu0 %v385
    %1689 = vmatpush1.msra.mxu0 %v384
    %1690 = vmatprep.subr.mxu0 %v387
    %1691 = vmatpush1.msra.mxu0 %v386
    %1692 = vmatprep.subr.mxu0 %v389
    %1693 = vmatpush1.msra.mxu0 %v388
    %1694 = vmatprep.subr.mxu0 %v391
    %1695 = vmatpush1.msra.mxu0 %v390
    %1696 = vmatprep.subr.mxu0 %v393
    %1697 = vmatpush1.msra.mxu0 %v392
    %1698 = vmatprep.subr.mxu0 %v395
    %1699 = vmatpush1.msra.mxu0 %v394
    %1700 = vmatprep.subr.mxu0 %v397
    %1701 = vmatpush1.msra.mxu0 %v396
    %1702 = vmatprep.subr.mxu0 %v399
    %1703 = vmatpush1.msra.mxu0 %v398
    %1704 = vmatprep.subr.mxu0 %v401
    %1705 = vmatpush1.msra.mxu0 %v400
    %1706 = vmatprep.subr.mxu0 %v403
    %1707 = vmatpush1.msra.mxu0 %v402
    %1708 = vmatprep.subr.mxu0 %v405
    %1709 = vmatpush1.msra.mxu0 %v404
    %1710 = vmatprep.subr.mxu0 %v407
    %1711 = vmatpush1.msra.mxu0 %v406
    %1712 = vmatprep.mubr.f32.mxu0 %v1647
    %1713 = vmatmul.mubr.f32.gmra.mrb[0].mxu0 %v1646
    %v1714 = vpop.f32.mrb[0].mxu0
    %v1715 = vadd.f32 %v425, %v1714
    %v1716 = vpop.f32.mrb[0].mxu0
    %v1717 = vadd.f32 %v429, %v1716
    %1718 = vdwg.mxu0
    %v1719 = vmul.f32 %v1646, %v1646
    %v1720 = vmul.f32 %v1647, %v1647
    %v1721 = vsub.f32 1.0, %v1719
    %v1722 = vsub.f32 1.0, %v1720
    %v1723 = vmul.f32 %v1721, %v437
    %v1724 = vmul.f32 %v1722, %v441
    %v1725 = vadd.f32 %v1723, %v1724
    %1726 = vadd.xlane.f32.xlu0 %v1725
    %v1727 = vpop.xlane.xlu0 %1726
    %v1728 = vmul.f32 %v1715, 0.125
    %v1729 = vmul.f32 %v1717, 0.125
    %v1730 = vadd.f32 %v1453, %v1728
    %v1731 = vadd.f32 %v1454, %v1729
    %v1732 = vtanh.pop %v1730
    %v1733 = vtanh.pop %v1731
    %1734 = vmatprep.subr.mxu0 %v345
    %1735 = vmatpush1.msra.mxu0 %v344
    %1736 = vmatprep.subr.mxu0 %v347
    %1737 = vmatpush1.msra.mxu0 %v346
    %1738 = vmatprep.subr.mxu0 %v349
    %1739 = vmatpush1.msra.mxu0 %v348
    %1740 = vmatprep.subr.mxu0 %v351
    %1741 = vmatpush1.msra.mxu0 %v350
    %1742 = vmatprep.subr.mxu0 %v353
    %1743 = vmatpush1.msra.mxu0 %v352
    %1744 = vmatprep.subr.mxu0 %v355
    %1745 = vmatpush1.msra.mxu0 %v354
    %1746 = vmatprep.subr.mxu0 %v357
    %1747 = vmatpush1.msra.mxu0 %v356
    %1748 = vmatprep.subr.mxu0 %v359
    %1749 = vmatpush1.msra.mxu0 %v358
    %1750 = vmatprep.subr.mxu0 %v361
    %1751 = vmatpush1.msra.mxu0 %v360
    %1752 = vmatprep.subr.mxu0 %v363
    %1753 = vmatpush1.msra.mxu0 %v362
    %1754 = vmatprep.subr.mxu0 %v365
    %1755 = vmatpush1.msra.mxu0 %v364
    %1756 = vmatprep.subr.mxu0 %v367
    %1757 = vmatpush1.msra.mxu0 %v366
    %1758 = vmatprep.subr.mxu0 %v369
    %1759 = vmatpush1.msra.mxu0 %v368
    %1760 = vmatprep.subr.mxu0 %v371
    %1761 = vmatpush1.msra.mxu0 %v370
    %1762 = vmatprep.subr.mxu0 %v373
    %1763 = vmatpush1.msra.mxu0 %v372
    %1764 = vmatprep.subr.mxu0 %v375
    %1765 = vmatpush1.msra.mxu0 %v374
    %1766 = vmatprep.subr.mxu0 %v377
    %1767 = vmatpush1.msra.mxu0 %v376
    %1768 = vmatprep.subr.mxu0 %v379
    %1769 = vmatpush1.msra.mxu0 %v378
    %1770 = vmatprep.subr.mxu0 %v381
    %1771 = vmatpush1.msra.mxu0 %v380
    %1772 = vmatprep.subr.mxu0 %v383
    %1773 = vmatpush1.msra.mxu0 %v382
    %1774 = vmatprep.subr.mxu0 %v385
    %1775 = vmatpush1.msra.mxu0 %v384
    %1776 = vmatprep.subr.mxu0 %v387
    %1777 = vmatpush1.msra.mxu0 %v386
    %1778 = vmatprep.subr.mxu0 %v389
    %1779 = vmatpush1.msra.mxu0 %v388
    %1780 = vmatprep.subr.mxu0 %v391
    %1781 = vmatpush1.msra.mxu0 %v390
    %1782 = vmatprep.subr.mxu0 %v393
    %1783 = vmatpush1.msra.mxu0 %v392
    %1784 = vmatprep.subr.mxu0 %v395
    %1785 = vmatpush1.msra.mxu0 %v394
    %1786 = vmatprep.subr.mxu0 %v397
    %1787 = vmatpush1.msra.mxu0 %v396
    %1788 = vmatprep.subr.mxu0 %v399
    %1789 = vmatpush1.msra.mxu0 %v398
    %1790 = vmatprep.subr.mxu0 %v401
    %1791 = vmatpush1.msra.mxu0 %v400
    %1792 = vmatprep.subr.mxu0 %v403
    %1793 = vmatpush1.msra.mxu0 %v402
    %1794 = vmatprep.subr.mxu0 %v405
    %1795 = vmatpush1.msra.mxu0 %v404
    %1796 = vmatprep.subr.mxu0 %v407
    %1797 = vmatpush1.msra.mxu0 %v406
    %1798 = vmatprep.mubr.f32.mxu0 %v1733
    %1799 = vmatmul.mubr.f32.gmra.mrb[0].mxu0 %v1732
    %v1800 = vpop.f32.mrb[0].mxu0
    %v1801 = vadd.f32 %v425, %v1800
    %v1802 = vpop.f32.mrb[0].mxu0
    %v1803 = vadd.f32 %v429, %v1802
    %1804 = vdwg.mxu0
    %v1805 = vmul.f32 %v1732, %v1732
    %v1806 = vmul.f32 %v1733, %v1733
    %v1807 = vsub.f32 1.0, %v1805
    %v1808 = vsub.f32 1.0, %v1806
    %v1809 = vmul.f32 %v1807, %v437
    %v1810 = vmul.f32 %v1808, %v441
    %v1811 = vadd.f32 %v1809, %v1810
    %1812 = vadd.xlane.f32.xlu0 %v1811
    %v1813 = vpop.xlane.xlu0 %1812
    %v1814 = vmul.f32 %v1629, 2.0
    %v1815 = vmul.f32 %v1631, 2.0
    %v1816 = vadd.f32 %v1543, %v1814
    %v1817 = vadd.f32 %v1545, %v1815
    %v1818 = vmul.f32 %v1715, 2.0
    %v1819 = vmul.f32 %v1717, 2.0
    %v1820 = vadd.f32 %v1816, %v1818
    %v1821 = vadd.f32 %v1817, %v1819
    %v1822 = vadd.f32 %v1820, %v1801
    %v1823 = vadd.f32 %v1821, %v1803
    %v1824 = vmul.f32 %v1822, 0.020833334
    %v1825 = vmul.f32 %v1823, 0.020833334
    %v1826 = vadd.f32 %v1453, %v1824
    %v1827 = vadd.f32 %v1454, %v1825
    %v1828 = vmul.f32 %v1560, 2.0
    %v1829 = vmul.f32 %v1561, 2.0
    %v1830 = vadd.f32 %v1474, %v1828
    %v1831 = vadd.f32 %v1475, %v1829
    %v1832 = vmul.f32 %v1646, 2.0
    %v1833 = vmul.f32 %v1647, 2.0
    %v1834 = vadd.f32 %v1830, %v1832
    %v1835 = vadd.f32 %v1831, %v1833
    %v1836 = vadd.f32 %v1834, %v1732
    %v1837 = vadd.f32 %v1835, %v1733
    %v1838 = vadd.f32 %v1465, %v1836
    %v1839 = vadd.f32 %v1466, %v1837
    %v1840 = vmul.f32 %v1641, 2.0
    %v1841 = vadd.f32 %v1555, %v1840
    %v1842 = vmul.f32 %v1727, 2.0
    %v1843 = vadd.f32 %v1841, %v1842
    %v1844 = vadd.f32 %v1843, %v1813
    %v1845 = vmul.f32 %v1844, 0.020833334
    %v1846 = vadd.f32 %v1473, %v1845
    %v1847 = vtanh.pop %v1826
    %v1848 = vtanh.pop %v1827
    %1849 = vmatprep.subr.mxu0 %v345
    %1850 = vmatpush1.msra.mxu0 %v344
    %1851 = vmatprep.subr.mxu0 %v347
    %1852 = vmatpush1.msra.mxu0 %v346
    %1853 = vmatprep.subr.mxu0 %v349
    %1854 = vmatpush1.msra.mxu0 %v348
    %1855 = vmatprep.subr.mxu0 %v351
    %1856 = vmatpush1.msra.mxu0 %v350
    %1857 = vmatprep.subr.mxu0 %v353
    %1858 = vmatpush1.msra.mxu0 %v352
    %1859 = vmatprep.subr.mxu0 %v355
    %1860 = vmatpush1.msra.mxu0 %v354
    %1861 = vmatprep.subr.mxu0 %v357
    %1862 = vmatpush1.msra.mxu0 %v356
    %1863 = vmatprep.subr.mxu0 %v359
    %1864 = vmatpush1.msra.mxu0 %v358
    %1865 = vmatprep.subr.mxu0 %v361
    %1866 = vmatpush1.msra.mxu0 %v360
    %1867 = vmatprep.subr.mxu0 %v363
    %1868 = vmatpush1.msra.mxu0 %v362
    %1869 = vmatprep.subr.mxu0 %v365
    %1870 = vmatpush1.msra.mxu0 %v364
    %1871 = vmatprep.subr.mxu0 %v367
    %1872 = vmatpush1.msra.mxu0 %v366
    %1873 = vmatprep.subr.mxu0 %v369
    %1874 = vmatpush1.msra.mxu0 %v368
    %1875 = vmatprep.subr.mxu0 %v371
    %1876 = vmatpush1.msra.mxu0 %v370
    %1877 = vmatprep.subr.mxu0 %v373
    %1878 = vmatpush1.msra.mxu0 %v372
    %1879 = vmatprep.subr.mxu0 %v375
    %1880 = vmatpush1.msra.mxu0 %v374
    %1881 = vmatprep.subr.mxu0 %v377
    %1882 = vmatpush1.msra.mxu0 %v376
    %1883 = vmatprep.subr.mxu0 %v379
    %1884 = vmatpush1.msra.mxu0 %v378
    %1885 = vmatprep.subr.mxu0 %v381
    %1886 = vmatpush1.msra.mxu0 %v380
    %1887 = vmatprep.subr.mxu0 %v383
    %1888 = vmatpush1.msra.mxu0 %v382
    %1889 = vmatprep.subr.mxu0 %v385
    %1890 = vmatpush1.msra.mxu0 %v384
    %1891 = vmatprep.subr.mxu0 %v387
    %1892 = vmatpush1.msra.mxu0 %v386
    %1893 = vmatprep.subr.mxu0 %v389
    %1894 = vmatpush1.msra.mxu0 %v388
    %1895 = vmatprep.subr.mxu0 %v391
    %1896 = vmatpush1.msra.mxu0 %v390
    %1897 = vmatprep.subr.mxu0 %v393
    %1898 = vmatpush1.msra.mxu0 %v392
    %1899 = vmatprep.subr.mxu0 %v395
    %1900 = vmatpush1.msra.mxu0 %v394
    %1901 = vmatprep.subr.mxu0 %v397
    %1902 = vmatpush1.msra.mxu0 %v396
    %1903 = vmatprep.subr.mxu0 %v399
    %1904 = vmatpush1.msra.mxu0 %v398
    %1905 = vmatprep.subr.mxu0 %v401
    %1906 = vmatpush1.msra.mxu0 %v400
    %1907 = vmatprep.subr.mxu0 %v403
    %1908 = vmatpush1.msra.mxu0 %v402
    %1909 = vmatprep.subr.mxu0 %v405
    %1910 = vmatpush1.msra.mxu0 %v404
    %1911 = vmatprep.subr.mxu0 %v407
    %1912 = vmatpush1.msra.mxu0 %v406
    %1913 = vmatprep.mubr.f32.mxu0 %v1848
    %1914 = vmatmul.mubr.f32.gmra.mrb[0].mxu0 %v1847
    %v1915 = vpop.f32.mrb[0].mxu0
    %v1916 = vadd.f32 %v425, %v1915
    %v1917 = vpop.f32.mrb[0].mxu0
    %v1918 = vadd.f32 %v429, %v1917
    %1919 = vdwg.mxu0
    %v1920 = vmul.f32 %v1847, %v1847
    %v1921 = vmul.f32 %v1848, %v1848
    %v1922 = vsub.f32 1.0, %v1920
    %v1923 = vsub.f32 1.0, %v1921
    %v1924 = vmul.f32 %v1922, %v437
    %v1925 = vmul.f32 %v1923, %v441
    %v1926 = vadd.f32 %v1924, %v1925
    %1927 = vadd.xlane.f32.xlu0 %v1926
    %v1928 = vpop.xlane.xlu0 %1927
    %v1929 = vmul.f32 %v1916, 0.0625
    %v1930 = vmul.f32 %v1918, 0.0625
    %v1931 = vadd.f32 %v1826, %v1929
    %v1932 = vadd.f32 %v1827, %v1930
    %v1933 = vtanh.pop %v1931
    %v1934 = vtanh.pop %v1932
    %1935 = vmatprep.subr.mxu0 %v345
    %1936 = vmatpush1.msra.mxu0 %v344
    %1937 = vmatprep.subr.mxu0 %v347
    %1938 = vmatpush1.msra.mxu0 %v346
    %1939 = vmatprep.subr.mxu0 %v349
    %1940 = vmatpush1.msra.mxu0 %v348
    %1941 = vmatprep.subr.mxu0 %v351
    %1942 = vmatpush1.msra.mxu0 %v350
    %1943 = vmatprep.subr.mxu0 %v353
    %1944 = vmatpush1.msra.mxu0 %v352
    %1945 = vmatprep.subr.mxu0 %v355
    %1946 = vmatpush1.msra.mxu0 %v354
    %1947 = vmatprep.subr.mxu0 %v357
    %1948 = vmatpush1.msra.mxu0 %v356
    %1949 = vmatprep.subr.mxu0 %v359
    %1950 = vmatpush1.msra.mxu0 %v358
    %1951 = vmatprep.subr.mxu0 %v361
    %1952 = vmatpush1.msra.mxu0 %v360
    %1953 = vmatprep.subr.mxu0 %v363
    %1954 = vmatpush1.msra.mxu0 %v362
    %1955 = vmatprep.subr.mxu0 %v365
    %1956 = vmatpush1.msra.mxu0 %v364
    %1957 = vmatprep.subr.mxu0 %v367
    %1958 = vmatpush1.msra.mxu0 %v366
    %1959 = vmatprep.subr.mxu0 %v369
    %1960 = vmatpush1.msra.mxu0 %v368
    %1961 = vmatprep.subr.mxu0 %v371
    %1962 = vmatpush1.msra.mxu0 %v370
    %1963 = vmatprep.subr.mxu0 %v373
    %1964 = vmatpush1.msra.mxu0 %v372
    %1965 = vmatprep.subr.mxu0 %v375
    %1966 = vmatpush1.msra.mxu0 %v374
    %1967 = vmatprep.subr.mxu0 %v377
    %1968 = vmatpush1.msra.mxu0 %v376
    %1969 = vmatprep.subr.mxu0 %v379
    %1970 = vmatpush1.msra.mxu0 %v378
    %1971 = vmatprep.subr.mxu0 %v381
    %1972 = vmatpush1.msra.mxu0 %v380
    %1973 = vmatprep.subr.mxu0 %v383
    %1974 = vmatpush1.msra.mxu0 %v382
    %1975 = vmatprep.subr.mxu0 %v385
    %1976 = vmatpush1.msra.mxu0 %v384
    %1977 = vmatprep.subr.mxu0 %v387
    %1978 = vmatpush1.msra.mxu0 %v386
    %1979 = vmatprep.subr.mxu0 %v389
    %1980 = vmatpush1.msra.mxu0 %v388
    %1981 = vmatprep.subr.mxu0 %v391
    %1982 = vmatpush1.msra.mxu0 %v390
    %1983 = vmatprep.subr.mxu0 %v393
    %1984 = vmatpush1.msra.mxu0 %v392
    %1985 = vmatprep.subr.mxu0 %v395
    %1986 = vmatpush1.msra.mxu0 %v394
    %1987 = vmatprep.subr.mxu0 %v397
    %1988 = vmatpush1.msra.mxu0 %v396
    %1989 = vmatprep.subr.mxu0 %v399
    %1990 = vmatpush1.msra.mxu0 %v398
    %1991 = vmatprep.subr.mxu0 %v401
    %1992 = vmatpush1.msra.mxu0 %v400
    %1993 = vmatprep.subr.mxu0 %v403
    %1994 = vmatpush1.msra.mxu0 %v402
    %1995 = vmatprep.subr.mxu0 %v405
    %1996 = vmatpush1.msra.mxu0 %v404
    %1997 = vmatprep.subr.mxu0 %v407
    %1998 = vmatpush1.msra.mxu0 %v406
    %1999 = vmatprep.mubr.f32.mxu0 %v1934
    %2000 = vmatmul.mubr.f32.gmra.mrb[0].mxu0 %v1933
    %v2001 = vpop.f32.mrb[0].mxu0
    %v2002 = vadd.f32 %v425, %v2001
    %v2003 = vpop.f32.mrb[0].mxu0
    %v2004 = vadd.f32 %v429, %v2003
    %2005 = vdwg.mxu0
    %v2006 = vmul.f32 %v1933, %v1933
    %v2007 = vmul.f32 %v1934, %v1934
    %v2008 = vsub.f32 1.0, %v2006
    %v2009 = vsub.f32 1.0, %v2007
    %v2010 = vmul.f32 %v2008, %v437
    %v2011 = vmul.f32 %v2009, %v441
    %v2012 = vadd.f32 %v2010, %v2011
    %2013 = vadd.xlane.f32.xlu0 %v2012
    %v2014 = vpop.xlane.xlu0 %2013
    %v2015 = vmul.f32 %v2002, 0.0625
    %v2016 = vmul.f32 %v2004, 0.0625
    %v2017 = vadd.f32 %v1826, %v2015
    %v2018 = vadd.f32 %v1827, %v2016
    %v2019 = vtanh.pop %v2017
    %v2020 = vtanh.pop %v2018
    %2021 = vmatprep.subr.mxu0 %v345
    %2022 = vmatpush1.msra.mxu0 %v344
    %2023 = vmatprep.subr.mxu0 %v347
    %2024 = vmatpush1.msra.mxu0 %v346
    %2025 = vmatprep.subr.mxu0 %v349
    %2026 = vmatpush1.msra.mxu0 %v348
    %2027 = vmatprep.subr.mxu0 %v351
    %2028 = vmatpush1.msra.mxu0 %v350
    %2029 = vmatprep.subr.mxu0 %v353
    %2030 = vmatpush1.msra.mxu0 %v352
    %2031 = vmatprep.subr.mxu0 %v355
    %2032 = vmatpush1.msra.mxu0 %v354
    %2033 = vmatprep.subr.mxu0 %v357
    %2034 = vmatpush1.msra.mxu0 %v356
    %2035 = vmatprep.subr.mxu0 %v359
    %2036 = vmatpush1.msra.mxu0 %v358
    %2037 = vmatprep.subr.mxu0 %v361
    %2038 = vmatpush1.msra.mxu0 %v360
    %2039 = vmatprep.subr.mxu0 %v363
    %2040 = vmatpush1.msra.mxu0 %v362
    %2041 = vmatprep.subr.mxu0 %v365
    %2042 = vmatpush1.msra.mxu0 %v364
    %2043 = vmatprep.subr.mxu0 %v367
    %2044 = vmatpush1.msra.mxu0 %v366
    %2045 = vmatprep.subr.mxu0 %v369
    %2046 = vmatpush1.msra.mxu0 %v368
    %2047 = vmatprep.subr.mxu0 %v371
    %2048 = vmatpush1.msra.mxu0 %v370
    %2049 = vmatprep.subr.mxu0 %v373
    %2050 = vmatpush1.msra.mxu0 %v372
    %2051 = vmatprep.subr.mxu0 %v375
    %2052 = vmatpush1.msra.mxu0 %v374
    %2053 = vmatprep.subr.mxu0 %v377
    %2054 = vmatpush1.msra.mxu0 %v376
    %2055 = vmatprep.subr.mxu0 %v379
    %2056 = vmatpush1.msra.mxu0 %v378
    %2057 = vmatprep.subr.mxu0 %v381
    %2058 = vmatpush1.msra.mxu0 %v380
    %2059 = vmatprep.subr.mxu0 %v383
    %2060 = vmatpush1.msra.mxu0 %v382
    %2061 = vmatprep.subr.mxu0 %v385
    %2062 = vmatpush1.msra.mxu0 %v384
    %2063 = vmatprep.subr.mxu0 %v387
    %2064 = vmatpush1.msra.mxu0 %v386
    %2065 = vmatprep.subr.mxu0 %v389
    %2066 = vmatpush1.msra.mxu0 %v388
    %2067 = vmatprep.subr.mxu0 %v391
    %2068 = vmatpush1.msra.mxu0 %v390
    %2069 = vmatprep.subr.mxu0 %v393
    %2070 = vmatpush1.msra.mxu0 %v392
    %2071 = vmatprep.subr.mxu0 %v395
    %2072 = vmatpush1.msra.mxu0 %v394
    %2073 = vmatprep.subr.mxu0 %v397
    %2074 = vmatpush1.msra.mxu0 %v396
    %2075 = vmatprep.subr.mxu0 %v399
    %2076 = vmatpush1.msra.mxu0 %v398
    %2077 = vmatprep.subr.mxu0 %v401
    %2078 = vmatpush1.msra.mxu0 %v400
    %2079 = vmatprep.subr.mxu0 %v403
    %2080 = vmatpush1.msra.mxu0 %v402
    %2081 = vmatprep.subr.mxu0 %v405
    %2082 = vmatpush1.msra.mxu0 %v404
    %2083 = vmatprep.subr.mxu0 %v407
    %2084 = vmatpush1.msra.mxu0 %v406
    %2085 = vmatprep.mubr.f32.mxu0 %v2020
    %2086 = vmatmul.mubr.f32.gmra.mrb[0].mxu0 %v2019
    %v2087 = vpop.f32.mrb[0].mxu0
    %v2088 = vadd.f32 %v425, %v2087
    %v2089 = vpop.f32.mrb[0].mxu0
    %v2090 = vadd.f32 %v429, %v2089
    %2091 = vdwg.mxu0
    %v2092 = vmul.f32 %v2019, %v2019
    %v2093 = vmul.f32 %v2020, %v2020
    %v2094 = vsub.f32 1.0, %v2092
    %v2095 = vsub.f32 1.0, %v2093
    %v2096 = vmul.f32 %v2094, %v437
    %v2097 = vmul.f32 %v2095, %v441
    %v2098 = vadd.f32 %v2096, %v2097
    %2099 = vadd.xlane.f32.xlu0 %v2098
    %v2100 = vpop.xlane.xlu0 %2099
    %v2101 = vmul.f32 %v2088, 0.125
    %v2102 = vmul.f32 %v2090, 0.125
    %v2103 = vadd.f32 %v1826, %v2101
    %v2104 = vadd.f32 %v1827, %v2102
    %v2105 = vtanh.pop %v2103
    %v2106 = vtanh.pop %v2104
    %2107 = vmatprep.subr.mxu0 %v345
    %2108 = vmatpush1.msra.mxu0 %v344
    %2109 = vmatprep.subr.mxu0 %v347
    %2110 = vmatpush1.msra.mxu0 %v346
    %2111 = vmatprep.subr.mxu0 %v349
    %2112 = vmatpush1.msra.mxu0 %v348
    %2113 = vmatprep.subr.mxu0 %v351
    %2114 = vmatpush1.msra.mxu0 %v350
    %2115 = vmatprep.subr.mxu0 %v353
    %2116 = vmatpush1.msra.mxu0 %v352
    %2117 = vmatprep.subr.mxu0 %v355
    %2118 = vmatpush1.msra.mxu0 %v354
    %2119 = vmatprep.subr.mxu0 %v357
    %2120 = vmatpush1.msra.mxu0 %v356
    %2121 = vmatprep.subr.mxu0 %v359
    %2122 = vmatpush1.msra.mxu0 %v358
    %2123 = vmatprep.subr.mxu0 %v361
    %2124 = vmatpush1.msra.mxu0 %v360
    %2125 = vmatprep.subr.mxu0 %v363
    %2126 = vmatpush1.msra.mxu0 %v362
    %2127 = vmatprep.subr.mxu0 %v365
    %2128 = vmatpush1.msra.mxu0 %v364
    %2129 = vmatprep.subr.mxu0 %v367
    %2130 = vmatpush1.msra.mxu0 %v366
    %2131 = vmatprep.subr.mxu0 %v369
    %2132 = vmatpush1.msra.mxu0 %v368
    %2133 = vmatprep.subr.mxu0 %v371
    %2134 = vmatpush1.msra.mxu0 %v370
    %2135 = vmatprep.subr.mxu0 %v373
    %2136 = vmatpush1.msra.mxu0 %v372
    %2137 = vmatprep.subr.mxu0 %v375
    %2138 = vmatpush1.msra.mxu0 %v374
    %2139 = vmatprep.subr.mxu0 %v377
    %2140 = vmatpush1.msra.mxu0 %v376
    %2141 = vmatprep.subr.mxu0 %v379
    %2142 = vmatpush1.msra.mxu0 %v378
    %2143 = vmatprep.subr.mxu0 %v381
    %2144 = vmatpush1.msra.mxu0 %v380
    %2145 = vmatprep.subr.mxu0 %v383
    %2146 = vmatpush1.msra.mxu0 %v382
    %2147 = vmatprep.subr.mxu0 %v385
    %2148 = vmatpush1.msra.mxu0 %v384
    %2149 = vmatprep.subr.mxu0 %v387
    %2150 = vmatpush1.msra.mxu0 %v386
    %2151 = vmatprep.subr.mxu0 %v389
    %2152 = vmatpush1.msra.mxu0 %v388
    %2153 = vmatprep.subr.mxu0 %v391
    %2154 = vmatpush1.msra.mxu0 %v390
    %2155 = vmatprep.subr.mxu0 %v393
    %2156 = vmatpush1.msra.mxu0 %v392
    %2157 = vmatprep.subr.mxu0 %v395
    %2158 = vmatpush1.msra.mxu0 %v394
    %2159 = vmatprep.subr.mxu0 %v397
    %2160 = vmatpush1.msra.mxu0 %v396
    %2161 = vmatprep.subr.mxu0 %v399
    %2162 = vmatpush1.msra.mxu0 %v398
    %2163 = vmatprep.subr.mxu0 %v401
    %2164 = vmatpush1.msra.mxu0 %v400
    %2165 = vmatprep.subr.mxu0 %v403
    %2166 = vmatpush1.msra.mxu0 %v402
    %2167 = vmatprep.subr.mxu0 %v405
    %2168 = vmatpush1.msra.mxu0 %v404
    %2169 = vmatprep.subr.mxu0 %v407
    %2170 = vmatpush1.msra.mxu0 %v406
    %2171 = vmatprep.mubr.f32.mxu0 %v2106
    %2172 = vmatmul.mubr.f32.gmra.mrb[0].mxu0 %v2105
    %v2173 = vpop.f32.mrb[0].mxu0
    %v2174 = vadd.f32 %v425, %v2173
    %v2175 = vpop.f32.mrb[0].mxu0
    %v2176 = vadd.f32 %v429, %v2175
    %2177 = vdwg.mxu0
    %v2178 = vmul.f32 %v2105, %v2105
    %v2179 = vmul.f32 %v2106, %v2106
    %v2180 = vsub.f32 1.0, %v2178
    %v2181 = vsub.f32 1.0, %v2179
    %v2182 = vmul.f32 %v2180, %v437
    %v2183 = vmul.f32 %v2181, %v441
    %v2184 = vadd.f32 %v2182, %v2183
    %2185 = vadd.xlane.f32.xlu0 %v2184
    %v2186 = vpop.xlane.xlu0 %2185
    %v2187 = vmul.f32 %v2002, 2.0
    %v2188 = vmul.f32 %v2004, 2.0
    %v2189 = vadd.f32 %v1916, %v2187
    %v2190 = vadd.f32 %v1918, %v2188
    %v2191 = vmul.f32 %v2088, 2.0
    %v2192 = vmul.f32 %v2090, 2.0
    %v2193 = vadd.f32 %v2189, %v2191
    %v2194 = vadd.f32 %v2190, %v2192
    %v2195 = vadd.f32 %v2193, %v2174
    %v2196 = vadd.f32 %v2194, %v2176
    %v2197 = vmul.f32 %v2195, 0.020833334
    %v2198 = vmul.f32 %v2196, 0.020833334
    %v2199 = vadd.f32 %v1826, %v2197
    %v2200 = vadd.f32 %v1827, %v2198
    %v2201 = vmul.f32 %v1933, 2.0
    %v2202 = vmul.f32 %v1934, 2.0
    %v2203 = vadd.f32 %v1847, %v2201
    %v2204 = vadd.f32 %v1848, %v2202
    %v2205 = vmul.f32 %v2019, 2.0
    %v2206 = vmul.f32 %v2020, 2.0
    %v2207 = vadd.f32 %v2203, %v2205
    %v2208 = vadd.f32 %v2204, %v2206
    %v2209 = vadd.f32 %v2207, %v2105
    %v2210 = vadd.f32 %v2208, %v2106
    %v2211 = vadd.f32 %v1838, %v2209
    %v2212 = vadd.f32 %v1839, %v2210
    %v2213 = vmul.f32 %v2014, 2.0
    %v2214 = vadd.f32 %v1928, %v2213
    %v2215 = vmul.f32 %v2100, 2.0
    %v2216 = vadd.f32 %v2214, %v2215
    %v2217 = vadd.f32 %v2216, %v2186
    %v2218 = vmul.f32 %v2217, 0.020833334
    %v2219 = vadd.f32 %v1846, %v2218
    %v2220 = vtanh.pop %v2199
    %v2221 = vtanh.pop %v2200
    %2222 = vmatprep.subr.mxu0 %v345
    %2223 = vmatpush1.msra.mxu0 %v344
    %2224 = vmatprep.subr.mxu0 %v347
    %2225 = vmatpush1.msra.mxu0 %v346
    %2226 = vmatprep.subr.mxu0 %v349
    %2227 = vmatpush1.msra.mxu0 %v348
    %2228 = vmatprep.subr.mxu0 %v351
    %2229 = vmatpush1.msra.mxu0 %v350
    %2230 = vmatprep.subr.mxu0 %v353
    %2231 = vmatpush1.msra.mxu0 %v352
    %2232 = vmatprep.subr.mxu0 %v355
    %2233 = vmatpush1.msra.mxu0 %v354
    %2234 = vmatprep.subr.mxu0 %v357
    %2235 = vmatpush1.msra.mxu0 %v356
    %2236 = vmatprep.subr.mxu0 %v359
    %2237 = vmatpush1.msra.mxu0 %v358
    %2238 = vmatprep.subr.mxu0 %v361
    %2239 = vmatpush1.msra.mxu0 %v360
    %2240 = vmatprep.subr.mxu0 %v363
    %2241 = vmatpush1.msra.mxu0 %v362
    %2242 = vmatprep.subr.mxu0 %v365
    %2243 = vmatpush1.msra.mxu0 %v364
    %2244 = vmatprep.subr.mxu0 %v367
    %2245 = vmatpush1.msra.mxu0 %v366
    %2246 = vmatprep.subr.mxu0 %v369
    %2247 = vmatpush1.msra.mxu0 %v368
    %2248 = vmatprep.subr.mxu0 %v371
    %2249 = vmatpush1.msra.mxu0 %v370
    %2250 = vmatprep.subr.mxu0 %v373
    %2251 = vmatpush1.msra.mxu0 %v372
    %2252 = vmatprep.subr.mxu0 %v375
    %2253 = vmatpush1.msra.mxu0 %v374
    %2254 = vmatprep.subr.mxu0 %v377
    %2255 = vmatpush1.msra.mxu0 %v376
    %2256 = vmatprep.subr.mxu0 %v379
    %2257 = vmatpush1.msra.mxu0 %v378
    %2258 = vmatprep.subr.mxu0 %v381
    %2259 = vmatpush1.msra.mxu0 %v380
    %2260 = vmatprep.subr.mxu0 %v383
    %2261 = vmatpush1.msra.mxu0 %v382
    %2262 = vmatprep.subr.mxu0 %v385
    %2263 = vmatpush1.msra.mxu0 %v384
    %2264 = vmatprep.subr.mxu0 %v387
    %2265 = vmatpush1.msra.mxu0 %v386
    %2266 = vmatprep.subr.mxu0 %v389
    %2267 = vmatpush1.msra.mxu0 %v388
    %2268 = vmatprep.subr.mxu0 %v391
    %2269 = vmatpush1.msra.mxu0 %v390
    %2270 = vmatprep.subr.mxu0 %v393
    %2271 = vmatpush1.msra.mxu0 %v392
    %2272 = vmatprep.subr.mxu0 %v395
    %2273 = vmatpush1.msra.mxu0 %v394
    %2274 = vmatprep.subr.mxu0 %v397
    %2275 = vmatpush1.msra.mxu0 %v396
    %2276 = vmatprep.subr.mxu0 %v399
    %2277 = vmatpush1.msra.mxu0 %v398
    %2278 = vmatprep.subr.mxu0 %v401
    %2279 = vmatpush1.msra.mxu0 %v400
    %2280 = vmatprep.subr.mxu0 %v403
    %2281 = vmatpush1.msra.mxu0 %v402
    %2282 = vmatprep.subr.mxu0 %v405
    %2283 = vmatpush1.msra.mxu0 %v404
    %2284 = vmatprep.subr.mxu0 %v407
    %2285 = vmatpush1.msra.mxu0 %v406
    %2286 = vmatprep.mubr.f32.mxu0 %v2221
    %2287 = vmatmul.mubr.f32.gmra.mrb[0].mxu0 %v2220
    %v2288 = vpop.f32.mrb[0].mxu0
    %v2289 = vadd.f32 %v425, %v2288
    %v2290 = vpop.f32.mrb[0].mxu0
    %v2291 = vadd.f32 %v429, %v2290
    %2292 = vdwg.mxu0
    %v2293 = vmul.f32 %v2220, %v2220
    %v2294 = vmul.f32 %v2221, %v2221
    %v2295 = vsub.f32 1.0, %v2293
    %v2296 = vsub.f32 1.0, %v2294
    %v2297 = vmul.f32 %v2295, %v437
    %v2298 = vmul.f32 %v2296, %v441
    %v2299 = vadd.f32 %v2297, %v2298
    %2300 = vadd.xlane.f32.xlu0 %v2299
    %v2301 = vpop.xlane.xlu0 %2300
    %v2302 = vmul.f32 %v2289, 0.0625
    %v2303 = vmul.f32 %v2291, 0.0625
    %v2304 = vadd.f32 %v2199, %v2302
    %v2305 = vadd.f32 %v2200, %v2303
    %v2306 = vtanh.pop %v2304
    %v2307 = vtanh.pop %v2305
    %2308 = vmatprep.subr.mxu0 %v345
    %2309 = vmatpush1.msra.mxu0 %v344
    %2310 = vmatprep.subr.mxu0 %v347
    %2311 = vmatpush1.msra.mxu0 %v346
    %2312 = vmatprep.subr.mxu0 %v349
    %2313 = vmatpush1.msra.mxu0 %v348
    %2314 = vmatprep.subr.mxu0 %v351
    %2315 = vmatpush1.msra.mxu0 %v350
    %2316 = vmatprep.subr.mxu0 %v353
    %2317 = vmatpush1.msra.mxu0 %v352
    %2318 = vmatprep.subr.mxu0 %v355
    %2319 = vmatpush1.msra.mxu0 %v354
    %2320 = vmatprep.subr.mxu0 %v357
    %2321 = vmatpush1.msra.mxu0 %v356
    %2322 = vmatprep.subr.mxu0 %v359
    %2323 = vmatpush1.msra.mxu0 %v358
    %2324 = vmatprep.subr.mxu0 %v361
    %2325 = vmatpush1.msra.mxu0 %v360
    %2326 = vmatprep.subr.mxu0 %v363
    %2327 = vmatpush1.msra.mxu0 %v362
    %2328 = vmatprep.subr.mxu0 %v365
    %2329 = vmatpush1.msra.mxu0 %v364
    %2330 = vmatprep.subr.mxu0 %v367
    %2331 = vmatpush1.msra.mxu0 %v366
    %2332 = vmatprep.subr.mxu0 %v369
    %2333 = vmatpush1.msra.mxu0 %v368
    %2334 = vmatprep.subr.mxu0 %v371
    %2335 = vmatpush1.msra.mxu0 %v370
    %2336 = vmatprep.subr.mxu0 %v373
    %2337 = vmatpush1.msra.mxu0 %v372
    %2338 = vmatprep.subr.mxu0 %v375
    %2339 = vmatpush1.msra.mxu0 %v374
    %2340 = vmatprep.subr.mxu0 %v377
    %2341 = vmatpush1.msra.mxu0 %v376
    %2342 = vmatprep.subr.mxu0 %v379
    %2343 = vmatpush1.msra.mxu0 %v378
    %2344 = vmatprep.subr.mxu0 %v381
    %2345 = vmatpush1.msra.mxu0 %v380
    %2346 = vmatprep.subr.mxu0 %v383
    %2347 = vmatpush1.msra.mxu0 %v382
    %2348 = vmatprep.subr.mxu0 %v385
    %2349 = vmatpush1.msra.mxu0 %v384
    %2350 = vmatprep.subr.mxu0 %v387
    %2351 = vmatpush1.msra.mxu0 %v386
    %2352 = vmatprep.subr.mxu0 %v389
    %2353 = vmatpush1.msra.mxu0 %v388
    %2354 = vmatprep.subr.mxu0 %v391
    %2355 = vmatpush1.msra.mxu0 %v390
    %2356 = vmatprep.subr.mxu0 %v393
    %2357 = vmatpush1.msra.mxu0 %v392
    %2358 = vmatprep.subr.mxu0 %v395
    %2359 = vmatpush1.msra.mxu0 %v394
    %2360 = vmatprep.subr.mxu0 %v397
    %2361 = vmatpush1.msra.mxu0 %v396
    %2362 = vmatprep.subr.mxu0 %v399
    %2363 = vmatpush1.msra.mxu0 %v398
    %2364 = vmatprep.subr.mxu0 %v401
    %2365 = vmatpush1.msra.mxu0 %v400
    %2366 = vmatprep.subr.mxu0 %v403
    %2367 = vmatpush1.msra.mxu0 %v402
    %2368 = vmatprep.subr.mxu0 %v405
    %2369 = vmatpush1.msra.mxu0 %v404
    %2370 = vmatprep.subr.mxu0 %v407
    %2371 = vmatpush1.msra.mxu0 %v406
    %2372 = vmatprep.mubr.f32.mxu0 %v2307
    %2373 = vmatmul.mubr.f32.gmra.mrb[0].mxu0 %v2306
    %v2374 = vpop.f32.mrb[0].mxu0
    %v2375 = vadd.f32 %v425, %v2374
    %v2376 = vpop.f32.mrb[0].mxu0
    %v2377 = vadd.f32 %v429, %v2376
    %2378 = vdwg.mxu0
    %v2379 = vmul.f32 %v2306, %v2306
    %v2380 = vmul.f32 %v2307, %v2307
    %v2381 = vsub.f32 1.0, %v2379
    %v2382 = vsub.f32 1.0, %v2380
    %v2383 = vmul.f32 %v2381, %v437
    %v2384 = vmul.f32 %v2382, %v441
    %v2385 = vadd.f32 %v2383, %v2384
    %2386 = vadd.xlane.f32.xlu0 %v2385
    %v2387 = vpop.xlane.xlu0 %2386
    %v2388 = vmul.f32 %v2375, 0.0625
    %v2389 = vmul.f32 %v2377, 0.0625
    %v2390 = vadd.f32 %v2199, %v2388
    %v2391 = vadd.f32 %v2200, %v2389
    %v2392 = vtanh.pop %v2390
    %v2393 = vtanh.pop %v2391
    %2394 = vmatprep.subr.mxu0 %v345
    %2395 = vmatpush1.msra.mxu0 %v344
    %2396 = vmatprep.subr.mxu0 %v347
    %2397 = vmatpush1.msra.mxu0 %v346
    %2398 = vmatprep.subr.mxu0 %v349
    %2399 = vmatpush1.msra.mxu0 %v348
    %2400 = vmatprep.subr.mxu0 %v351
    %2401 = vmatpush1.msra.mxu0 %v350
    %2402 = vmatprep.subr.mxu0 %v353
    %2403 = vmatpush1.msra.mxu0 %v352
    %2404 = vmatprep.subr.mxu0 %v355
    %2405 = vmatpush1.msra.mxu0 %v354
    %2406 = vmatprep.subr.mxu0 %v357
    %2407 = vmatpush1.msra.mxu0 %v356
    %2408 = vmatprep.subr.mxu0 %v359
    %2409 = vmatpush1.msra.mxu0 %v358
    %2410 = vmatprep.subr.mxu0 %v361
    %2411 = vmatpush1.msra.mxu0 %v360
    %2412 = vmatprep.subr.mxu0 %v363
    %2413 = vmatpush1.msra.mxu0 %v362
    %2414 = vmatprep.subr.mxu0 %v365
    %2415 = vmatpush1.msra.mxu0 %v364
    %2416 = vmatprep.subr.mxu0 %v367
    %2417 = vmatpush1.msra.mxu0 %v366
    %2418 = vmatprep.subr.mxu0 %v369
    %2419 = vmatpush1.msra.mxu0 %v368
    %2420 = vmatprep.subr.mxu0 %v371
    %2421 = vmatpush1.msra.mxu0 %v370
    %2422 = vmatprep.subr.mxu0 %v373
    %2423 = vmatpush1.msra.mxu0 %v372
    %2424 = vmatprep.subr.mxu0 %v375
    %2425 = vmatpush1.msra.mxu0 %v374
    %2426 = vmatprep.subr.mxu0 %v377
    %2427 = vmatpush1.msra.mxu0 %v376
    %2428 = vmatprep.subr.mxu0 %v379
    %2429 = vmatpush1.msra.mxu0 %v378
    %2430 = vmatprep.subr.mxu0 %v381
    %2431 = vmatpush1.msra.mxu0 %v380
    %2432 = vmatprep.subr.mxu0 %v383
    %2433 = vmatpush1.msra.mxu0 %v382
    %2434 = vmatprep.subr.mxu0 %v385
    %2435 = vmatpush1.msra.mxu0 %v384
    %2436 = vmatprep.subr.mxu0 %v387
    %2437 = vmatpush1.msra.mxu0 %v386
    %2438 = vmatprep.subr.mxu0 %v389
    %2439 = vmatpush1.msra.mxu0 %v388
    %2440 = vmatprep.subr.mxu0 %v391
    %2441 = vmatpush1.msra.mxu0 %v390
    %2442 = vmatprep.subr.mxu0 %v393
    %2443 = vmatpush1.msra.mxu0 %v392
    %2444 = vmatprep.subr.mxu0 %v395
    %2445 = vmatpush1.msra.mxu0 %v394
    %2446 = vmatprep.subr.mxu0 %v397
    %2447 = vmatpush1.msra.mxu0 %v396
    %2448 = vmatprep.subr.mxu0 %v399
    %2449 = vmatpush1.msra.mxu0 %v398
    %2450 = vmatprep.subr.mxu0 %v401
    %2451 = vmatpush1.msra.mxu0 %v400
    %2452 = vmatprep.subr.mxu0 %v403
    %2453 = vmatpush1.msra.mxu0 %v402
    %2454 = vmatprep.subr.mxu0 %v405
    %2455 = vmatpush1.msra.mxu0 %v404
    %2456 = vmatprep.subr.mxu0 %v407
    %2457 = vmatpush1.msra.mxu0 %v406
    %2458 = vmatprep.mubr.f32.mxu0 %v2393
    %2459 = vmatmul.mubr.f32.gmra.mrb[0].mxu0 %v2392
    %v2460 = vpop.f32.mrb[0].mxu0
    %v2461 = vadd.f32 %v425, %v2460
    %v2462 = vpop.f32.mrb[0].mxu0
    %v2463 = vadd.f32 %v429, %v2462
    %2464 = vdwg.mxu0
    %v2465 = vmul.f32 %v2392, %v2392
    %v2466 = vmul.f32 %v2393, %v2393
    %v2467 = vsub.f32 1.0, %v2465
    %v2468 = vsub.f32 1.0, %v2466
    %v2469 = vmul.f32 %v2467, %v437
    %v2470 = vmul.f32 %v2468, %v441
    %v2471 = vadd.f32 %v2469, %v2470
    %2472 = vadd.xlane.f32.xlu0 %v2471
    %v2473 = vpop.xlane.xlu0 %2472
    %v2474 = vmul.f32 %v2461, 0.125
    %v2475 = vmul.f32 %v2463, 0.125
    %v2476 = vadd.f32 %v2199, %v2474
    %v2477 = vadd.f32 %v2200, %v2475
    %v2478 = vtanh.pop %v2476
    %v2479 = vtanh.pop %v2477
    %2480 = vmatprep.subr.mxu0 %v345
    %2481 = vmatpush1.msra.mxu0 %v344
    %2482 = vmatprep.subr.mxu0 %v347
    %2483 = vmatpush1.msra.mxu0 %v346
    %2484 = vmatprep.subr.mxu0 %v349
    %2485 = vmatpush1.msra.mxu0 %v348
    %2486 = vmatprep.subr.mxu0 %v351
    %2487 = vmatpush1.msra.mxu0 %v350
    %2488 = vmatprep.subr.mxu0 %v353
    %2489 = vmatpush1.msra.mxu0 %v352
    %2490 = vmatprep.subr.mxu0 %v355
    %2491 = vmatpush1.msra.mxu0 %v354
    %2492 = vmatprep.subr.mxu0 %v357
    %2493 = vmatpush1.msra.mxu0 %v356
    %2494 = vmatprep.subr.mxu0 %v359
    %2495 = vmatpush1.msra.mxu0 %v358
    %2496 = vmatprep.subr.mxu0 %v361
    %2497 = vmatpush1.msra.mxu0 %v360
    %2498 = vmatprep.subr.mxu0 %v363
    %2499 = vmatpush1.msra.mxu0 %v362
    %2500 = vmatprep.subr.mxu0 %v365
    %2501 = vmatpush1.msra.mxu0 %v364
    %2502 = vmatprep.subr.mxu0 %v367
    %2503 = vmatpush1.msra.mxu0 %v366
    %2504 = vmatprep.subr.mxu0 %v369
    %2505 = vmatpush1.msra.mxu0 %v368
    %2506 = vmatprep.subr.mxu0 %v371
    %2507 = vmatpush1.msra.mxu0 %v370
    %2508 = vmatprep.subr.mxu0 %v373
    %2509 = vmatpush1.msra.mxu0 %v372
    %2510 = vmatprep.subr.mxu0 %v375
    %2511 = vmatpush1.msra.mxu0 %v374
    %2512 = vmatprep.subr.mxu0 %v377
    %2513 = vmatpush1.msra.mxu0 %v376
    %2514 = vmatprep.subr.mxu0 %v379
    %2515 = vmatpush1.msra.mxu0 %v378
    %2516 = vmatprep.subr.mxu0 %v381
    %2517 = vmatpush1.msra.mxu0 %v380
    %2518 = vmatprep.subr.mxu0 %v383
    %2519 = vmatpush1.msra.mxu0 %v382
    %2520 = vmatprep.subr.mxu0 %v385
    %2521 = vmatpush1.msra.mxu0 %v384
    %2522 = vmatprep.subr.mxu0 %v387
    %2523 = vmatpush1.msra.mxu0 %v386
    %2524 = vmatprep.subr.mxu0 %v389
    %2525 = vmatpush1.msra.mxu0 %v388
    %2526 = vmatprep.subr.mxu0 %v391
    %2527 = vmatpush1.msra.mxu0 %v390
    %2528 = vmatprep.subr.mxu0 %v393
    %2529 = vmatpush1.msra.mxu0 %v392
    %2530 = vmatprep.subr.mxu0 %v395
    %2531 = vmatpush1.msra.mxu0 %v394
    %2532 = vmatprep.subr.mxu0 %v397
    %2533 = vmatpush1.msra.mxu0 %v396
    %2534 = vmatprep.subr.mxu0 %v399
    %2535 = vmatpush1.msra.mxu0 %v398
    %2536 = vmatprep.subr.mxu0 %v401
    %2537 = vmatpush1.msra.mxu0 %v400
    %2538 = vmatprep.subr.mxu0 %v403
    %2539 = vmatpush1.msra.mxu0 %v402
    %2540 = vmatprep.subr.mxu0 %v405
    %2541 = vmatpush1.msra.mxu0 %v404
    %2542 = vmatprep.subr.mxu0 %v407
    %2543 = vmatpush1.msra.mxu0 %v406
    %2544 = vmatprep.mubr.f32.mxu0 %v2479
    %2545 = vmatmul.mubr.f32.gmra.mrb[0].mxu0 %v2478
    %v2546 = vpop.f32.mrb[0].mxu0
    %v2547 = vadd.f32 %v425, %v2546
    %v2548 = vpop.f32.mrb[0].mxu0
    %v2549 = vadd.f32 %v429, %v2548
    %2550 = vdwg.mxu0
    %v2551 = vmul.f32 %v2478, %v2478
    %v2552 = vmul.f32 %v2479, %v2479
    %v2553 = vsub.f32 1.0, %v2551
    %v2554 = vsub.f32 1.0, %v2552
    %v2555 = vmul.f32 %v2553, %v437
    %v2556 = vmul.f32 %v2554, %v441
    %v2557 = vadd.f32 %v2555, %v2556
    %2558 = vadd.xlane.f32.xlu0 %v2557
    %v2559 = vpop.xlane.xlu0 %2558
    %v2560 = vmul.f32 %v2375, 2.0
    %v2561 = vmul.f32 %v2377, 2.0
    %v2562 = vadd.f32 %v2289, %v2560
    %v2563 = vadd.f32 %v2291, %v2561
    %v2564 = vmul.f32 %v2461, 2.0
    %v2565 = vmul.f32 %v2463, 2.0
    %v2566 = vadd.f32 %v2562, %v2564
    %v2567 = vadd.f32 %v2563, %v2565
    %v2568 = vadd.f32 %v2566, %v2547
    %v2569 = vadd.f32 %v2567, %v2549
    %v2570 = vmul.f32 %v2568, 0.020833334
    %v2571 = vmul.f32 %v2569, 0.020833334
    %v2572 = vadd.f32 %v2199, %v2570
    %v2573 = vadd.f32 %v2200, %v2571
    %v2574 = vmul.f32 %v2306, 2.0
    %v2575 = vmul.f32 %v2307, 2.0
    %v2576 = vadd.f32 %v2220, %v2574
    %v2577 = vadd.f32 %v2221, %v2575
    %v2578 = vmul.f32 %v2392, 2.0
    %v2579 = vmul.f32 %v2393, 2.0
    %v2580 = vadd.f32 %v2576, %v2578
    %v2581 = vadd.f32 %v2577, %v2579
    %v2582 = vadd.f32 %v2580, %v2478
    %v2583 = vadd.f32 %v2581, %v2479
    %v2584 = vadd.f32 %v2211, %v2582
    %v2585 = vadd.f32 %v2212, %v2583
    %v2586 = vmul.f32 %v2387, 2.0
    %v2587 = vadd.f32 %v2301, %v2586
    %v2588 = vmul.f32 %v2473, 2.0
    %v2589 = vadd.f32 %v2587, %v2588
    %v2590 = vadd.f32 %v2589, %v2559
    %v2591 = vmul.f32 %v2590, 0.020833334
    %v2592 = vadd.f32 %v2219, %v2591
    %v2593 = vtanh.pop %v2572
    %v2594 = vtanh.pop %v2573
    %2595 = vmatprep.subr.mxu0 %v345
    %2596 = vmatpush1.msra.mxu0 %v344
    %2597 = vmatprep.subr.mxu0 %v347
    %2598 = vmatpush1.msra.mxu0 %v346
    %2599 = vmatprep.subr.mxu0 %v349
    %2600 = vmatpush1.msra.mxu0 %v348
    %2601 = vmatprep.subr.mxu0 %v351
    %2602 = vmatpush1.msra.mxu0 %v350
    %2603 = vmatprep.subr.mxu0 %v353
    %2604 = vmatpush1.msra.mxu0 %v352
    %2605 = vmatprep.subr.mxu0 %v355
    %2606 = vmatpush1.msra.mxu0 %v354
    %2607 = vmatprep.subr.mxu0 %v357
    %2608 = vmatpush1.msra.mxu0 %v356
    %2609 = vmatprep.subr.mxu0 %v359
    %2610 = vmatpush1.msra.mxu0 %v358
    %2611 = vmatprep.subr.mxu0 %v361
    %2612 = vmatpush1.msra.mxu0 %v360
    %2613 = vmatprep.subr.mxu0 %v363
    %2614 = vmatpush1.msra.mxu0 %v362
    %2615 = vmatprep.subr.mxu0 %v365
    %2616 = vmatpush1.msra.mxu0 %v364
    %2617 = vmatprep.subr.mxu0 %v367
    %2618 = vmatpush1.msra.mxu0 %v366
    %2619 = vmatprep.subr.mxu0 %v369
    %2620 = vmatpush1.msra.mxu0 %v368
    %2621 = vmatprep.subr.mxu0 %v371
    %2622 = vmatpush1.msra.mxu0 %v370
    %2623 = vmatprep.subr.mxu0 %v373
    %2624 = vmatpush1.msra.mxu0 %v372
    %2625 = vmatprep.subr.mxu0 %v375
    %2626 = vmatpush1.msra.mxu0 %v374
    %2627 = vmatprep.subr.mxu0 %v377
    %2628 = vmatpush1.msra.mxu0 %v376
    %2629 = vmatprep.subr.mxu0 %v379
    %2630 = vmatpush1.msra.mxu0 %v378
    %2631 = vmatprep.subr.mxu0 %v381
    %2632 = vmatpush1.msra.mxu0 %v380
    %2633 = vmatprep.subr.mxu0 %v383
    %2634 = vmatpush1.msra.mxu0 %v382
    %2635 = vmatprep.subr.mxu0 %v385
    %2636 = vmatpush1.msra.mxu0 %v384
    %2637 = vmatprep.subr.mxu0 %v387
    %2638 = vmatpush1.msra.mxu0 %v386
    %2639 = vmatprep.subr.mxu0 %v389
    %2640 = vmatpush1.msra.mxu0 %v388
    %2641 = vmatprep.subr.mxu0 %v391
    %2642 = vmatpush1.msra.mxu0 %v390
    %2643 = vmatprep.subr.mxu0 %v393
    %2644 = vmatpush1.msra.mxu0 %v392
    %2645 = vmatprep.subr.mxu0 %v395
    %2646 = vmatpush1.msra.mxu0 %v394
    %2647 = vmatprep.subr.mxu0 %v397
    %2648 = vmatpush1.msra.mxu0 %v396
    %2649 = vmatprep.subr.mxu0 %v399
    %2650 = vmatpush1.msra.mxu0 %v398
    %2651 = vmatprep.subr.mxu0 %v401
    %2652 = vmatpush1.msra.mxu0 %v400
    %2653 = vmatprep.subr.mxu0 %v403
    %2654 = vmatpush1.msra.mxu0 %v402
    %2655 = vmatprep.subr.mxu0 %v405
    %2656 = vmatpush1.msra.mxu0 %v404
    %2657 = vmatprep.subr.mxu0 %v407
    %2658 = vmatpush1.msra.mxu0 %v406
    %2659 = vmatprep.mubr.f32.mxu0 %v2594
    %2660 = vmatmul.mubr.f32.gmra.mrb[0].mxu0 %v2593
    %v2661 = vpop.f32.mrb[0].mxu0
    %v2662 = vadd.f32 %v425, %v2661
    %v2663 = vpop.f32.mrb[0].mxu0
    %v2664 = vadd.f32 %v429, %v2663
    %2665 = vdwg.mxu0
    %v2666 = vmul.f32 %v2593, %v2593
    %v2667 = vmul.f32 %v2594, %v2594
    %v2668 = vsub.f32 1.0, %v2666
    %v2669 = vsub.f32 1.0, %v2667
    %v2670 = vmul.f32 %v2668, %v437
    %v2671 = vmul.f32 %v2669, %v441
    %v2672 = vadd.f32 %v2670, %v2671
    %2673 = vadd.xlane.f32.xlu0 %v2672
    %v2674 = vpop.xlane.xlu0 %2673
    %v2675 = vmul.f32 %v2662, 0.0625
    %v2676 = vmul.f32 %v2664, 0.0625
    %v2677 = vadd.f32 %v2572, %v2675
    %v2678 = vadd.f32 %v2573, %v2676
    %v2679 = vtanh.pop %v2677
    %v2680 = vtanh.pop %v2678
    %2681 = vmatprep.subr.mxu0 %v345
    %2682 = vmatpush1.msra.mxu0 %v344
    %2683 = vmatprep.subr.mxu0 %v347
    %2684 = vmatpush1.msra.mxu0 %v346
    %2685 = vmatprep.subr.mxu0 %v349
    %2686 = vmatpush1.msra.mxu0 %v348
    %2687 = vmatprep.subr.mxu0 %v351
    %2688 = vmatpush1.msra.mxu0 %v350
    %2689 = vmatprep.subr.mxu0 %v353
    %2690 = vmatpush1.msra.mxu0 %v352
    %2691 = vmatprep.subr.mxu0 %v355
    %2692 = vmatpush1.msra.mxu0 %v354
    %2693 = vmatprep.subr.mxu0 %v357
    %2694 = vmatpush1.msra.mxu0 %v356
    %2695 = vmatprep.subr.mxu0 %v359
    %2696 = vmatpush1.msra.mxu0 %v358
    %2697 = vmatprep.subr.mxu0 %v361
    %2698 = vmatpush1.msra.mxu0 %v360
    %2699 = vmatprep.subr.mxu0 %v363
    %2700 = vmatpush1.msra.mxu0 %v362
    %2701 = vmatprep.subr.mxu0 %v365
    %2702 = vmatpush1.msra.mxu0 %v364
    %2703 = vmatprep.subr.mxu0 %v367
    %2704 = vmatpush1.msra.mxu0 %v366
    %2705 = vmatprep.subr.mxu0 %v369
    %2706 = vmatpush1.msra.mxu0 %v368
    %2707 = vmatprep.subr.mxu0 %v371
    %2708 = vmatpush1.msra.mxu0 %v370
    %2709 = vmatprep.subr.mxu0 %v373
    %2710 = vmatpush1.msra.mxu0 %v372
    %2711 = vmatprep.subr.mxu0 %v375
    %2712 = vmatpush1.msra.mxu0 %v374
    %2713 = vmatprep.subr.mxu0 %v377
    %2714 = vmatpush1.msra.mxu0 %v376
    %2715 = vmatprep.subr.mxu0 %v379
    %2716 = vmatpush1.msra.mxu0 %v378
    %2717 = vmatprep.subr.mxu0 %v381
    %2718 = vmatpush1.msra.mxu0 %v380
    %2719 = vmatprep.subr.mxu0 %v383
    %2720 = vmatpush1.msra.mxu0 %v382
    %2721 = vmatprep.subr.mxu0 %v385
    %2722 = vmatpush1.msra.mxu0 %v384
    %2723 = vmatprep.subr.mxu0 %v387
    %2724 = vmatpush1.msra.mxu0 %v386
    %2725 = vmatprep.subr.mxu0 %v389
    %2726 = vmatpush1.msra.mxu0 %v388
    %2727 = vmatprep.subr.mxu0 %v391
    %2728 = vmatpush1.msra.mxu0 %v390
    %2729 = vmatprep.subr.mxu0 %v393
    %2730 = vmatpush1.msra.mxu0 %v392
    %2731 = vmatprep.subr.mxu0 %v395
    %2732 = vmatpush1.msra.mxu0 %v394
    %2733 = vmatprep.subr.mxu0 %v397
    %2734 = vmatpush1.msra.mxu0 %v396
    %2735 = vmatprep.subr.mxu0 %v399
    %2736 = vmatpush1.msra.mxu0 %v398
    %2737 = vmatprep.subr.mxu0 %v401
    %2738 = vmatpush1.msra.mxu0 %v400
    %2739 = vmatprep.subr.mxu0 %v403
    %2740 = vmatpush1.msra.mxu0 %v402
    %2741 = vmatprep.subr.mxu0 %v405
    %2742 = vmatpush1.msra.mxu0 %v404
    %2743 = vmatprep.subr.mxu0 %v407
    %2744 = vmatpush1.msra.mxu0 %v406
    %2745 = vmatprep.mubr.f32.mxu0 %v2680
    %2746 = vmatmul.mubr.f32.gmra.mrb[0].mxu0 %v2679
    %v2747 = vpop.f32.mrb[0].mxu0
    %v2748 = vadd.f32 %v425, %v2747
    %v2749 = vpop.f32.mrb[0].mxu0
    %v2750 = vadd.f32 %v429, %v2749
    %2751 = vdwg.mxu0
    %v2752 = vmul.f32 %v2679, %v2679
    %v2753 = vmul.f32 %v2680, %v2680
    %v2754 = vsub.f32 1.0, %v2752
    %v2755 = vsub.f32 1.0, %v2753
    %v2756 = vmul.f32 %v2754, %v437
    %v2757 = vmul.f32 %v2755, %v441
    %v2758 = vadd.f32 %v2756, %v2757
    %2759 = vadd.xlane.f32.xlu0 %v2758
    %v2760 = vpop.xlane.xlu0 %2759
    %v2761 = vmul.f32 %v2748, 0.0625
    %v2762 = vmul.f32 %v2750, 0.0625
    %v2763 = vadd.f32 %v2572, %v2761
    %v2764 = vadd.f32 %v2573, %v2762
    %v2765 = vtanh.pop %v2763
    %v2766 = vtanh.pop %v2764
    %2767 = vmatprep.subr.mxu0 %v345
    %2768 = vmatpush1.msra.mxu0 %v344
    %2769 = vmatprep.subr.mxu0 %v347
    %2770 = vmatpush1.msra.mxu0 %v346
    %2771 = vmatprep.subr.mxu0 %v349
    %2772 = vmatpush1.msra.mxu0 %v348
    %2773 = vmatprep.subr.mxu0 %v351
    %2774 = vmatpush1.msra.mxu0 %v350
    %2775 = vmatprep.subr.mxu0 %v353
    %2776 = vmatpush1.msra.mxu0 %v352
    %2777 = vmatprep.subr.mxu0 %v355
    %2778 = vmatpush1.msra.mxu0 %v354
    %2779 = vmatprep.subr.mxu0 %v357
    %2780 = vmatpush1.msra.mxu0 %v356
    %2781 = vmatprep.subr.mxu0 %v359
    %2782 = vmatpush1.msra.mxu0 %v358
    %2783 = vmatprep.subr.mxu0 %v361
    %2784 = vmatpush1.msra.mxu0 %v360
    %2785 = vmatprep.subr.mxu0 %v363
    %2786 = vmatpush1.msra.mxu0 %v362
    %2787 = vmatprep.subr.mxu0 %v365
    %2788 = vmatpush1.msra.mxu0 %v364
    %2789 = vmatprep.subr.mxu0 %v367
    %2790 = vmatpush1.msra.mxu0 %v366
    %2791 = vmatprep.subr.mxu0 %v369
    %2792 = vmatpush1.msra.mxu0 %v368
    %2793 = vmatprep.subr.mxu0 %v371
    %2794 = vmatpush1.msra.mxu0 %v370
    %2795 = vmatprep.subr.mxu0 %v373
    %2796 = vmatpush1.msra.mxu0 %v372
    %2797 = vmatprep.subr.mxu0 %v375
    %2798 = vmatpush1.msra.mxu0 %v374
    %2799 = vmatprep.subr.mxu0 %v377
    %2800 = vmatpush1.msra.mxu0 %v376
    %2801 = vmatprep.subr.mxu0 %v379
    %2802 = vmatpush1.msra.mxu0 %v378
    %2803 = vmatprep.subr.mxu0 %v381
    %2804 = vmatpush1.msra.mxu0 %v380
    %2805 = vmatprep.subr.mxu0 %v383
    %2806 = vmatpush1.msra.mxu0 %v382
    %2807 = vmatprep.subr.mxu0 %v385
    %2808 = vmatpush1.msra.mxu0 %v384
    %2809 = vmatprep.subr.mxu0 %v387
    %2810 = vmatpush1.msra.mxu0 %v386
    %2811 = vmatprep.subr.mxu0 %v389
    %2812 = vmatpush1.msra.mxu0 %v388
    %2813 = vmatprep.subr.mxu0 %v391
    %2814 = vmatpush1.msra.mxu0 %v390
    %2815 = vmatprep.subr.mxu0 %v393
    %2816 = vmatpush1.msra.mxu0 %v392
    %2817 = vmatprep.subr.mxu0 %v395
    %2818 = vmatpush1.msra.mxu0 %v394
    %2819 = vmatprep.subr.mxu0 %v397
    %2820 = vmatpush1.msra.mxu0 %v396
    %2821 = vmatprep.subr.mxu0 %v399
    %2822 = vmatpush1.msra.mxu0 %v398
    %2823 = vmatprep.subr.mxu0 %v401
    %2824 = vmatpush1.msra.mxu0 %v400
    %2825 = vmatprep.subr.mxu0 %v403
    %2826 = vmatpush1.msra.mxu0 %v402
    %2827 = vmatprep.subr.mxu0 %v405
    %2828 = vmatpush1.msra.mxu0 %v404
    %2829 = vmatprep.subr.mxu0 %v407
    %2830 = vmatpush1.msra.mxu0 %v406
    %2831 = vmatprep.mubr.f32.mxu0 %v2766
    %2832 = vmatmul.mubr.f32.gmra.mrb[0].mxu0 %v2765
    %v2833 = vpop.f32.mrb[0].mxu0
    %v2834 = vadd.f32 %v425, %v2833
    %v2835 = vpop.f32.mrb[0].mxu0
    %v2836 = vadd.f32 %v429, %v2835
    %2837 = vdwg.mxu0
    %v2838 = vmul.f32 %v2765, %v2765
    %v2839 = vmul.f32 %v2766, %v2766
    %v2840 = vsub.f32 1.0, %v2838
    %v2841 = vsub.f32 1.0, %v2839
    %v2842 = vmul.f32 %v2840, %v437
    %v2843 = vmul.f32 %v2841, %v441
    %v2844 = vadd.f32 %v2842, %v2843
    %2845 = vadd.xlane.f32.xlu0 %v2844
    %v2846 = vpop.xlane.xlu0 %2845
    %v2847 = vmul.f32 %v2834, 0.125
    %v2848 = vmul.f32 %v2836, 0.125
    %v2849 = vadd.f32 %v2572, %v2847
    %v2850 = vadd.f32 %v2573, %v2848
    %v2851 = vtanh.pop %v2849
    %v2852 = vtanh.pop %v2850
    %2853 = vmatprep.subr.mxu0 %v345
    %2854 = vmatpush1.msra.mxu0 %v344
    %2855 = vmatprep.subr.mxu0 %v347
    %2856 = vmatpush1.msra.mxu0 %v346
    %2857 = vmatprep.subr.mxu0 %v349
    %2858 = vmatpush1.msra.mxu0 %v348
    %2859 = vmatprep.subr.mxu0 %v351
    %2860 = vmatpush1.msra.mxu0 %v350
    %2861 = vmatprep.subr.mxu0 %v353
    %2862 = vmatpush1.msra.mxu0 %v352
    %2863 = vmatprep.subr.mxu0 %v355
    %2864 = vmatpush1.msra.mxu0 %v354
    %2865 = vmatprep.subr.mxu0 %v357
    %2866 = vmatpush1.msra.mxu0 %v356
    %2867 = vmatprep.subr.mxu0 %v359
    %2868 = vmatpush1.msra.mxu0 %v358
    %2869 = vmatprep.subr.mxu0 %v361
    %2870 = vmatpush1.msra.mxu0 %v360
    %2871 = vmatprep.subr.mxu0 %v363
    %2872 = vmatpush1.msra.mxu0 %v362
    %2873 = vmatprep.subr.mxu0 %v365
    %2874 = vmatpush1.msra.mxu0 %v364
    %2875 = vmatprep.subr.mxu0 %v367
    %2876 = vmatpush1.msra.mxu0 %v366
    %2877 = vmatprep.subr.mxu0 %v369
    %2878 = vmatpush1.msra.mxu0 %v368
    %2879 = vmatprep.subr.mxu0 %v371
    %2880 = vmatpush1.msra.mxu0 %v370
    %2881 = vmatprep.subr.mxu0 %v373
    %2882 = vmatpush1.msra.mxu0 %v372
    %2883 = vmatprep.subr.mxu0 %v375
    %2884 = vmatpush1.msra.mxu0 %v374
    %2885 = vmatprep.subr.mxu0 %v377
    %2886 = vmatpush1.msra.mxu0 %v376
    %2887 = vmatprep.subr.mxu0 %v379
    %2888 = vmatpush1.msra.mxu0 %v378
    %2889 = vmatprep.subr.mxu0 %v381
    %2890 = vmatpush1.msra.mxu0 %v380
    %2891 = vmatprep.subr.mxu0 %v383
    %2892 = vmatpush1.msra.mxu0 %v382
    %2893 = vmatprep.subr.mxu0 %v385
    %2894 = vmatpush1.msra.mxu0 %v384
    %2895 = vmatprep.subr.mxu0 %v387
    %2896 = vmatpush1.msra.mxu0 %v386
    %2897 = vmatprep.subr.mxu0 %v389
    %2898 = vmatpush1.msra.mxu0 %v388
    %2899 = vmatprep.subr.mxu0 %v391
    %2900 = vmatpush1.msra.mxu0 %v390
    %2901 = vmatprep.subr.mxu0 %v393
    %2902 = vmatpush1.msra.mxu0 %v392
    %2903 = vmatprep.subr.mxu0 %v395
    %2904 = vmatpush1.msra.mxu0 %v394
    %2905 = vmatprep.subr.mxu0 %v397
    %2906 = vmatpush1.msra.mxu0 %v396
    %2907 = vmatprep.subr.mxu0 %v399
    %2908 = vmatpush1.msra.mxu0 %v398
    %2909 = vmatprep.subr.mxu0 %v401
    %2910 = vmatpush1.msra.mxu0 %v400
    %2911 = vmatprep.subr.mxu0 %v403
    %2912 = vmatpush1.msra.mxu0 %v402
    %2913 = vmatprep.subr.mxu0 %v405
    %2914 = vmatpush1.msra.mxu0 %v404
    %2915 = vmatprep.subr.mxu0 %v407
    %2916 = vmatpush1.msra.mxu0 %v406
    %2917 = vmatprep.mubr.f32.mxu0 %v2852
    %2918 = vmatmul.mubr.f32.gmra.mrb[0].mxu0 %v2851
    %v2919 = vpop.f32.mrb[0].mxu0
    %v2920 = vadd.f32 %v425, %v2919
    %v2921 = vpop.f32.mrb[0].mxu0
    %v2922 = vadd.f32 %v429, %v2921
    %2923 = vdwg.mxu0
    %v2924 = vmul.f32 %v2851, %v2851
    %v2925 = vmul.f32 %v2852, %v2852
    %v2926 = vsub.f32 1.0, %v2924
    %v2927 = vsub.f32 1.0, %v2925
    %v2928 = vmul.f32 %v2926, %v437
    %v2929 = vmul.f32 %v2927, %v441
    %v2930 = vadd.f32 %v2928, %v2929
    %2931 = vadd.xlane.f32.xlu0 %v2930
    %v2932 = vpop.xlane.xlu0 %2931
    %v2933 = vmul.f32 %v2748, 2.0
    %v2934 = vmul.f32 %v2750, 2.0
    %v2935 = vadd.f32 %v2662, %v2933
    %v2936 = vadd.f32 %v2664, %v2934
    %v2937 = vmul.f32 %v2834, 2.0
    %v2938 = vmul.f32 %v2836, 2.0
    %v2939 = vadd.f32 %v2935, %v2937
    %v2940 = vadd.f32 %v2936, %v2938
    %v2941 = vadd.f32 %v2939, %v2920
    %v2942 = vadd.f32 %v2940, %v2922
    %v2943 = vmul.f32 %v2941, 0.020833334
    %v2944 = vmul.f32 %v2942, 0.020833334
    %v2945 = vadd.f32 %v2572, %v2943
    %v2946 = vadd.f32 %v2573, %v2944
    %v2947 = vmul.f32 %v2679, 2.0
    %v2948 = vmul.f32 %v2680, 2.0
    %v2949 = vadd.f32 %v2593, %v2947
    %v2950 = vadd.f32 %v2594, %v2948
    %v2951 = vmul.f32 %v2765, 2.0
    %v2952 = vmul.f32 %v2766, 2.0
    %v2953 = vadd.f32 %v2949, %v2951
    %v2954 = vadd.f32 %v2950, %v2952
    %v2955 = vadd.f32 %v2953, %v2851
    %v2956 = vadd.f32 %v2954, %v2852
    %v2957 = vadd.f32 %v2584, %v2955
    %v2958 = vadd.f32 %v2585, %v2956
    %v2959 = vmul.f32 %v2760, 2.0
    %v2960 = vadd.f32 %v2674, %v2959
    %v2961 = vmul.f32 %v2846, 2.0
    %v2962 = vadd.f32 %v2960, %v2961
    %v2963 = vadd.f32 %v2962, %v2932
    %v2964 = vmul.f32 %v2963, 0.020833334
    %v2965 = vadd.f32 %v2592, %v2964
    %v2966 = vtanh.pop %v2945
    %v2967 = vtanh.pop %v2946
    %2968 = vmatprep.subr.mxu0 %v345
    %2969 = vmatpush1.msra.mxu0 %v344
    %2970 = vmatprep.subr.mxu0 %v347
    %2971 = vmatpush1.msra.mxu0 %v346
    %2972 = vmatprep.subr.mxu0 %v349
    %2973 = vmatpush1.msra.mxu0 %v348
    %2974 = vmatprep.subr.mxu0 %v351
    %2975 = vmatpush1.msra.mxu0 %v350
    %2976 = vmatprep.subr.mxu0 %v353
    %2977 = vmatpush1.msra.mxu0 %v352
    %2978 = vmatprep.subr.mxu0 %v355
    %2979 = vmatpush1.msra.mxu0 %v354
    %2980 = vmatprep.subr.mxu0 %v357
    %2981 = vmatpush1.msra.mxu0 %v356
    %2982 = vmatprep.subr.mxu0 %v359
    %2983 = vmatpush1.msra.mxu0 %v358
    %2984 = vmatprep.subr.mxu0 %v361
    %2985 = vmatpush1.msra.mxu0 %v360
    %2986 = vmatprep.subr.mxu0 %v363
    %2987 = vmatpush1.msra.mxu0 %v362
    %2988 = vmatprep.subr.mxu0 %v365
    %2989 = vmatpush1.msra.mxu0 %v364
    %2990 = vmatprep.subr.mxu0 %v367
    %2991 = vmatpush1.msra.mxu0 %v366
    %2992 = vmatprep.subr.mxu0 %v369
    %2993 = vmatpush1.msra.mxu0 %v368
    %2994 = vmatprep.subr.mxu0 %v371
    %2995 = vmatpush1.msra.mxu0 %v370
    %2996 = vmatprep.subr.mxu0 %v373
    %2997 = vmatpush1.msra.mxu0 %v372
    %2998 = vmatprep.subr.mxu0 %v375
    %2999 = vmatpush1.msra.mxu0 %v374
    %3000 = vmatprep.subr.mxu0 %v377
    %3001 = vmatpush1.msra.mxu0 %v376
    %3002 = vmatprep.subr.mxu0 %v379
    %3003 = vmatpush1.msra.mxu0 %v378
    %3004 = vmatprep.subr.mxu0 %v381
    %3005 = vmatpush1.msra.mxu0 %v380
    %3006 = vmatprep.subr.mxu0 %v383
    %3007 = vmatpush1.msra.mxu0 %v382
    %3008 = vmatprep.subr.mxu0 %v385
    %3009 = vmatpush1.msra.mxu0 %v384
    %3010 = vmatprep.subr.mxu0 %v387
    %3011 = vmatpush1.msra.mxu0 %v386
    %3012 = vmatprep.subr.mxu0 %v389
    %3013 = vmatpush1.msra.mxu0 %v388
    %3014 = vmatprep.subr.mxu0 %v391
    %3015 = vmatpush1.msra.mxu0 %v390
    %3016 = vmatprep.subr.mxu0 %v393
    %3017 = vmatpush1.msra.mxu0 %v392
    %3018 = vmatprep.subr.mxu0 %v395
    %3019 = vmatpush1.msra.mxu0 %v394
    %3020 = vmatprep.subr.mxu0 %v397
    %3021 = vmatpush1.msra.mxu0 %v396
    %3022 = vmatprep.subr.mxu0 %v399
    %3023 = vmatpush1.msra.mxu0 %v398
    %3024 = vmatprep.subr.mxu0 %v401
    %3025 = vmatpush1.msra.mxu0 %v400
    %3026 = vmatprep.subr.mxu0 %v403
    %3027 = vmatpush1.msra.mxu0 %v402
    %3028 = vmatprep.subr.mxu0 %v405
    %3029 = vmatpush1.msra.mxu0 %v404
    %3030 = vmatprep.subr.mxu0 %v407
    %3031 = vmatpush1.msra.mxu0 %v406
    %3032 = vmatprep.mubr.f32.mxu0 %v2967
    %3033 = vmatmul.mubr.f32.gmra.mrb[0].mxu0 %v2966
    %v3034 = vpop.f32.mrb[0].mxu0
    %v3035 = vadd.f32 %v425, %v3034
    %v3036 = vpop.f32.mrb[0].mxu0
    %v3037 = vadd.f32 %v429, %v3036
    %3038 = vdwg.mxu0
    %v3039 = vmul.f32 %v2966, %v2966
    %v3040 = vmul.f32 %v2967, %v2967
    %v3041 = vsub.f32 1.0, %v3039
    %v3042 = vsub.f32 1.0, %v3040
    %v3043 = vmul.f32 %v3041, %v437
    %v3044 = vmul.f32 %v3042, %v441
    %v3045 = vadd.f32 %v3043, %v3044
    %3046 = vadd.xlane.f32.xlu0 %v3045
    %v3047 = vpop.xlane.xlu0 %3046
    %v3048 = vmul.f32 %v3035, 0.0625
    %v3049 = vmul.f32 %v3037, 0.0625
    %v3050 = vadd.f32 %v2945, %v3048
    %v3051 = vadd.f32 %v2946, %v3049
    %v3052 = vtanh.pop %v3050
    %v3053 = vtanh.pop %v3051
    %3054 = vmatprep.subr.mxu0 %v345
    %3055 = vmatpush1.msra.mxu0 %v344
    %3056 = vmatprep.subr.mxu0 %v347
    %3057 = vmatpush1.msra.mxu0 %v346
    %3058 = vmatprep.subr.mxu0 %v349
    %3059 = vmatpush1.msra.mxu0 %v348
    %3060 = vmatprep.subr.mxu0 %v351
    %3061 = vmatpush1.msra.mxu0 %v350
    %3062 = vmatprep.subr.mxu0 %v353
    %3063 = vmatpush1.msra.mxu0 %v352
    %3064 = vmatprep.subr.mxu0 %v355
    %3065 = vmatpush1.msra.mxu0 %v354
    %3066 = vmatprep.subr.mxu0 %v357
    %3067 = vmatpush1.msra.mxu0 %v356
    %3068 = vmatprep.subr.mxu0 %v359
    %3069 = vmatpush1.msra.mxu0 %v358
    %3070 = vmatprep.subr.mxu0 %v361
    %3071 = vmatpush1.msra.mxu0 %v360
    %3072 = vmatprep.subr.mxu0 %v363
    %3073 = vmatpush1.msra.mxu0 %v362
    %3074 = vmatprep.subr.mxu0 %v365
    %3075 = vmatpush1.msra.mxu0 %v364
    %3076 = vmatprep.subr.mxu0 %v367
    %3077 = vmatpush1.msra.mxu0 %v366
    %3078 = vmatprep.subr.mxu0 %v369
    %3079 = vmatpush1.msra.mxu0 %v368
    %3080 = vmatprep.subr.mxu0 %v371
    %3081 = vmatpush1.msra.mxu0 %v370
    %3082 = vmatprep.subr.mxu0 %v373
    %3083 = vmatpush1.msra.mxu0 %v372
    %3084 = vmatprep.subr.mxu0 %v375
    %3085 = vmatpush1.msra.mxu0 %v374
    %3086 = vmatprep.subr.mxu0 %v377
    %3087 = vmatpush1.msra.mxu0 %v376
    %3088 = vmatprep.subr.mxu0 %v379
    %3089 = vmatpush1.msra.mxu0 %v378
    %3090 = vmatprep.subr.mxu0 %v381
    %3091 = vmatpush1.msra.mxu0 %v380
    %3092 = vmatprep.subr.mxu0 %v383
    %3093 = vmatpush1.msra.mxu0 %v382
    %3094 = vmatprep.subr.mxu0 %v385
    %3095 = vmatpush1.msra.mxu0 %v384
    %3096 = vmatprep.subr.mxu0 %v387
    %3097 = vmatpush1.msra.mxu0 %v386
    %3098 = vmatprep.subr.mxu0 %v389
    %3099 = vmatpush1.msra.mxu0 %v388
    %3100 = vmatprep.subr.mxu0 %v391
    %3101 = vmatpush1.msra.mxu0 %v390
    %3102 = vmatprep.subr.mxu0 %v393
    %3103 = vmatpush1.msra.mxu0 %v392
    %3104 = vmatprep.subr.mxu0 %v395
    %3105 = vmatpush1.msra.mxu0 %v394
    %3106 = vmatprep.subr.mxu0 %v397
    %3107 = vmatpush1.msra.mxu0 %v396
    %3108 = vmatprep.subr.mxu0 %v399
    %3109 = vmatpush1.msra.mxu0 %v398
    %3110 = vmatprep.subr.mxu0 %v401
    %3111 = vmatpush1.msra.mxu0 %v400
    %3112 = vmatprep.subr.mxu0 %v403
    %3113 = vmatpush1.msra.mxu0 %v402
    %3114 = vmatprep.subr.mxu0 %v405
    %3115 = vmatpush1.msra.mxu0 %v404
    %3116 = vmatprep.subr.mxu0 %v407
    %3117 = vmatpush1.msra.mxu0 %v406
    %3118 = vmatprep.mubr.f32.mxu0 %v3053
    %3119 = vmatmul.mubr.f32.gmra.mrb[0].mxu0 %v3052
    %v3120 = vpop.f32.mrb[0].mxu0
    %v3121 = vadd.f32 %v425, %v3120
    %v3122 = vpop.f32.mrb[0].mxu0
    %v3123 = vadd.f32 %v429, %v3122
    %3124 = vdwg.mxu0
    %v3125 = vmul.f32 %v3052, %v3052
    %v3126 = vmul.f32 %v3053, %v3053
    %v3127 = vsub.f32 1.0, %v3125
    %v3128 = vsub.f32 1.0, %v3126
    %v3129 = vmul.f32 %v3127, %v437
    %v3130 = vmul.f32 %v3128, %v441
    %v3131 = vadd.f32 %v3129, %v3130
    %3132 = vadd.xlane.f32.xlu0 %v3131
    %v3133 = vpop.xlane.xlu0 %3132
    %v3134 = vmul.f32 %v3121, 0.0625
    %v3135 = vmul.f32 %v3123, 0.0625
    %v3136 = vadd.f32 %v2945, %v3134
    %v3137 = vadd.f32 %v2946, %v3135
    %v3138 = vtanh.pop %v3136
    %v3139 = vtanh.pop %v3137
    %3140 = vmatprep.subr.mxu0 %v345
    %3141 = vmatpush1.msra.mxu0 %v344
    %3142 = vmatprep.subr.mxu0 %v347
    %3143 = vmatpush1.msra.mxu0 %v346
    %3144 = vmatprep.subr.mxu0 %v349
    %3145 = vmatpush1.msra.mxu0 %v348
    %3146 = vmatprep.subr.mxu0 %v351
    %3147 = vmatpush1.msra.mxu0 %v350
    %3148 = vmatprep.subr.mxu0 %v353
    %3149 = vmatpush1.msra.mxu0 %v352
    %3150 = vmatprep.subr.mxu0 %v355
    %3151 = vmatpush1.msra.mxu0 %v354
    %3152 = vmatprep.subr.mxu0 %v357
    %3153 = vmatpush1.msra.mxu0 %v356
    %3154 = vmatprep.subr.mxu0 %v359
    %3155 = vmatpush1.msra.mxu0 %v358
    %3156 = vmatprep.subr.mxu0 %v361
    %3157 = vmatpush1.msra.mxu0 %v360
    %3158 = vmatprep.subr.mxu0 %v363
    %3159 = vmatpush1.msra.mxu0 %v362
    %3160 = vmatprep.subr.mxu0 %v365
    %3161 = vmatpush1.msra.mxu0 %v364
    %3162 = vmatprep.subr.mxu0 %v367
    %3163 = vmatpush1.msra.mxu0 %v366
    %3164 = vmatprep.subr.mxu0 %v369
    %3165 = vmatpush1.msra.mxu0 %v368
    %3166 = vmatprep.subr.mxu0 %v371
    %3167 = vmatpush1.msra.mxu0 %v370
    %3168 = vmatprep.subr.mxu0 %v373
    %3169 = vmatpush1.msra.mxu0 %v372
    %3170 = vmatprep.subr.mxu0 %v375
    %3171 = vmatpush1.msra.mxu0 %v374
    %3172 = vmatprep.subr.mxu0 %v377
    %3173 = vmatpush1.msra.mxu0 %v376
    %3174 = vmatprep.subr.mxu0 %v379
    %3175 = vmatpush1.msra.mxu0 %v378
    %3176 = vmatprep.subr.mxu0 %v381
    %3177 = vmatpush1.msra.mxu0 %v380
    %3178 = vmatprep.subr.mxu0 %v383
    %3179 = vmatpush1.msra.mxu0 %v382
    %3180 = vmatprep.subr.mxu0 %v385
    %3181 = vmatpush1.msra.mxu0 %v384
    %3182 = vmatprep.subr.mxu0 %v387
    %3183 = vmatpush1.msra.mxu0 %v386
    %3184 = vmatprep.subr.mxu0 %v389
    %3185 = vmatpush1.msra.mxu0 %v388
    %3186 = vmatprep.subr.mxu0 %v391
    %3187 = vmatpush1.msra.mxu0 %v390
    %3188 = vmatprep.subr.mxu0 %v393
    %3189 = vmatpush1.msra.mxu0 %v392
    %3190 = vmatprep.subr.mxu0 %v395
    %3191 = vmatpush1.msra.mxu0 %v394
    %3192 = vmatprep.subr.mxu0 %v397
    %3193 = vmatpush1.msra.mxu0 %v396
    %3194 = vmatprep.subr.mxu0 %v399
    %3195 = vmatpush1.msra.mxu0 %v398
    %3196 = vmatprep.subr.mxu0 %v401
    %3197 = vmatpush1.msra.mxu0 %v400
    %3198 = vmatprep.subr.mxu0 %v403
    %3199 = vmatpush1.msra.mxu0 %v402
    %3200 = vmatprep.subr.mxu0 %v405
    %3201 = vmatpush1.msra.mxu0 %v404
    %3202 = vmatprep.subr.mxu0 %v407
    %3203 = vmatpush1.msra.mxu0 %v406
    %3204 = vmatprep.mubr.f32.mxu0 %v3139
    %3205 = vmatmul.mubr.f32.gmra.mrb[0].mxu0 %v3138
    %v3206 = vpop.f32.mrb[0].mxu0
    %v3207 = vadd.f32 %v425, %v3206
    %v3208 = vpop.f32.mrb[0].mxu0
    %v3209 = vadd.f32 %v429, %v3208
    %3210 = vdwg.mxu0
    %v3211 = vmul.f32 %v3138, %v3138
    %v3212 = vmul.f32 %v3139, %v3139
    %v3213 = vsub.f32 1.0, %v3211
    %v3214 = vsub.f32 1.0, %v3212
    %v3215 = vmul.f32 %v3213, %v437
    %v3216 = vmul.f32 %v3214, %v441
    %v3217 = vadd.f32 %v3215, %v3216
    %3218 = vadd.xlane.f32.xlu0 %v3217
    %v3219 = vpop.xlane.xlu0 %3218
    %v3220 = vmul.f32 %v3207, 0.125
    %v3221 = vmul.f32 %v3209, 0.125
    %v3222 = vadd.f32 %v2945, %v3220
    %v3223 = vadd.f32 %v2946, %v3221
    %v3224 = vtanh.pop %v3222
    %v3225 = vtanh.pop %v3223
    %3226 = vmatprep.subr.mxu0 %v345
    %3227 = vmatpush1.msra.mxu0 %v344
    %3228 = vmatprep.subr.mxu0 %v347
    %3229 = vmatpush1.msra.mxu0 %v346
    %3230 = vmatprep.subr.mxu0 %v349
    %3231 = vmatpush1.msra.mxu0 %v348
    %3232 = vmatprep.subr.mxu0 %v351
    %3233 = vmatpush1.msra.mxu0 %v350
    %3234 = vmatprep.subr.mxu0 %v353
    %3235 = vmatpush1.msra.mxu0 %v352
    %3236 = vmatprep.subr.mxu0 %v355
    %3237 = vmatpush1.msra.mxu0 %v354
    %3238 = vmatprep.subr.mxu0 %v357
    %3239 = vmatpush1.msra.mxu0 %v356
    %3240 = vmatprep.subr.mxu0 %v359
    %3241 = vmatpush1.msra.mxu0 %v358
    %3242 = vmatprep.subr.mxu0 %v361
    %3243 = vmatpush1.msra.mxu0 %v360
    %3244 = vmatprep.subr.mxu0 %v363
    %3245 = vmatpush1.msra.mxu0 %v362
    %3246 = vmatprep.subr.mxu0 %v365
    %3247 = vmatpush1.msra.mxu0 %v364
    %3248 = vmatprep.subr.mxu0 %v367
    %3249 = vmatpush1.msra.mxu0 %v366
    %3250 = vmatprep.subr.mxu0 %v369
    %3251 = vmatpush1.msra.mxu0 %v368
    %3252 = vmatprep.subr.mxu0 %v371
    %3253 = vmatpush1.msra.mxu0 %v370
    %3254 = vmatprep.subr.mxu0 %v373
    %3255 = vmatpush1.msra.mxu0 %v372
    %3256 = vmatprep.subr.mxu0 %v375
    %3257 = vmatpush1.msra.mxu0 %v374
    %3258 = vmatprep.subr.mxu0 %v377
    %3259 = vmatpush1.msra.mxu0 %v376
    %3260 = vmatprep.subr.mxu0 %v379
    %3261 = vmatpush1.msra.mxu0 %v378
    %3262 = vmatprep.subr.mxu0 %v381
    %3263 = vmatpush1.msra.mxu0 %v380
    %3264 = vmatprep.subr.mxu0 %v383
    %3265 = vmatpush1.msra.mxu0 %v382
    %3266 = vmatprep.subr.mxu0 %v385
    %3267 = vmatpush1.msra.mxu0 %v384
    %3268 = vmatprep.subr.mxu0 %v387
    %3269 = vmatpush1.msra.mxu0 %v386
    %3270 = vmatprep.subr.mxu0 %v389
    %3271 = vmatpush1.msra.mxu0 %v388
    %3272 = vmatprep.subr.mxu0 %v391
    %3273 = vmatpush1.msra.mxu0 %v390
    %3274 = vmatprep.subr.mxu0 %v393
    %3275 = vmatpush1.msra.mxu0 %v392
    %3276 = vmatprep.subr.mxu0 %v395
    %3277 = vmatpush1.msra.mxu0 %v394
    %3278 = vmatprep.subr.mxu0 %v397
    %3279 = vmatpush1.msra.mxu0 %v396
    %3280 = vmatprep.subr.mxu0 %v399
    %3281 = vmatpush1.msra.mxu0 %v398
    %3282 = vmatprep.subr.mxu0 %v401
    %3283 = vmatpush1.msra.mxu0 %v400
    %3284 = vmatprep.subr.mxu0 %v403
    %3285 = vmatpush1.msra.mxu0 %v402
    %3286 = vmatprep.subr.mxu0 %v405
    %3287 = vmatpush1.msra.mxu0 %v404
    %3288 = vmatprep.subr.mxu0 %v407
    %3289 = vmatpush1.msra.mxu0 %v406
    %3290 = vmatprep.mubr.f32.mxu0 %v3225
    %3291 = vmatmul.mubr.f32.gmra.mrb[0].mxu0 %v3224
    %v3292 = vpop.f32.mrb[0].mxu0
    %v3293 = vadd.f32 %v425, %v3292
    %v3294 = vpop.f32.mrb[0].mxu0
    %v3295 = vadd.f32 %v429, %v3294
    %3296 = vdwg.mxu0
    %v3297 = vmul.f32 %v3224, %v3224
    %v3298 = vmul.f32 %v3225, %v3225
    %v3299 = vsub.f32 1.0, %v3297
    %v3300 = vsub.f32 1.0, %v3298
    %v3301 = vmul.f32 %v3299, %v437
    %v3302 = vmul.f32 %v3300, %v441
    %v3303 = vadd.f32 %v3301, %v3302
    %3304 = vadd.xlane.f32.xlu0 %v3303
    %v3305 = vpop.xlane.xlu0 %3304
    %v3306 = vmul.f32 %v3121, 2.0
    %v3307 = vmul.f32 %v3123, 2.0
    %v3308 = vadd.f32 %v3035, %v3306
    %v3309 = vadd.f32 %v3037, %v3307
    %v3310 = vmul.f32 %v3207, 2.0
    %v3311 = vmul.f32 %v3209, 2.0
    %v3312 = vadd.f32 %v3308, %v3310
    %v3313 = vadd.f32 %v3309, %v3311
    %v3314 = vadd.f32 %v3312, %v3293
    %v3315 = vadd.f32 %v3313, %v3295
    %v3316 = vmul.f32 %v3314, 0.020833334
    %v3317 = vmul.f32 %v3315, 0.020833334
    %v3318 = vadd.f32 %v2945, %v3316
    %v3319 = vadd.f32 %v2946, %v3317
    %v3320 = vmul.f32 %v3052, 2.0
    %v3321 = vmul.f32 %v3053, 2.0
    %v3322 = vadd.f32 %v2966, %v3320
    %v3323 = vadd.f32 %v2967, %v3321
    %v3324 = vmul.f32 %v3138, 2.0
    %v3325 = vmul.f32 %v3139, 2.0
    %v3326 = vadd.f32 %v3322, %v3324
    %v3327 = vadd.f32 %v3323, %v3325
    %v3328 = vadd.f32 %v3326, %v3224
    %v3329 = vadd.f32 %v3327, %v3225
    %v3330 = vadd.f32 %v2957, %v3328
    %v3331 = vadd.f32 %v2958, %v3329
    %v3332 = vmul.f32 %v3133, 2.0
    %v3333 = vadd.f32 %v3047, %v3332
    %v3334 = vmul.f32 %v3219, 2.0
    %v3335 = vadd.f32 %v3333, %v3334
    %v3336 = vadd.f32 %v3335, %v3305
    %v3337 = vmul.f32 %v3336, 0.020833334
    %v3338 = vadd.f32 %v2965, %v3337
    %v3339 = vtanh.pop %v3318
    %v3340 = vtanh.pop %v3319
    %3341 = vmatprep.subr.mxu0 %v345
    %3342 = vmatpush1.msra.mxu0 %v344
    %3343 = vmatprep.subr.mxu0 %v347
    %3344 = vmatpush1.msra.mxu0 %v346
    %3345 = vmatprep.subr.mxu0 %v349
    %3346 = vmatpush1.msra.mxu0 %v348
    %3347 = vmatprep.subr.mxu0 %v351
    %3348 = vmatpush1.msra.mxu0 %v350
    %3349 = vmatprep.subr.mxu0 %v353
    %3350 = vmatpush1.msra.mxu0 %v352
    %3351 = vmatprep.subr.mxu0 %v355
    %3352 = vmatpush1.msra.mxu0 %v354
    %3353 = vmatprep.subr.mxu0 %v357
    %3354 = vmatpush1.msra.mxu0 %v356
    %3355 = vmatprep.subr.mxu0 %v359
    %3356 = vmatpush1.msra.mxu0 %v358
    %3357 = vmatprep.subr.mxu0 %v361
    %3358 = vmatpush1.msra.mxu0 %v360
    %3359 = vmatprep.subr.mxu0 %v363
    %3360 = vmatpush1.msra.mxu0 %v362
    %3361 = vmatprep.subr.mxu0 %v365
    %3362 = vmatpush1.msra.mxu0 %v364
    %3363 = vmatprep.subr.mxu0 %v367
    %3364 = vmatpush1.msra.mxu0 %v366
    %3365 = vmatprep.subr.mxu0 %v369
    %3366 = vmatpush1.msra.mxu0 %v368
    %3367 = vmatprep.subr.mxu0 %v371
    %3368 = vmatpush1.msra.mxu0 %v370
    %3369 = vmatprep.subr.mxu0 %v373
    %3370 = vmatpush1.msra.mxu0 %v372
    %3371 = vmatprep.subr.mxu0 %v375
    %3372 = vmatpush1.msra.mxu0 %v374
    %3373 = vmatprep.subr.mxu0 %v377
    %3374 = vmatpush1.msra.mxu0 %v376
    %3375 = vmatprep.subr.mxu0 %v379
    %3376 = vmatpush1.msra.mxu0 %v378
    %3377 = vmatprep.subr.mxu0 %v381
    %3378 = vmatpush1.msra.mxu0 %v380
    %3379 = vmatprep.subr.mxu0 %v383
    %3380 = vmatpush1.msra.mxu0 %v382
    %3381 = vmatprep.subr.mxu0 %v385
    %3382 = vmatpush1.msra.mxu0 %v384
    %3383 = vmatprep.subr.mxu0 %v387
    %3384 = vmatpush1.msra.mxu0 %v386
    %3385 = vmatprep.subr.mxu0 %v389
    %3386 = vmatpush1.msra.mxu0 %v388
    %3387 = vmatprep.subr.mxu0 %v391
    %3388 = vmatpush1.msra.mxu0 %v390
    %3389 = vmatprep.subr.mxu0 %v393
    %3390 = vmatpush1.msra.mxu0 %v392
    %3391 = vmatprep.subr.mxu0 %v395
    %3392 = vmatpush1.msra.mxu0 %v394
    %3393 = vmatprep.subr.mxu0 %v397
    %3394 = vmatpush1.msra.mxu0 %v396
    %3395 = vmatprep.subr.mxu0 %v399
    %3396 = vmatpush1.msra.mxu0 %v398
    %3397 = vmatprep.subr.mxu0 %v401
    %3398 = vmatpush1.msra.mxu0 %v400
    %3399 = vmatprep.subr.mxu0 %v403
    %3400 = vmatpush1.msra.mxu0 %v402
    %3401 = vmatprep.subr.mxu0 %v405
    %3402 = vmatpush1.msra.mxu0 %v404
    %3403 = vmatprep.subr.mxu0 %v407
    %3404 = vmatpush1.msra.mxu0 %v406
    %3405 = vmatprep.mubr.f32.mxu0 %v3340
    %3406 = vmatmul.mubr.f32.gmra.mrb[0].mxu0 %v3339
    %v3407 = vpop.f32.mrb[0].mxu0
    %v3408 = vadd.f32 %v425, %v3407
    %v3409 = vpop.f32.mrb[0].mxu0
    %v3410 = vadd.f32 %v429, %v3409
    %3411 = vdwg.mxu0
    %v3412 = vmul.f32 %v3339, %v3339
    %v3413 = vmul.f32 %v3340, %v3340
    %v3414 = vsub.f32 1.0, %v3412
    %v3415 = vsub.f32 1.0, %v3413
    %v3416 = vmul.f32 %v3414, %v437
    %v3417 = vmul.f32 %v3415, %v441
    %v3418 = vadd.f32 %v3416, %v3417
    %3419 = vadd.xlane.f32.xlu0 %v3418
    %v3420 = vpop.xlane.xlu0 %3419
    %v3421 = vmul.f32 %v3408, 0.0625
    %v3422 = vmul.f32 %v3410, 0.0625
    %v3423 = vadd.f32 %v3318, %v3421
    %v3424 = vadd.f32 %v3319, %v3422
    %v3425 = vtanh.pop %v3423
    %v3426 = vtanh.pop %v3424
    %3427 = vmatprep.subr.mxu0 %v345
    %3428 = vmatpush1.msra.mxu0 %v344
    %3429 = vmatprep.subr.mxu0 %v347
    %3430 = vmatpush1.msra.mxu0 %v346
    %3431 = vmatprep.subr.mxu0 %v349
    %3432 = vmatpush1.msra.mxu0 %v348
    %3433 = vmatprep.subr.mxu0 %v351
    %3434 = vmatpush1.msra.mxu0 %v350
    %3435 = vmatprep.subr.mxu0 %v353
    %3436 = vmatpush1.msra.mxu0 %v352
    %3437 = vmatprep.subr.mxu0 %v355
    %3438 = vmatpush1.msra.mxu0 %v354
    %3439 = vmatprep.subr.mxu0 %v357
    %3440 = vmatpush1.msra.mxu0 %v356
    %3441 = vmatprep.subr.mxu0 %v359
    %3442 = vmatpush1.msra.mxu0 %v358
    %3443 = vmatprep.subr.mxu0 %v361
    %3444 = vmatpush1.msra.mxu0 %v360
    %3445 = vmatprep.subr.mxu0 %v363
    %3446 = vmatpush1.msra.mxu0 %v362
    %3447 = vmatprep.subr.mxu0 %v365
    %3448 = vmatpush1.msra.mxu0 %v364
    %3449 = vmatprep.subr.mxu0 %v367
    %3450 = vmatpush1.msra.mxu0 %v366
    %3451 = vmatprep.subr.mxu0 %v369
    %3452 = vmatpush1.msra.mxu0 %v368
    %3453 = vmatprep.subr.mxu0 %v371
    %3454 = vmatpush1.msra.mxu0 %v370
    %3455 = vmatprep.subr.mxu0 %v373
    %3456 = vmatpush1.msra.mxu0 %v372
    %3457 = vmatprep.subr.mxu0 %v375
    %3458 = vmatpush1.msra.mxu0 %v374
    %3459 = vmatprep.subr.mxu0 %v377
    %3460 = vmatpush1.msra.mxu0 %v376
    %3461 = vmatprep.subr.mxu0 %v379
    %3462 = vmatpush1.msra.mxu0 %v378
    %3463 = vmatprep.subr.mxu0 %v381
    %3464 = vmatpush1.msra.mxu0 %v380
    %3465 = vmatprep.subr.mxu0 %v383
    %3466 = vmatpush1.msra.mxu0 %v382
    %3467 = vmatprep.subr.mxu0 %v385
    %3468 = vmatpush1.msra.mxu0 %v384
    %3469 = vmatprep.subr.mxu0 %v387
    %3470 = vmatpush1.msra.mxu0 %v386
    %3471 = vmatprep.subr.mxu0 %v389
    %3472 = vmatpush1.msra.mxu0 %v388
    %3473 = vmatprep.subr.mxu0 %v391
    %3474 = vmatpush1.msra.mxu0 %v390
    %3475 = vmatprep.subr.mxu0 %v393
    %3476 = vmatpush1.msra.mxu0 %v392
    %3477 = vmatprep.subr.mxu0 %v395
    %3478 = vmatpush1.msra.mxu0 %v394
    %3479 = vmatprep.subr.mxu0 %v397
    %3480 = vmatpush1.msra.mxu0 %v396
    %3481 = vmatprep.subr.mxu0 %v399
    %3482 = vmatpush1.msra.mxu0 %v398
    %3483 = vmatprep.subr.mxu0 %v401
    %3484 = vmatpush1.msra.mxu0 %v400
    %3485 = vmatprep.subr.mxu0 %v403
    %3486 = vmatpush1.msra.mxu0 %v402
    %3487 = vmatprep.subr.mxu0 %v405
    %3488 = vmatpush1.msra.mxu0 %v404
    %3489 = vmatprep.subr.mxu0 %v407
    %3490 = vmatpush1.msra.mxu0 %v406
    %3491 = vmatprep.mubr.f32.mxu0 %v3426
    %3492 = vmatmul.mubr.f32.gmra.mrb[0].mxu0 %v3425
    %v3493 = vpop.f32.mrb[0].mxu0
    %v3494 = vadd.f32 %v425, %v3493
    %v3495 = vpop.f32.mrb[0].mxu0
    %v3496 = vadd.f32 %v429, %v3495
    %3497 = vdwg.mxu0
    %v3498 = vmul.f32 %v3425, %v3425
    %v3499 = vmul.f32 %v3426, %v3426
    %v3500 = vsub.f32 1.0, %v3498
    %v3501 = vsub.f32 1.0, %v3499
    %v3502 = vmul.f32 %v3500, %v437
    %v3503 = vmul.f32 %v3501, %v441
    %v3504 = vadd.f32 %v3502, %v3503
    %3505 = vadd.xlane.f32.xlu0 %v3504
    %v3506 = vpop.xlane.xlu0 %3505
    %v3507 = vmul.f32 %v3494, 0.0625
    %v3508 = vmul.f32 %v3496, 0.0625
    %v3509 = vadd.f32 %v3318, %v3507
    %v3510 = vadd.f32 %v3319, %v3508
    %v3511 = vtanh.pop %v3509
    %v3512 = vtanh.pop %v3510
    %3513 = vmatprep.subr.mxu0 %v345
    %3514 = vmatpush1.msra.mxu0 %v344
    %3515 = vmatprep.subr.mxu0 %v347
    %3516 = vmatpush1.msra.mxu0 %v346
    %3517 = vmatprep.subr.mxu0 %v349
    %3518 = vmatpush1.msra.mxu0 %v348
    %3519 = vmatprep.subr.mxu0 %v351
    %3520 = vmatpush1.msra.mxu0 %v350
    %3521 = vmatprep.subr.mxu0 %v353
    %3522 = vmatpush1.msra.mxu0 %v352
    %3523 = vmatprep.subr.mxu0 %v355
    %3524 = vmatpush1.msra.mxu0 %v354
    %3525 = vmatprep.subr.mxu0 %v357
    %3526 = vmatpush1.msra.mxu0 %v356
    %3527 = vmatprep.subr.mxu0 %v359
    %3528 = vmatpush1.msra.mxu0 %v358
    %3529 = vmatprep.subr.mxu0 %v361
    %3530 = vmatpush1.msra.mxu0 %v360
    %3531 = vmatprep.subr.mxu0 %v363
    %3532 = vmatpush1.msra.mxu0 %v362
    %3533 = vmatprep.subr.mxu0 %v365
    %3534 = vmatpush1.msra.mxu0 %v364
    %3535 = vmatprep.subr.mxu0 %v367
    %3536 = vmatpush1.msra.mxu0 %v366
    %3537 = vmatprep.subr.mxu0 %v369
    %3538 = vmatpush1.msra.mxu0 %v368
    %3539 = vmatprep.subr.mxu0 %v371
    %3540 = vmatpush1.msra.mxu0 %v370
    %3541 = vmatprep.subr.mxu0 %v373
    %3542 = vmatpush1.msra.mxu0 %v372
    %3543 = vmatprep.subr.mxu0 %v375
    %3544 = vmatpush1.msra.mxu0 %v374
    %3545 = vmatprep.subr.mxu0 %v377
    %3546 = vmatpush1.msra.mxu0 %v376
    %3547 = vmatprep.subr.mxu0 %v379
    %3548 = vmatpush1.msra.mxu0 %v378
    %3549 = vmatprep.subr.mxu0 %v381
    %3550 = vmatpush1.msra.mxu0 %v380
    %3551 = vmatprep.subr.mxu0 %v383
    %3552 = vmatpush1.msra.mxu0 %v382
    %3553 = vmatprep.subr.mxu0 %v385
    %3554 = vmatpush1.msra.mxu0 %v384
    %3555 = vmatprep.subr.mxu0 %v387
    %3556 = vmatpush1.msra.mxu0 %v386
    %3557 = vmatprep.subr.mxu0 %v389
    %3558 = vmatpush1.msra.mxu0 %v388
    %3559 = vmatprep.subr.mxu0 %v391
    %3560 = vmatpush1.msra.mxu0 %v390
    %3561 = vmatprep.subr.mxu0 %v393
    %3562 = vmatpush1.msra.mxu0 %v392
    %3563 = vmatprep.subr.mxu0 %v395
    %3564 = vmatpush1.msra.mxu0 %v394
    %3565 = vmatprep.subr.mxu0 %v397
    %3566 = vmatpush1.msra.mxu0 %v396
    %3567 = vmatprep.subr.mxu0 %v399
    %3568 = vmatpush1.msra.mxu0 %v398
    %3569 = vmatprep.subr.mxu0 %v401
    %3570 = vmatpush1.msra.mxu0 %v400
    %3571 = vmatprep.subr.mxu0 %v403
    %3572 = vmatpush1.msra.mxu0 %v402
    %3573 = vmatprep.subr.mxu0 %v405
    %3574 = vmatpush1.msra.mxu0 %v404
    %3575 = vmatprep.subr.mxu0 %v407
    %3576 = vmatpush1.msra.mxu0 %v406
    %3577 = vmatprep.mubr.f32.mxu0 %v3512
    %3578 = vmatmul.mubr.f32.gmra.mrb[0].mxu0 %v3511
    %v3579 = vpop.f32.mrb[0].mxu0
    %v3580 = vadd.f32 %v425, %v3579
    %v3581 = vpop.f32.mrb[0].mxu0
    %v3582 = vadd.f32 %v429, %v3581
    %3583 = vdwg.mxu0
    %v3584 = vmul.f32 %v3511, %v3511
    %v3585 = vmul.f32 %v3512, %v3512
    %v3586 = vsub.f32 1.0, %v3584
    %v3587 = vsub.f32 1.0, %v3585
    %v3588 = vmul.f32 %v3586, %v437
    %v3589 = vmul.f32 %v3587, %v441
    %v3590 = vadd.f32 %v3588, %v3589
    %3591 = vadd.xlane.f32.xlu0 %v3590
    %v3592 = vpop.xlane.xlu0 %3591
    %v3593 = vmul.f32 %v3580, 0.125
    %v3594 = vmul.f32 %v3582, 0.125
    %v3595 = vadd.f32 %v3318, %v3593
    %v3596 = vadd.f32 %v3319, %v3594
    %v3597 = vtanh.pop %v3595
    %v3598 = vtanh.pop %v3596
    %v3599 = vmul.f32 %v3597, %v3597
    %v3600 = vmul.f32 %v3598, %v3598
    %v3601 = vsub.f32 1.0, %v3599
    %v3602 = vsub.f32 1.0, %v3600
    %v3603 = vmul.f32 %v3601, %v437
    %v3604 = vmul.f32 %v3602, %v441
    %v3605 = vadd.f32 %v3603, %v3604
    %3606 = vadd.xlane.f32.xlu0 %v3605
    %v3607 = vpop.xlane.xlu0 %3606
    %v3608 = vmul.f32 %v3425, 2.0
    %v3609 = vmul.f32 %v3426, 2.0
    %v3610 = vadd.f32 %v3339, %v3608
    %v3611 = vadd.f32 %v3340, %v3609
    %v3612 = vmul.f32 %v3511, 2.0
    %v3613 = vmul.f32 %v3512, 2.0
    %v3614 = vadd.f32 %v3610, %v3612
    %v3615 = vadd.f32 %v3611, %v3613
    %v3616 = vadd.f32 %v3614, %v3597
    %v3617 = vadd.f32 %v3615, %v3598
    %v3618 = vadd.f32 %v3330, %v3616
    %v3619 = vadd.f32 %v3331, %v3617
    %v3620 = vmul.f32 %v3506, 2.0
    %v3621 = vadd.f32 %v3420, %v3620
    %v3622 = vmul.f32 %v3592, 2.0
    %v3623 = vadd.f32 %v3621, %v3622
    %v3624 = vadd.f32 %v3623, %v3607
    %v3625 = vmul.f32 %v3624, 0.020833334
    %v3626 = vadd.f32 %v3338, %v3625
    %s3627 = smul.u32 8, 32
    %s3628 = smul.u32 %s3627, 8
    %s3629 = sshll.u32 %s3628, 4
    %3630 = dma.done [#allocation3], %s3629
    %v3631 = vld [vmem:[%s6] sm:$0xff]
    %v3633 = vlaneseq
    %v3634 = vshrl.u32 %v3633, 7
    %v3635 = vsub.s32 0, %v3634
    %v3636 = vrot.slane %v3631, %v3635
    %v3637 = vlaneseq
    %v3638 = vshrl.u32 %v3637, 7
    %v3639 = vsub.s32 1, %v3638
    %v3640 = vrot.slane %v3631, %v3639
    %v3641 = vlaneseq
    %v3642 = vshrl.u32 %v3641, 7
    %v3643 = vsub.s32 2, %v3642
    %v3644 = vrot.slane %v3631, %v3643
    %v3645 = vlaneseq
    %v3646 = vshrl.u32 %v3645, 7
    %v3647 = vsub.s32 3, %v3646
    %v3648 = vrot.slane %v3631, %v3647
    %v3649 = vlaneseq
    %v3650 = vshrl.u32 %v3649, 7
    %v3651 = vsub.s32 4, %v3650
    %v3652 = vrot.slane %v3631, %v3651
    %v3653 = vlaneseq
    %v3654 = vshrl.u32 %v3653, 7
    %v3655 = vsub.s32 5, %v3654
    %v3656 = vrot.slane %v3631, %v3655
    %v3657 = vlaneseq
    %v3658 = vshrl.u32 %v3657, 7
    %v3659 = vsub.s32 6, %v3658
    %v3660 = vrot.slane %v3631, %v3659
    %v3661 = vlaneseq
    %v3662 = vshrl.u32 %v3661, 7
    %v3663 = vsub.s32 7, %v3662
    %v3664 = vrot.slane %v3631, %v3663
    %v3673 = vld [vmem:[#allocation2] sm:$0xff]
    %v3674 = vld [vmem:[#allocation2 + $0x8] sm:$0xff]
    %v3675 = vld [vmem:[#allocation2 + $0x10] sm:$0xff]
    %v3676 = vld [vmem:[#allocation2 + $0x18] sm:$0xff]
    %v3677 = vld [vmem:[#allocation2 + $0x20] sm:$0xff]
    %v3678 = vld [vmem:[#allocation2 + $0x28] sm:$0xff]
    %v3679 = vld [vmem:[#allocation2 + $0x30] sm:$0xff]
    %v3680 = vld [vmem:[#allocation2 + $0x38] sm:$0xff]
    %v3681 = vld [vmem:[#allocation2 + $0x40] sm:$0xff]
    %v3682 = vld [vmem:[#allocation2 + $0x48] sm:$0xff]
    %v3683 = vld [vmem:[#allocation2 + $0x50] sm:$0xff]
    %v3684 = vld [vmem:[#allocation2 + $0x58] sm:$0xff]
    %v3685 = vld [vmem:[#allocation2 + $0x60] sm:$0xff]
    %v3686 = vld [vmem:[#allocation2 + $0x68] sm:$0xff]
    %v3687 = vld [vmem:[#allocation2 + $0x70] sm:$0xff]
    %v3688 = vld [vmem:[#allocation2 + $0x78] sm:$0xff]
    %v3689 = vld [vmem:[#allocation2 + $0x80] sm:$0xff]
    %v3690 = vld [vmem:[#allocation2 + $0x88] sm:$0xff]
    %v3691 = vld [vmem:[#allocation2 + $0x90] sm:$0xff]
    %v3692 = vld [vmem:[#allocation2 + $0x98] sm:$0xff]
    %v3693 = vld [vmem:[#allocation2 + $0xa0] sm:$0xff]
    %v3694 = vld [vmem:[#allocation2 + $0xa8] sm:$0xff]
    %v3695 = vld [vmem:[#allocation2 + $0xb0] sm:$0xff]
    %v3696 = vld [vmem:[#allocation2 + $0xb8] sm:$0xff]
    %v3697 = vld [vmem:[#allocation2 + $0xc0] sm:$0xff]
    %v3698 = vld [vmem:[#allocation2 + $0xc8] sm:$0xff]
    %v3699 = vld [vmem:[#allocation2 + $0xd0] sm:$0xff]
    %v3700 = vld [vmem:[#allocation2 + $0xd8] sm:$0xff]
    %v3701 = vld [vmem:[#allocation2 + $0xe0] sm:$0xff]
    %v3702 = vld [vmem:[#allocation2 + $0xe8] sm:$0xff]
    %v3703 = vld [vmem:[#allocation2 + $0xf0] sm:$0xff]
    %v3704 = vld [vmem:[#allocation2 + $0xf8] sm:$0xff]
    %v3705 = vld [vmem:[#allocation2 + $0x100] sm:$0xff]
    %v3706 = vld [vmem:[#allocation2 + $0x108] sm:$0xff]
    %v3707 = vld [vmem:[#allocation2 + $0x110] sm:$0xff]
    %v3708 = vld [vmem:[#allocation2 + $0x118] sm:$0xff]
    %v3709 = vld [vmem:[#allocation2 + $0x120] sm:$0xff]
    %v3710 = vld [vmem:[#allocation2 + $0x128] sm:$0xff]
    %v3711 = vld [vmem:[#allocation2 + $0x130] sm:$0xff]
    %v3712 = vld [vmem:[#allocation2 + $0x138] sm:$0xff]
    %v3713 = vld [vmem:[#allocation2 + $0x140] sm:$0xff]
    %v3714 = vld [vmem:[#allocation2 + $0x148] sm:$0xff]
    %v3715 = vld [vmem:[#allocation2 + $0x150] sm:$0xff]
    %v3716 = vld [vmem:[#allocation2 + $0x158] sm:$0xff]
    %v3717 = vld [vmem:[#allocation2 + $0x160] sm:$0xff]
    %v3718 = vld [vmem:[#allocation2 + $0x168] sm:$0xff]
    %v3719 = vld [vmem:[#allocation2 + $0x170] sm:$0xff]
    %v3720 = vld [vmem:[#allocation2 + $0x178] sm:$0xff]
    %v3721 = vld [vmem:[#allocation2 + $0x180] sm:$0xff]
    %v3722 = vld [vmem:[#allocation2 + $0x188] sm:$0xff]
    %v3723 = vld [vmem:[#allocation2 + $0x190] sm:$0xff]
    %v3724 = vld [vmem:[#allocation2 + $0x198] sm:$0xff]
    %v3725 = vld [vmem:[#allocation2 + $0x1a0] sm:$0xff]
    %v3726 = vld [vmem:[#allocation2 + $0x1a8] sm:$0xff]
    %v3727 = vld [vmem:[#allocation2 + $0x1b0] sm:$0xff]
    %v3728 = vld [vmem:[#allocation2 + $0x1b8] sm:$0xff]
    %v3729 = vld [vmem:[#allocation2 + $0x1c0] sm:$0xff]
    %v3730 = vld [vmem:[#allocation2 + $0x1c8] sm:$0xff]
    %v3731 = vld [vmem:[#allocation2 + $0x1d0] sm:$0xff]
    %v3732 = vld [vmem:[#allocation2 + $0x1d8] sm:$0xff]
    %v3733 = vld [vmem:[#allocation2 + $0x1e0] sm:$0xff]
    %v3734 = vld [vmem:[#allocation2 + $0x1e8] sm:$0xff]
    %v3735 = vld [vmem:[#allocation2 + $0x1f0] sm:$0xff]
    %v3736 = vld [vmem:[#allocation2 + $0x1f8] sm:$0xff]
    %v3737 = vld [vmem:[#allocation2 + $0x200] sm:$0xff]
    %v3738 = vld [vmem:[#allocation2 + $0x208] sm:$0xff]
    %v3739 = vld [vmem:[#allocation2 + $0x210] sm:$0xff]
    %v3740 = vld [vmem:[#allocation2 + $0x218] sm:$0xff]
    %v3741 = vld [vmem:[#allocation2 + $0x220] sm:$0xff]
    %v3742 = vld [vmem:[#allocation2 + $0x228] sm:$0xff]
    %v3743 = vld [vmem:[#allocation2 + $0x230] sm:$0xff]
    %v3744 = vld [vmem:[#allocation2 + $0x238] sm:$0xff]
    %v3745 = vld [vmem:[#allocation2 + $0x240] sm:$0xff]
    %v3746 = vld [vmem:[#allocation2 + $0x248] sm:$0xff]
    %v3747 = vld [vmem:[#allocation2 + $0x250] sm:$0xff]
    %v3748 = vld [vmem:[#allocation2 + $0x258] sm:$0xff]
    %v3749 = vld [vmem:[#allocation2 + $0x260] sm:$0xff]
    %v3750 = vld [vmem:[#allocation2 + $0x268] sm:$0xff]
    %v3751 = vld [vmem:[#allocation2 + $0x270] sm:$0xff]
    %v3752 = vld [vmem:[#allocation2 + $0x278] sm:$0xff]
    %v3753 = vld [vmem:[#allocation2 + $0x280] sm:$0xff]
    %v3754 = vld [vmem:[#allocation2 + $0x288] sm:$0xff]
    %v3755 = vld [vmem:[#allocation2 + $0x290] sm:$0xff]
    %v3756 = vld [vmem:[#allocation2 + $0x298] sm:$0xff]
    %v3757 = vld [vmem:[#allocation2 + $0x2a0] sm:$0xff]
    %v3758 = vld [vmem:[#allocation2 + $0x2a8] sm:$0xff]
    %v3759 = vld [vmem:[#allocation2 + $0x2b0] sm:$0xff]
    %v3760 = vld [vmem:[#allocation2 + $0x2b8] sm:$0xff]
    %v3761 = vld [vmem:[#allocation2 + $0x2c0] sm:$0xff]
    %v3762 = vld [vmem:[#allocation2 + $0x2c8] sm:$0xff]
    %v3763 = vld [vmem:[#allocation2 + $0x2d0] sm:$0xff]
    %v3764 = vld [vmem:[#allocation2 + $0x2d8] sm:$0xff]
    %v3765 = vld [vmem:[#allocation2 + $0x2e0] sm:$0xff]
    %v3766 = vld [vmem:[#allocation2 + $0x2e8] sm:$0xff]
    %v3767 = vld [vmem:[#allocation2 + $0x2f0] sm:$0xff]
    %v3768 = vld [vmem:[#allocation2 + $0x2f8] sm:$0xff]
    %v3769 = vld [vmem:[#allocation2 + $0x300] sm:$0xff]
    %v3770 = vld [vmem:[#allocation2 + $0x308] sm:$0xff]
    %v3771 = vld [vmem:[#allocation2 + $0x310] sm:$0xff]
    %v3772 = vld [vmem:[#allocation2 + $0x318] sm:$0xff]
    %v3773 = vld [vmem:[#allocation2 + $0x320] sm:$0xff]
    %v3774 = vld [vmem:[#allocation2 + $0x328] sm:$0xff]
    %v3775 = vld [vmem:[#allocation2 + $0x330] sm:$0xff]
    %v3776 = vld [vmem:[#allocation2 + $0x338] sm:$0xff]
    %v3777 = vld [vmem:[#allocation2 + $0x340] sm:$0xff]
    %v3778 = vld [vmem:[#allocation2 + $0x348] sm:$0xff]
    %v3779 = vld [vmem:[#allocation2 + $0x350] sm:$0xff]
    %v3780 = vld [vmem:[#allocation2 + $0x358] sm:$0xff]
    %v3781 = vld [vmem:[#allocation2 + $0x360] sm:$0xff]
    %v3782 = vld [vmem:[#allocation2 + $0x368] sm:$0xff]
    %v3783 = vld [vmem:[#allocation2 + $0x370] sm:$0xff]
    %v3784 = vld [vmem:[#allocation2 + $0x378] sm:$0xff]
    %v3785 = vld [vmem:[#allocation2 + $0x380] sm:$0xff]
    %v3786 = vld [vmem:[#allocation2 + $0x388] sm:$0xff]
    %v3787 = vld [vmem:[#allocation2 + $0x390] sm:$0xff]
    %v3788 = vld [vmem:[#allocation2 + $0x398] sm:$0xff]
    %v3789 = vld [vmem:[#allocation2 + $0x3a0] sm:$0xff]
    %v3790 = vld [vmem:[#allocation2 + $0x3a8] sm:$0xff]
    %v3791 = vld [vmem:[#allocation2 + $0x3b0] sm:$0xff]
    %v3792 = vld [vmem:[#allocation2 + $0x3b8] sm:$0xff]
    %v3793 = vld [vmem:[#allocation2 + $0x3c0] sm:$0xff]
    %v3794 = vld [vmem:[#allocation2 + $0x3c8] sm:$0xff]
    %v3795 = vld [vmem:[#allocation2 + $0x3d0] sm:$0xff]
    %v3796 = vld [vmem:[#allocation2 + $0x3d8] sm:$0xff]
    %v3797 = vld [vmem:[#allocation2 + $0x3e0] sm:$0xff]
    %v3798 = vld [vmem:[#allocation2 + $0x3e8] sm:$0xff]
    %v3799 = vld [vmem:[#allocation2 + $0x3f0] sm:$0xff]
    %v3800 = vld [vmem:[#allocation2 + $0x3f8] sm:$0xff]
    %v3801 = vld [vmem:[#allocation2 + $0x400] sm:$0xff]
    %v3802 = vld [vmem:[#allocation2 + $0x408] sm:$0xff]
    %v3803 = vld [vmem:[#allocation2 + $0x410] sm:$0xff]
    %v3804 = vld [vmem:[#allocation2 + $0x418] sm:$0xff]
    %v3805 = vld [vmem:[#allocation2 + $0x420] sm:$0xff]
    %v3806 = vld [vmem:[#allocation2 + $0x428] sm:$0xff]
    %v3807 = vld [vmem:[#allocation2 + $0x430] sm:$0xff]
    %v3808 = vld [vmem:[#allocation2 + $0x438] sm:$0xff]
    %v3809 = vld [vmem:[#allocation2 + $0x440] sm:$0xff]
    %v3810 = vld [vmem:[#allocation2 + $0x448] sm:$0xff]
    %v3811 = vld [vmem:[#allocation2 + $0x450] sm:$0xff]
    %v3812 = vld [vmem:[#allocation2 + $0x458] sm:$0xff]
    %v3813 = vld [vmem:[#allocation2 + $0x460] sm:$0xff]
    %v3814 = vld [vmem:[#allocation2 + $0x468] sm:$0xff]
    %v3815 = vld [vmem:[#allocation2 + $0x470] sm:$0xff]
    %v3816 = vld [vmem:[#allocation2 + $0x478] sm:$0xff]
    %v3817 = vld [vmem:[#allocation2 + $0x480] sm:$0xff]
    %v3818 = vld [vmem:[#allocation2 + $0x488] sm:$0xff]
    %v3819 = vld [vmem:[#allocation2 + $0x490] sm:$0xff]
    %v3820 = vld [vmem:[#allocation2 + $0x498] sm:$0xff]
    %v3821 = vld [vmem:[#allocation2 + $0x4a0] sm:$0xff]
    %v3822 = vld [vmem:[#allocation2 + $0x4a8] sm:$0xff]
    %v3823 = vld [vmem:[#allocation2 + $0x4b0] sm:$0xff]
    %v3824 = vld [vmem:[#allocation2 + $0x4b8] sm:$0xff]
    %v3825 = vld [vmem:[#allocation2 + $0x4c0] sm:$0xff]
    %v3826 = vld [vmem:[#allocation2 + $0x4c8] sm:$0xff]
    %v3827 = vld [vmem:[#allocation2 + $0x4d0] sm:$0xff]
    %v3828 = vld [vmem:[#allocation2 + $0x4d8] sm:$0xff]
    %v3829 = vld [vmem:[#allocation2 + $0x4e0] sm:$0xff]
    %v3830 = vld [vmem:[#allocation2 + $0x4e8] sm:$0xff]
    %v3831 = vld [vmem:[#allocation2 + $0x4f0] sm:$0xff]
    %v3832 = vld [vmem:[#allocation2 + $0x4f8] sm:$0xff]
    %v3833 = vld [vmem:[#allocation2 + $0x500] sm:$0xff]
    %v3834 = vld [vmem:[#allocation2 + $0x508] sm:$0xff]
    %v3835 = vld [vmem:[#allocation2 + $0x510] sm:$0xff]
    %v3836 = vld [vmem:[#allocation2 + $0x518] sm:$0xff]
    %v3837 = vld [vmem:[#allocation2 + $0x520] sm:$0xff]
    %v3838 = vld [vmem:[#allocation2 + $0x528] sm:$0xff]
    %v3839 = vld [vmem:[#allocation2 + $0x530] sm:$0xff]
    %v3840 = vld [vmem:[#allocation2 + $0x538] sm:$0xff]
    %v3841 = vld [vmem:[#allocation2 + $0x540] sm:$0xff]
    %v3842 = vld [vmem:[#allocation2 + $0x548] sm:$0xff]
    %v3843 = vld [vmem:[#allocation2 + $0x550] sm:$0xff]
    %v3844 = vld [vmem:[#allocation2 + $0x558] sm:$0xff]
    %v3845 = vld [vmem:[#allocation2 + $0x560] sm:$0xff]
    %v3846 = vld [vmem:[#allocation2 + $0x568] sm:$0xff]
    %v3847 = vld [vmem:[#allocation2 + $0x570] sm:$0xff]
    %v3848 = vld [vmem:[#allocation2 + $0x578] sm:$0xff]
    %v3849 = vld [vmem:[#allocation2 + $0x580] sm:$0xff]
    %v3850 = vld [vmem:[#allocation2 + $0x588] sm:$0xff]
    %v3851 = vld [vmem:[#allocation2 + $0x590] sm:$0xff]
    %v3852 = vld [vmem:[#allocation2 + $0x598] sm:$0xff]
    %v3853 = vld [vmem:[#allocation2 + $0x5a0] sm:$0xff]
    %v3854 = vld [vmem:[#allocation2 + $0x5a8] sm:$0xff]
    %v3855 = vld [vmem:[#allocation2 + $0x5b0] sm:$0xff]
    %v3856 = vld [vmem:[#allocation2 + $0x5b8] sm:$0xff]
    %v3857 = vld [vmem:[#allocation2 + $0x5c0] sm:$0xff]
    %v3858 = vld [vmem:[#allocation2 + $0x5c8] sm:$0xff]
    %v3859 = vld [vmem:[#allocation2 + $0x5d0] sm:$0xff]
    %v3860 = vld [vmem:[#allocation2 + $0x5d8] sm:$0xff]
    %v3861 = vld [vmem:[#allocation2 + $0x5e0] sm:$0xff]
    %v3862 = vld [vmem:[#allocation2 + $0x5e8] sm:$0xff]
    %v3863 = vld [vmem:[#allocation2 + $0x5f0] sm:$0xff]
    %v3864 = vld [vmem:[#allocation2 + $0x5f8] sm:$0xff]
    %v3865 = vld [vmem:[#allocation2 + $0x600] sm:$0xff]
    %v3866 = vld [vmem:[#allocation2 + $0x608] sm:$0xff]
    %v3867 = vld [vmem:[#allocation2 + $0x610] sm:$0xff]
    %v3868 = vld [vmem:[#allocation2 + $0x618] sm:$0xff]
    %v3869 = vld [vmem:[#allocation2 + $0x620] sm:$0xff]
    %v3870 = vld [vmem:[#allocation2 + $0x628] sm:$0xff]
    %v3871 = vld [vmem:[#allocation2 + $0x630] sm:$0xff]
    %v3872 = vld [vmem:[#allocation2 + $0x638] sm:$0xff]
    %v3873 = vld [vmem:[#allocation2 + $0x640] sm:$0xff]
    %v3874 = vld [vmem:[#allocation2 + $0x648] sm:$0xff]
    %v3875 = vld [vmem:[#allocation2 + $0x650] sm:$0xff]
    %v3876 = vld [vmem:[#allocation2 + $0x658] sm:$0xff]
    %v3877 = vld [vmem:[#allocation2 + $0x660] sm:$0xff]
    %v3878 = vld [vmem:[#allocation2 + $0x668] sm:$0xff]
    %v3879 = vld [vmem:[#allocation2 + $0x670] sm:$0xff]
    %v3880 = vld [vmem:[#allocation2 + $0x678] sm:$0xff]
    %v3881 = vld [vmem:[#allocation2 + $0x680] sm:$0xff]
    %v3882 = vld [vmem:[#allocation2 + $0x688] sm:$0xff]
    %v3883 = vld [vmem:[#allocation2 + $0x690] sm:$0xff]
    %v3884 = vld [vmem:[#allocation2 + $0x698] sm:$0xff]
    %v3885 = vld [vmem:[#allocation2 + $0x6a0] sm:$0xff]
    %v3886 = vld [vmem:[#allocation2 + $0x6a8] sm:$0xff]
    %v3887 = vld [vmem:[#allocation2 + $0x6b0] sm:$0xff]
    %v3888 = vld [vmem:[#allocation2 + $0x6b8] sm:$0xff]
    %v3889 = vld [vmem:[#allocation2 + $0x6c0] sm:$0xff]
    %v3890 = vld [vmem:[#allocation2 + $0x6c8] sm:$0xff]
    %v3891 = vld [vmem:[#allocation2 + $0x6d0] sm:$0xff]
    %v3892 = vld [vmem:[#allocation2 + $0x6d8] sm:$0xff]
    %v3893 = vld [vmem:[#allocation2 + $0x6e0] sm:$0xff]
    %v3894 = vld [vmem:[#allocation2 + $0x6e8] sm:$0xff]
    %v3895 = vld [vmem:[#allocation2 + $0x6f0] sm:$0xff]
    %v3896 = vld [vmem:[#allocation2 + $0x6f8] sm:$0xff]
    %v3897 = vld [vmem:[#allocation2 + $0x700] sm:$0xff]
    %v3898 = vld [vmem:[#allocation2 + $0x708] sm:$0xff]
    %v3899 = vld [vmem:[#allocation2 + $0x710] sm:$0xff]
    %v3900 = vld [vmem:[#allocation2 + $0x718] sm:$0xff]
    %v3901 = vld [vmem:[#allocation2 + $0x720] sm:$0xff]
    %v3902 = vld [vmem:[#allocation2 + $0x728] sm:$0xff]
    %v3903 = vld [vmem:[#allocation2 + $0x730] sm:$0xff]
    %v3904 = vld [vmem:[#allocation2 + $0x738] sm:$0xff]
    %v3905 = vld [vmem:[#allocation2 + $0x740] sm:$0xff]
    %v3906 = vld [vmem:[#allocation2 + $0x748] sm:$0xff]
    %v3907 = vld [vmem:[#allocation2 + $0x750] sm:$0xff]
    %v3908 = vld [vmem:[#allocation2 + $0x758] sm:$0xff]
    %v3909 = vld [vmem:[#allocation2 + $0x760] sm:$0xff]
    %v3910 = vld [vmem:[#allocation2 + $0x768] sm:$0xff]
    %v3911 = vld [vmem:[#allocation2 + $0x770] sm:$0xff]
    %v3912 = vld [vmem:[#allocation2 + $0x778] sm:$0xff]
    %v3913 = vld [vmem:[#allocation2 + $0x780] sm:$0xff]
    %v3914 = vld [vmem:[#allocation2 + $0x788] sm:$0xff]
    %v3915 = vld [vmem:[#allocation2 + $0x790] sm:$0xff]
    %v3916 = vld [vmem:[#allocation2 + $0x798] sm:$0xff]
    %v3917 = vld [vmem:[#allocation2 + $0x7a0] sm:$0xff]
    %v3918 = vld [vmem:[#allocation2 + $0x7a8] sm:$0xff]
    %v3919 = vld [vmem:[#allocation2 + $0x7b0] sm:$0xff]
    %v3920 = vld [vmem:[#allocation2 + $0x7b8] sm:$0xff]
    %v3921 = vld [vmem:[#allocation2 + $0x7c0] sm:$0xff]
    %v3922 = vld [vmem:[#allocation2 + $0x7c8] sm:$0xff]
    %v3923 = vld [vmem:[#allocation2 + $0x7d0] sm:$0xff]
    %v3924 = vld [vmem:[#allocation2 + $0x7d8] sm:$0xff]
    %v3925 = vld [vmem:[#allocation2 + $0x7e0] sm:$0xff]
    %v3926 = vld [vmem:[#allocation2 + $0x7e8] sm:$0xff]
    %v3927 = vld [vmem:[#allocation2 + $0x7f0] sm:$0xff]
    %v3928 = vld [vmem:[#allocation2 + $0x7f8] sm:$0xff]
    %3929 = vmatprep.subr.mxu0 %v3674
    %3930 = vmatpush1.msra.mxu0 %v3673
    %3931 = vmatprep.subr.mxu0 %v3682
    %3932 = vmatpush1.msra.mxu0 %v3681
    %3933 = vmatprep.subr.mxu0 %v3690
    %3934 = vmatpush1.msra.mxu0 %v3689
    %3935 = vmatprep.subr.mxu0 %v3698
    %3936 = vmatpush1.msra.mxu0 %v3697
    %3937 = vmatprep.subr.mxu0 %v3706
    %3938 = vmatpush1.msra.mxu0 %v3705
    %3939 = vmatprep.subr.mxu0 %v3714
    %3940 = vmatpush1.msra.mxu0 %v3713
    %3941 = vmatprep.subr.mxu0 %v3722
    %3942 = vmatpush1.msra.mxu0 %v3721
    %3943 = vmatprep.subr.mxu0 %v3730
    %3944 = vmatpush1.msra.mxu0 %v3729
    %3945 = vmatprep.subr.mxu0 %v3738
    %3946 = vmatpush1.msra.mxu0 %v3737
    %3947 = vmatprep.subr.mxu0 %v3746
    %3948 = vmatpush1.msra.mxu0 %v3745
    %3949 = vmatprep.subr.mxu0 %v3754
    %3950 = vmatpush1.msra.mxu0 %v3753
    %3951 = vmatprep.subr.mxu0 %v3762
    %3952 = vmatpush1.msra.mxu0 %v3761
    %3953 = vmatprep.subr.mxu0 %v3770
    %3954 = vmatpush1.msra.mxu0 %v3769
    %3955 = vmatprep.subr.mxu0 %v3778
    %3956 = vmatpush1.msra.mxu0 %v3777
    %3957 = vmatprep.subr.mxu0 %v3786
    %3958 = vmatpush1.msra.mxu0 %v3785
    %3959 = vmatprep.subr.mxu0 %v3794
    %3960 = vmatpush1.msra.mxu0 %v3793
    %3961 = vmatprep.subr.mxu0 %v3802
    %3962 = vmatpush1.msra.mxu0 %v3801
    %3963 = vmatprep.subr.mxu0 %v3810
    %3964 = vmatpush1.msra.mxu0 %v3809
    %3965 = vmatprep.subr.mxu0 %v3818
    %3966 = vmatpush1.msra.mxu0 %v3817
    %3967 = vmatprep.subr.mxu0 %v3826
    %3968 = vmatpush1.msra.mxu0 %v3825
    %3969 = vmatprep.subr.mxu0 %v3834
    %3970 = vmatpush1.msra.mxu0 %v3833
    %3971 = vmatprep.subr.mxu0 %v3842
    %3972 = vmatpush1.msra.mxu0 %v3841
    %3973 = vmatprep.subr.mxu0 %v3850
    %3974 = vmatpush1.msra.mxu0 %v3849
    %3975 = vmatprep.subr.mxu0 %v3858
    %3976 = vmatpush1.msra.mxu0 %v3857
    %3977 = vmatprep.subr.mxu0 %v3866
    %3978 = vmatpush1.msra.mxu0 %v3865
    %3979 = vmatprep.subr.mxu0 %v3874
    %3980 = vmatpush1.msra.mxu0 %v3873
    %3981 = vmatprep.subr.mxu0 %v3882
    %3982 = vmatpush1.msra.mxu0 %v3881
    %3983 = vmatprep.subr.mxu0 %v3890
    %3984 = vmatpush1.msra.mxu0 %v3889
    %3985 = vmatprep.subr.mxu0 %v3898
    %3986 = vmatpush1.msra.mxu0 %v3897
    %3987 = vmatprep.subr.mxu0 %v3906
    %3988 = vmatpush1.msra.mxu0 %v3905
    %3989 = vmatprep.subr.mxu0 %v3914
    %3990 = vmatpush1.msra.mxu0 %v3913
    %3991 = vmatprep.subr.mxu0 %v3922
    %3992 = vmatpush1.msra.mxu0 %v3921
    %3993 = vmatprep.mubr.f32.mxu0 %v3619
    %3994 = vmatmul.mubr.f32.gmra.mrb[0].mxu0 %v3618
    %v3995 = vpop.f32.mrb[0].mxu0
    %v3996 = vadd.f32 0.0, %v3995
    %v3997 = vpop.f32.mrb[0].mxu0
    %v3998 = vadd.f32 0.0, %v3997
    %3999 = vdwg.mxu0
    %4000 = vmatprep.subr.mxu0 %v3676
    %4001 = vmatpush1.msra.mxu0 %v3675
    %4002 = vmatprep.subr.mxu0 %v3684
    %4003 = vmatpush1.msra.mxu0 %v3683
    %4004 = vmatprep.subr.mxu0 %v3692
    %4005 = vmatpush1.msra.mxu0 %v3691
    %4006 = vmatprep.subr.mxu0 %v3700
    %4007 = vmatpush1.msra.mxu0 %v3699
    %4008 = vmatprep.subr.mxu0 %v3708
    %4009 = vmatpush1.msra.mxu0 %v3707
    %4010 = vmatprep.subr.mxu0 %v3716
    %4011 = vmatpush1.msra.mxu0 %v3715
    %4012 = vmatprep.subr.mxu0 %v3724
    %4013 = vmatpush1.msra.mxu0 %v3723
    %4014 = vmatprep.subr.mxu0 %v3732
    %4015 = vmatpush1.msra.mxu0 %v3731
    %4016 = vmatprep.subr.mxu0 %v3740
    %4017 = vmatpush1.msra.mxu0 %v3739
    %4018 = vmatprep.subr.mxu0 %v3748
    %4019 = vmatpush1.msra.mxu0 %v3747
    %4020 = vmatprep.subr.mxu0 %v3756
    %4021 = vmatpush1.msra.mxu0 %v3755
    %4022 = vmatprep.subr.mxu0 %v3764
    %4023 = vmatpush1.msra.mxu0 %v3763
    %4024 = vmatprep.subr.mxu0 %v3772
    %4025 = vmatpush1.msra.mxu0 %v3771
    %4026 = vmatprep.subr.mxu0 %v3780
    %4027 = vmatpush1.msra.mxu0 %v3779
    %4028 = vmatprep.subr.mxu0 %v3788
    %4029 = vmatpush1.msra.mxu0 %v3787
    %4030 = vmatprep.subr.mxu0 %v3796
    %4031 = vmatpush1.msra.mxu0 %v3795
    %4032 = vmatprep.subr.mxu0 %v3804
    %4033 = vmatpush1.msra.mxu0 %v3803
    %4034 = vmatprep.subr.mxu0 %v3812
    %4035 = vmatpush1.msra.mxu0 %v3811
    %4036 = vmatprep.subr.mxu0 %v3820
    %4037 = vmatpush1.msra.mxu0 %v3819
    %4038 = vmatprep.subr.mxu0 %v3828
    %4039 = vmatpush1.msra.mxu0 %v3827
    %4040 = vmatprep.subr.mxu0 %v3836
    %4041 = vmatpush1.msra.mxu0 %v3835
    %4042 = vmatprep.subr.mxu0 %v3844
    %4043 = vmatpush1.msra.mxu0 %v3843
    %4044 = vmatprep.subr.mxu0 %v3852
    %4045 = vmatpush1.msra.mxu0 %v3851
    %4046 = vmatprep.subr.mxu0 %v3860
    %4047 = vmatpush1.msra.mxu0 %v3859
    %4048 = vmatprep.subr.mxu0 %v3868
    %4049 = vmatpush1.msra.mxu0 %v3867
    %4050 = vmatprep.subr.mxu0 %v3876
    %4051 = vmatpush1.msra.mxu0 %v3875
    %4052 = vmatprep.subr.mxu0 %v3884
    %4053 = vmatpush1.msra.mxu0 %v3883
    %4054 = vmatprep.subr.mxu0 %v3892
    %4055 = vmatpush1.msra.mxu0 %v3891
    %4056 = vmatprep.subr.mxu0 %v3900
    %4057 = vmatpush1.msra.mxu0 %v3899
    %4058 = vmatprep.subr.mxu0 %v3908
    %4059 = vmatpush1.msra.mxu0 %v3907
    %4060 = vmatprep.subr.mxu0 %v3916
    %4061 = vmatpush1.msra.mxu0 %v3915
    %4062 = vmatprep.subr.mxu0 %v3924
    %4063 = vmatpush1.msra.mxu0 %v3923
    %4064 = vmatprep.mubr.f32.mxu0 %v3619
    %4065 = vmatmul.mubr.f32.gmra.mrb[0].mxu0 %v3618
    %v4066 = vpop.f32.mrb[0].mxu0
    %v4067 = vadd.f32 0.0, %v4066
    %v4068 = vpop.f32.mrb[0].mxu0
    %v4069 = vadd.f32 0.0, %v4068
    %4070 = vdwg.mxu0
    %4071 = vmatprep.subr.mxu0 %v3678
    %4072 = vmatpush1.msra.mxu0 %v3677
    %4073 = vmatprep.subr.mxu0 %v3686
    %4074 = vmatpush1.msra.mxu0 %v3685
    %4075 = vmatprep.subr.mxu0 %v3694
    %4076 = vmatpush1.msra.mxu0 %v3693
    %4077 = vmatprep.subr.mxu0 %v3702
    %4078 = vmatpush1.msra.mxu0 %v3701
    %4079 = vmatprep.subr.mxu0 %v3710
    %4080 = vmatpush1.msra.mxu0 %v3709
    %4081 = vmatprep.subr.mxu0 %v3718
    %4082 = vmatpush1.msra.mxu0 %v3717
    %4083 = vmatprep.subr.mxu0 %v3726
    %4084 = vmatpush1.msra.mxu0 %v3725
    %4085 = vmatprep.subr.mxu0 %v3734
    %4086 = vmatpush1.msra.mxu0 %v3733
    %4087 = vmatprep.subr.mxu0 %v3742
    %4088 = vmatpush1.msra.mxu0 %v3741
    %4089 = vmatprep.subr.mxu0 %v3750
    %4090 = vmatpush1.msra.mxu0 %v3749
    %4091 = vmatprep.subr.mxu0 %v3758
    %4092 = vmatpush1.msra.mxu0 %v3757
    %4093 = vmatprep.subr.mxu0 %v3766
    %4094 = vmatpush1.msra.mxu0 %v3765
    %4095 = vmatprep.subr.mxu0 %v3774
    %4096 = vmatpush1.msra.mxu0 %v3773
    %4097 = vmatprep.subr.mxu0 %v3782
    %4098 = vmatpush1.msra.mxu0 %v3781
    %4099 = vmatprep.subr.mxu0 %v3790
    %4100 = vmatpush1.msra.mxu0 %v3789
    %4101 = vmatprep.subr.mxu0 %v3798
    %4102 = vmatpush1.msra.mxu0 %v3797
    %4103 = vmatprep.subr.mxu0 %v3806
    %4104 = vmatpush1.msra.mxu0 %v3805
    %4105 = vmatprep.subr.mxu0 %v3814
    %4106 = vmatpush1.msra.mxu0 %v3813
    %4107 = vmatprep.subr.mxu0 %v3822
    %4108 = vmatpush1.msra.mxu0 %v3821
    %4109 = vmatprep.subr.mxu0 %v3830
    %4110 = vmatpush1.msra.mxu0 %v3829
    %4111 = vmatprep.subr.mxu0 %v3838
    %4112 = vmatpush1.msra.mxu0 %v3837
    %4113 = vmatprep.subr.mxu0 %v3846
    %4114 = vmatpush1.msra.mxu0 %v3845
    %4115 = vmatprep.subr.mxu0 %v3854
    %4116 = vmatpush1.msra.mxu0 %v3853
    %4117 = vmatprep.subr.mxu0 %v3862
    %4118 = vmatpush1.msra.mxu0 %v3861
    %4119 = vmatprep.subr.mxu0 %v3870
    %4120 = vmatpush1.msra.mxu0 %v3869
    %4121 = vmatprep.subr.mxu0 %v3878
    %4122 = vmatpush1.msra.mxu0 %v3877
    %4123 = vmatprep.subr.mxu0 %v3886
    %4124 = vmatpush1.msra.mxu0 %v3885
    %4125 = vmatprep.subr.mxu0 %v3894
    %4126 = vmatpush1.msra.mxu0 %v3893
    %4127 = vmatprep.subr.mxu0 %v3902
    %4128 = vmatpush1.msra.mxu0 %v3901
    %4129 = vmatprep.subr.mxu0 %v3910
    %4130 = vmatpush1.msra.mxu0 %v3909
    %4131 = vmatprep.subr.mxu0 %v3918
    %4132 = vmatpush1.msra.mxu0 %v3917
    %4133 = vmatprep.subr.mxu0 %v3926
    %4134 = vmatpush1.msra.mxu0 %v3925
    %4135 = vmatprep.mubr.f32.mxu0 %v3619
    %4136 = vmatmul.mubr.f32.gmra.mrb[0].mxu0 %v3618
    %v4137 = vpop.f32.mrb[0].mxu0
    %v4138 = vadd.f32 0.0, %v4137
    %v4139 = vpop.f32.mrb[0].mxu0
    %v4140 = vadd.f32 0.0, %v4139
    %4141 = vdwg.mxu0
    %4142 = vmatprep.subr.mxu0 %v3680
    %4143 = vmatpush1.msra.mxu0 %v3679
    %4144 = vmatprep.subr.mxu0 %v3688
    %4145 = vmatpush1.msra.mxu0 %v3687
    %4146 = vmatprep.subr.mxu0 %v3696
    %4147 = vmatpush1.msra.mxu0 %v3695
    %4148 = vmatprep.subr.mxu0 %v3704
    %4149 = vmatpush1.msra.mxu0 %v3703
    %4150 = vmatprep.subr.mxu0 %v3712
    %4151 = vmatpush1.msra.mxu0 %v3711
    %4152 = vmatprep.subr.mxu0 %v3720
    %4153 = vmatpush1.msra.mxu0 %v3719
    %4154 = vmatprep.subr.mxu0 %v3728
    %4155 = vmatpush1.msra.mxu0 %v3727
    %4156 = vmatprep.subr.mxu0 %v3736
    %4157 = vmatpush1.msra.mxu0 %v3735
    %4158 = vmatprep.subr.mxu0 %v3744
    %4159 = vmatpush1.msra.mxu0 %v3743
    %4160 = vmatprep.subr.mxu0 %v3752
    %4161 = vmatpush1.msra.mxu0 %v3751
    %4162 = vmatprep.subr.mxu0 %v3760
    %4163 = vmatpush1.msra.mxu0 %v3759
    %4164 = vmatprep.subr.mxu0 %v3768
    %4165 = vmatpush1.msra.mxu0 %v3767
    %4166 = vmatprep.subr.mxu0 %v3776
    %4167 = vmatpush1.msra.mxu0 %v3775
    %4168 = vmatprep.subr.mxu0 %v3784
    %4169 = vmatpush1.msra.mxu0 %v3783
    %4170 = vmatprep.subr.mxu0 %v3792
    %4171 = vmatpush1.msra.mxu0 %v3791
    %4172 = vmatprep.subr.mxu0 %v3800
    %4173 = vmatpush1.msra.mxu0 %v3799
    %4174 = vmatprep.subr.mxu0 %v3808
    %4175 = vmatpush1.msra.mxu0 %v3807
    %4176 = vmatprep.subr.mxu0 %v3816
    %4177 = vmatpush1.msra.mxu0 %v3815
    %4178 = vmatprep.subr.mxu0 %v3824
    %4179 = vmatpush1.msra.mxu0 %v3823
    %4180 = vmatprep.subr.mxu0 %v3832
    %4181 = vmatpush1.msra.mxu0 %v3831
    %4182 = vmatprep.subr.mxu0 %v3840
    %4183 = vmatpush1.msra.mxu0 %v3839
    %4184 = vmatprep.subr.mxu0 %v3848
    %4185 = vmatpush1.msra.mxu0 %v3847
    %4186 = vmatprep.subr.mxu0 %v3856
    %4187 = vmatpush1.msra.mxu0 %v3855
    %4188 = vmatprep.subr.mxu0 %v3864
    %4189 = vmatpush1.msra.mxu0 %v3863
    %4190 = vmatprep.subr.mxu0 %v3872
    %4191 = vmatpush1.msra.mxu0 %v3871
    %4192 = vmatprep.subr.mxu0 %v3880
    %4193 = vmatpush1.msra.mxu0 %v3879
    %4194 = vmatprep.subr.mxu0 %v3888
    %4195 = vmatpush1.msra.mxu0 %v3887
    %4196 = vmatprep.subr.mxu0 %v3896
    %4197 = vmatpush1.msra.mxu0 %v3895
    %4198 = vmatprep.subr.mxu0 %v3904
    %4199 = vmatpush1.msra.mxu0 %v3903
    %4200 = vmatprep.subr.mxu0 %v3912
    %4201 = vmatpush1.msra.mxu0 %v3911
    %4202 = vmatprep.subr.mxu0 %v3920
    %4203 = vmatpush1.msra.mxu0 %v3919
    %4204 = vmatprep.subr.mxu0 %v3928
    %4205 = vmatpush1.msra.mxu0 %v3927
    %4206 = vmatprep.mubr.f32.mxu0 %v3619
    %4207 = vmatmul.mubr.f32.gmra.mrb[0].mxu0 %v3618
    %v4208 = vpop.f32.mrb[0].mxu0
    %v4209 = vadd.f32 0.0, %v4208
    %v4210 = vpop.f32.mrb[0].mxu0
    %v4211 = vadd.f32 0.0, %v4210
    %4212 = vdwg.mxu0
    %v4213 = vmul.f32 %v3996, 0.020833334
    %v4214 = vmul.f32 %v3998, 0.020833334
    %v4215 = vmul.f32 %v4067, 0.020833334
    %v4216 = vmul.f32 %v4069, 0.020833334
    %v4217 = vmul.f32 %v4138, 0.020833334
    %v4218 = vmul.f32 %v4140, 0.020833334
    %v4219 = vmul.f32 %v4209, 0.020833334
    %v4220 = vmul.f32 %v4211, 0.020833334
    %v4221 = vadd.f32 %v80, %v4213
    %v4222 = vadd.f32 %v81, %v4214
    %v4223 = vadd.f32 %v82, %v4215
    %v4224 = vadd.f32 %v83, %v4216
    %v4225 = vadd.f32 %v84, %v4217
    %v4226 = vadd.f32 %v85, %v4218
    %v4227 = vadd.f32 %v86, %v4219
    %v4228 = vadd.f32 %v87, %v4220
    %v4229 = vadd.f32 %v4221, %v3636
    %v4230 = vadd.f32 %v4222, %v3640
    %v4231 = vadd.f32 %v4223, %v3644
    %v4232 = vadd.f32 %v4224, %v3648
    %v4233 = vadd.f32 %v4225, %v3652
    %v4234 = vadd.f32 %v4226, %v3656
    %v4235 = vadd.f32 %v4227, %v3660
    %v4236 = vadd.f32 %v4228, %v3664
    %4237 = vst [vmem:[#allocation10] sm:$0xff] %v4229
    %4238 = vst [vmem:[#allocation10 + $0x8] sm:$0xff] %v4230
    %4239 = vst [vmem:[#allocation10 + $0x10] sm:$0xff] %v4231
    %4240 = vst [vmem:[#allocation10 + $0x18] sm:$0xff] %v4232
    %4241 = vst [vmem:[#allocation10 + $0x20] sm:$0xff] %v4233
    %4242 = vst [vmem:[#allocation10 + $0x28] sm:$0xff] %v4234
    %4243 = vst [vmem:[#allocation10 + $0x30] sm:$0xff] %v4235
    %4244 = vst [vmem:[#allocation10 + $0x38] sm:$0xff] %v4236
    %vm4245 = vcmask 7168
    %4246 = vst.msk [vmem:[%s9] sm:$0xff] %vm4245, %v3626
    // Predicated region
    $region46: #{tpu_custom_call.1} parent=1 // pred_check
      _
    $region47: #{tpu_custom_call.1} parent=1 // pred_check_branch
      %4248 = sbr.rel (0) target = $region49
    $region48: #{tpu_custom_call.1} parent=1 // pred_region
      %s4250 = ssub.s32 1024, 1024
      %4251 = vsyncadd [#allocation6], %s4250
      %s4253 = sshll.u32 [#allocation10], 4
      %s4254 = int_to_ptr.vmem [resolvable:$true] %s4253
      %4256 = dma.vmem_to_hbm [thread:$0]  %s4254, 1024, %s8, [#allocation6]
    $region49: #{tpu_custom_call.1} parent=1 // pred_fallthru
      _
    // Predicated region
    $region50: #{tpu_custom_call.1} parent=1 // pred_check
      _
    $region51: #{tpu_custom_call.1} parent=1 // pred_check_branch
      %4258 = sbr.rel (0) target = $region53
    $region52: #{tpu_custom_call.1} parent=1 // pred_region
      _
    $region53: #{tpu_custom_call.1} parent=1 // pred_fallthru
      _
    // Predicated region
    $region54: #{tpu_custom_call.1} parent=1 // pred_check
      _
    $region55: #{tpu_custom_call.1} parent=1 // pred_check_branch
      %4260 = sbr.rel (0) target = $region57
    $region56: #{tpu_custom_call.1} parent=1 // pred_region
      %4261 = dma.done [#allocation6], 1024
    $region57: #{tpu_custom_call.1} parent=1 // pred_fallthru
      _
    // Predicated region
    $region58: #{tpu_custom_call.1} parent=1 // pred_check
      _
    $region59: #{tpu_custom_call.1} parent=1 // pred_check_branch
      %4263 = sbr.rel (0) target = $region61
    $region60: #{tpu_custom_call.1} parent=1 // pred_region
      _
    $region61: #{tpu_custom_call.1} parent=1 // pred_fallthru
      _
    %4264 = vsyncpa [#allocation5], 1
    %4265 = vsyncpa [#allocation8], 1
    %4266 = vsyncpa [#allocation6], 1
  %4267 = vsyncmov [#allocation3]
  %s4268 = vpop.sfrf %4267
  %p4269 = scmp.eq.s32.totalorder %s4268, 0
  %p4270 = pneg %p4269
  %4272 = shalt.err (%p4270)

</llo_original>
